<compile_context>
chip_gen: v7x
topology: tpu7x:2x2x1
jax: 0.10.0
libtpu: 0.0.40
codegen_flags: <defaults>
</compile_context>

<pallas_src>
import math
import jax
import jax.numpy as jnp
from jax.experimental import pallas as pl
from jax.experimental.pallas import tpu as pltpu  # noqa: F401  (kept for TPU-specific tuning hooks)

# ----- small synthetic BERT config ------------------------------------------
VOCAB = 100
HIDDEN = 32
NUM_HEADS = 4
HEAD_DIM = HIDDEN // NUM_HEADS
INTERMEDIATE = 64
NUM_LAYERS = 2
MAX_POS = 16
LN_EPS = 1e-12                      # BERT default layer_norm_eps
ATTN_SCALE = 1.0 / math.sqrt(HEAD_DIM)


# ----- in-kernel helpers ------------------------------------------------------
def _layernorm(x, gamma, beta):
    mean = jnp.mean(x, axis=-1, keepdims=True)
    var = jnp.mean((x - mean) ** 2, axis=-1, keepdims=True)
    return (x - mean) * jax.lax.rsqrt(var + LN_EPS) * gamma + beta


def _gelu(x):
    # TODO(synk): HF bert-base uses the exact erf GELU; tanh approximation kept
    # for a guaranteed EUP lowering (differs at ~1e-3 with real weights).
    c = math.sqrt(2.0 / math.pi)
    return 0.5 * x * (1.0 + jnp.tanh(c * (x + 0.044715 * x * x * x)))


# ----- fused encoder kernel ---------------------------------------------------
def bert_encoder_kernel(emb_ref, mask_ref, embln_ref,
                        wqkv_ref, bqkv_ref, wo_ref, bo_ref, ln1_ref,
                        w1_ref, b1_ref, w2_ref, b2_ref, ln2_ref,
                        out_ref):
    """Full BERT encoder stack (embeddings LN + NUM_LAYERS layers) in one call."""
    B, S, H = emb_ref.shape
    BS = B * S

    # Embedding LayerNorm; batch*seq folded into the M dim for everything below.
    x = emb_ref[...].reshape(BS, H)                      # (B*S, H) f32
    x = _layernorm(x, embln_ref[0], embln_ref[1])

    mask = mask_ref[...]                                 # (B, S, S) additive bias

    for l in range(NUM_LAYERS):                          # static unroll
        xb = x.astype(jnp.bfloat16)

        # ---------------- multi-head self-attention ----------------
        attn = jnp.zeros((BS, H), jnp.float32)
        for h in range(NUM_HEADS):                       # static unroll
            # Per-head weights indexed on leading dims: no lane slicing.
            q = jnp.dot(xb, wqkv_ref[l, 0, h],
                        preferred_element_type=jnp.float32) + bqkv_ref[l, 0, h]
            k = jnp.dot(xb, wqkv_ref[l, 1, h],
                        preferred_element_type=jnp.float32) + bqkv_ref[l, 1, h]
            v = jnp.dot(xb, wqkv_ref[l, 2, h],
                        preferred_element_type=jnp.float32) + bqkv_ref[l, 2, h]

            # (B*S, d) -> (B, S, d): sublane-only reshape, lane dim untouched.
            q3 = q.reshape(B, S, HEAD_DIM).astype(jnp.bfloat16)
            k3 = k.reshape(B, S, HEAD_DIM).astype(jnp.bfloat16)
            v3 = v.reshape(B, S, HEAD_DIM).astype(jnp.bfloat16)

            # Batched scores / context; contraction on last dims (no k.T).
            scores = jnp.einsum('bqd,bkd->bqk', q3, k3,
                                preferred_element_type=jnp.float32)
            scores = scores * ATTN_SCALE + mask          # (B, S, S)

            m = jnp.max(scores, axis=-1, keepdims=True)
            p = jnp.exp(scores - m)
            denom = jnp.sum(p, axis=-1, keepdims=True)
            p = p * pl.reciprocal(denom, approx=True)    # EUP, off the VALU path

            ctx = jnp.einsum('bqk,bkd->bqd', p.astype(jnp.bfloat16), v3,
                             preferred_element_type=jnp.float32)    # (B, S, d)
            ctx2 = ctx.reshape(BS, HEAD_DIM).astype(jnp.bfloat16)

            # Fold the output projection per head (rows h*d:(h+1)*d of Wo).
            attn = attn + jnp.dot(ctx2, wo_ref[l, h],
                                  preferred_element_type=jnp.float32)

        x = _layernorm(x + attn + bo_ref[l], ln1_ref[l, 0], ln1_ref[l, 1])

        # ---------------- feed-forward ----------------
        ff = jnp.dot(x.astype(jnp.bfloat16), w1_ref[l],
                     preferred_element_type=jnp.float32) + b1_ref[l]
        ff = _gelu(ff)
        ff = jnp.dot(ff.astype(jnp.bfloat16), w2_ref[l],
                     preferred_element_type=jnp.float32) + b2_ref[l]

        x = _layernorm(x + ff, ln2_ref[l, 0], ln2_ref[l, 1])

    out_ref[...] = x.reshape(B, S, H)                    # last_hidden_state


# ----- parameter init (deterministic, synthetic, layer-stacked) ---------------
def init_params(key):
    L, NH, H, HD, I = NUM_LAYERS, NUM_HEADS, HIDDEN, HEAD_DIM, INTERMEDIATE
    ks = jax.random.split(key, 7)

    def nrm(k, shape, dtype=jnp.float32):
        return (0.02 * jax.random.normal(k, shape, dtype=jnp.float32)).astype(dtype)

    def ln_stack(n):  # (n, 2, 1, H): [:,0]=gamma, [:,1]=beta
        return jnp.concatenate([jnp.ones((n, 1, 1, H), jnp.float32),
                                jnp.zeros((n, 1, 1, H), jnp.float32)], axis=1)

    return {
        "word_emb": nrm(ks[0], (VOCAB, H)),
        "pos_emb": nrm(ks[1], (MAX_POS, H)),
        "type_emb": nrm(ks[2], (2, H)),
        "emb_ln": jnp.concatenate([jnp.ones((1, 1, H), jnp.float32),
                                   jnp.zeros((1, 1, H), jnp.float32)], axis=0),  # (2,1,H)
        # per-layer, per-(q/k/v), per-head projection weights, bf16 for the MXU
        "wqkv": nrm(ks[3], (L, 3, NH, H, HD), jnp.bfloat16),
        "bqkv": jnp.zeros((L, 3, NH, 1, HD), jnp.float32),
        "wo": nrm(ks[4], (L, NH, HD, H), jnp.bfloat16),
        "bo": jnp.zeros((L, 1, H), jnp.float32),
        "ln_attn": ln_stack(L),
        "w1": nrm(ks[5], (L, H, I), jnp.bfloat16),
        "b1": jnp.zeros((L, 1, I), jnp.float32),
        "w2": nrm(ks[6], (L, I, H), jnp.bfloat16),
        "b2": jnp.zeros((L, 1, H), jnp.float32),
        "ln_ffn": ln_stack(L),
    }


# ----- full forward: BERTTextEncoder.forward ----------------------------------
def bert_text_encoder(input_ids, attention_mask, params):
    B, S = input_ids.shape
    # Embedding gather + position + token-type(0): glue, done in plain JAX.
    emb = (params["word_emb"][input_ids]
           + params["pos_emb"][:S][None, :, :]
           + params["type_emb"][0][None, None, :]).astype(jnp.float32)

    # Extended attention mask: (1 - mask) * -10000, broadcast over queries.
    mask_bias = (1.0 - attention_mask.astype(jnp.float32)) * -10000.0
    mask_bias = jnp.broadcast_to(mask_bias[:, None, :], (B, S, S))

    last_hidden = pl.pallas_call(
        bert_encoder_kernel,
        out_shape=jax.ShapeDtypeStruct((B, S, HIDDEN), jnp.float32),
    )(emb, mask_bias, params["emb_ln"],
      params["wqkv"], params["bqkv"], params["wo"], params["bo"], params["ln_attn"],
      params["w1"], params["b1"], params["w2"], params["b2"], params["ln_ffn"])

    # last_hidden_state[:, 0, :]  (CLS token)
    # TODO(synk): torch.utils.checkpoint is a training-time memory optimization;
    # forward semantics are identical, so it is a no-op here.
    return last_hidden[:, 0, :]


if __name__ == "__main__":
    key = jax.random.PRNGKey(0)
    pkey, idkey = jax.random.split(key)
    params = init_params(pkey)

    B, S = 2, 8
    input_ids = jax.random.randint(idkey, (B, S), 0, VOCAB, dtype=jnp.int32)
    attention_mask = jnp.array(
        [[1, 1, 1, 1, 1, 1, 1, 1],
         [1, 1, 1, 1, 1, 1, 0, 0]], dtype=jnp.int32)

    out = jax.jit(bert_text_encoder)(input_ids, attention_mask, params)
    out = jax.block_until_ready(out)
    assert out.shape == (B, HIDDEN) and out.dtype == jnp.float32
    print("KERNEL_OK")
</pallas_src>

<mosaic_0001>
module attributes {stable_mosaic.version = 11 : i64} {
  func.func @bert_encoder_kernel(%arg0: memref<2x8x32xf32, #tpu.memory_space<vmem>>, %arg1: memref<2x8x8xf32, #tpu.memory_space<vmem>>, %arg2: memref<2x1x32xf32, #tpu.memory_space<vmem>>, %arg3: memref<2x3x4x32x8xbf16, #tpu.memory_space<vmem>>, %arg4: memref<2x3x4x1x8xf32, #tpu.memory_space<vmem>>, %arg5: memref<2x4x8x32xbf16, #tpu.memory_space<vmem>>, %arg6: memref<2x1x32xf32, #tpu.memory_space<vmem>>, %arg7: memref<2x2x1x32xf32, #tpu.memory_space<vmem>>, %arg8: memref<2x32x64xbf16, #tpu.memory_space<vmem>>, %arg9: memref<2x1x64xf32, #tpu.memory_space<vmem>>, %arg10: memref<2x64x32xbf16, #tpu.memory_space<vmem>>, %arg11: memref<2x1x32xf32, #tpu.memory_space<vmem>>, %arg12: memref<2x2x1x32xf32, #tpu.memory_space<vmem>>, %arg13: memref<2x8x32xf32, #tpu.memory_space<vmem>>) attributes {dimension_semantics = [], scalar_prefetch = 0 : i64, scratch_operands = 0 : i64, tpu.core_type = #tpu.core_type<tc>} {
    %c0 = arith.constant 0 : index
    %c0_0 = arith.constant 0 : index
    %c0_1 = arith.constant 0 : index
    %0 = vector.load %arg0[%c0, %c0_0, %c0_1] : memref<2x8x32xf32, #tpu.memory_space<vmem>>, vector<2x8x32xf32>
    %1 = vector.shape_cast %0 : vector<2x8x32xf32> to vector<16x32xf32>
    %c0_2 = arith.constant 0 : index
    %c0_3 = arith.constant 0 : index
    %c0_4 = arith.constant 0 : index
    %2 = vector.load %arg2[%c0_2, %c0_3, %c0_4] : memref<2x1x32xf32, #tpu.memory_space<vmem>>, vector<1x1x32xf32>
    %3 = vector.shape_cast %2 : vector<1x1x32xf32> to vector<1x32xf32>
    %c1 = arith.constant 1 : index
    %c0_5 = arith.constant 0 : index
    %c0_6 = arith.constant 0 : index
    %4 = vector.load %arg2[%c1, %c0_5, %c0_6] : memref<2x1x32xf32, #tpu.memory_space<vmem>>, vector<1x1x32xf32>
    %5 = vector.shape_cast %4 : vector<1x1x32xf32> to vector<1x32xf32>
    %cst = arith.constant dense<0.000000e+00> : vector<16xf32>
    %6 = vector.multi_reduction <add>, %1, %cst [1] : vector<16x32xf32> to vector<16xf32>
    %7 = vector.shape_cast %6 : vector<16xf32> to vector<16x1xf32>
    %cst_7 = arith.constant 3.200000e+01 : f32
    %8 = vector.broadcast %cst_7 : f32 to vector<16x1xf32>
    %9 = arith.divf %7, %8 : vector<16x1xf32>
    %10 = vector.broadcast %9 : vector<16x1xf32> to vector<16x32xf32>
    %11 = arith.subf %1, %10 : vector<16x32xf32>
    %12 = arith.mulf %11, %11 : vector<16x32xf32>
    %cst_8 = arith.constant dense<0.000000e+00> : vector<16xf32>
    %13 = vector.multi_reduction <add>, %12, %cst_8 [1] : vector<16x32xf32> to vector<16xf32>
    %14 = vector.shape_cast %13 : vector<16xf32> to vector<16x1xf32>
    %cst_9 = arith.constant 3.200000e+01 : f32
    %15 = vector.broadcast %cst_9 : f32 to vector<16x1xf32>
    %16 = arith.divf %14, %15 : vector<16x1xf32>
    %17 = vector.broadcast %9 : vector<16x1xf32> to vector<16x32xf32>
    %18 = arith.subf %1, %17 : vector<16x32xf32>
    %cst_10 = arith.constant 9.99999996E-13 : f32
    %19 = vector.broadcast %cst_10 : f32 to vector<16x1xf32>
    %20 = arith.addf %16, %19 : vector<16x1xf32>
    %21 = math.rsqrt %20 : vector<16x1xf32>
    %22 = vector.broadcast %21 : vector<16x1xf32> to vector<16x32xf32>
    %23 = arith.mulf %18, %22 : vector<16x32xf32>
    %24 = vector.broadcast %3 : vector<1x32xf32> to vector<16x32xf32>
    %25 = arith.mulf %23, %24 : vector<16x32xf32>
    %26 = vector.broadcast %5 : vector<1x32xf32> to vector<16x32xf32>
    %27 = arith.addf %25, %26 : vector<16x32xf32>
    %c0_11 = arith.constant 0 : index
    %c0_12 = arith.constant 0 : index
    %c0_13 = arith.constant 0 : index
    %28 = vector.load %arg1[%c0_11, %c0_12, %c0_13] : memref<2x8x8xf32, #tpu.memory_space<vmem>>, vector<2x8x8xf32>
    %29 = arith.truncf %27 : vector<16x32xf32> to vector<16x32xbf16>
    %cst_14 = arith.constant 0.000000e+00 : f32
    %30 = vector.broadcast %cst_14 : f32 to vector<16x32xf32>
    %c0_15 = arith.constant 0 : index
    %c0_16 = arith.constant 0 : index
    %c0_17 = arith.constant 0 : index
    %c0_18 = arith.constant 0 : index
    %c0_19 = arith.constant 0 : index
    %31 = vector.load %arg3[%c0_15, %c0_16, %c0_17, %c0_18, %c0_19] : memref<2x3x4x32x8xbf16, #tpu.memory_space<vmem>>, vector<1x1x1x32x8xbf16>
    %32 = vector.shape_cast %31 : vector<1x1x1x32x8xbf16> to vector<32x8xbf16>
    %cst_20 = arith.constant dense<0.000000e+00> : vector<16x8xf32>
    %33 = tpu.matmul %29, %32, %cst_20 {dimension_numbers = #tpu.dot_dimension_numbers<[1], [0], [0], [1], [0, 0, 1, 1], [], []>} : vector<16x32xbf16>, vector<32x8xbf16>, vector<16x8xf32> -> vector<16x8xf32>
    %c0_21 = arith.constant 0 : index
    %c0_22 = arith.constant 0 : index
    %c0_23 = arith.constant 0 : index
    %c0_24 = arith.constant 0 : index
    %c0_25 = arith.constant 0 : index
    %34 = vector.load %arg4[%c0_21, %c0_22, %c0_23, %c0_24, %c0_25] : memref<2x3x4x1x8xf32, #tpu.memory_space<vmem>>, vector<1x1x1x1x8xf32>
    %35 = vector.shape_cast %34 : vector<1x1x1x1x8xf32> to vector<1x8xf32>
    %36 = vector.broadcast %35 : vector<1x8xf32> to vector<16x8xf32>
    %37 = arith.addf %33, %36 : vector<16x8xf32>
    %c0_26 = arith.constant 0 : index
    %c1_27 = arith.constant 1 : index
    %c0_28 = arith.constant 0 : index
    %c0_29 = arith.constant 0 : index
    %c0_30 = arith.constant 0 : index
    %38 = vector.load %arg3[%c0_26, %c1_27, %c0_28, %c0_29, %c0_30] : memref<2x3x4x32x8xbf16, #tpu.memory_space<vmem>>, vector<1x1x1x32x8xbf16>
    %39 = vector.shape_cast %38 : vector<1x1x1x32x8xbf16> to vector<32x8xbf16>
    %cst_31 = arith.constant dense<0.000000e+00> : vector<16x8xf32>
    %40 = tpu.matmul %29, %39, %cst_31 {dimension_numbers = #tpu.dot_dimension_numbers<[1], [0], [0], [1], [0, 0, 1, 1], [], []>} : vector<16x32xbf16>, vector<32x8xbf16>, vector<16x8xf32> -> vector<16x8xf32>
    %c0_32 = arith.constant 0 : index
    %c1_33 = arith.constant 1 : index
    %c0_34 = arith.constant 0 : index
    %c0_35 = arith.constant 0 : index
    %c0_36 = arith.constant 0 : index
    %41 = vector.load %arg4[%c0_32, %c1_33, %c0_34, %c0_35, %c0_36] : memref<2x3x4x1x8xf32, #tpu.memory_space<vmem>>, vector<1x1x1x1x8xf32>
    %42 = vector.shape_cast %41 : vector<1x1x1x1x8xf32> to vector<1x8xf32>
    %43 = vector.broadcast %42 : vector<1x8xf32> to vector<16x8xf32>
    %44 = arith.addf %40, %43 : vector<16x8xf32>
    %c0_37 = arith.constant 0 : index
    %c2 = arith.constant 2 : index
    %c0_38 = arith.constant 0 : index
    %c0_39 = arith.constant 0 : index
    %c0_40 = arith.constant 0 : index
    %45 = vector.load %arg3[%c0_37, %c2, %c0_38, %c0_39, %c0_40] : memref<2x3x4x32x8xbf16, #tpu.memory_space<vmem>>, vector<1x1x1x32x8xbf16>
    %46 = vector.shape_cast %45 : vector<1x1x1x32x8xbf16> to vector<32x8xbf16>
    %cst_41 = arith.constant dense<0.000000e+00> : vector<16x8xf32>
    %47 = tpu.matmul %29, %46, %cst_41 {dimension_numbers = #tpu.dot_dimension_numbers<[1], [0], [0], [1], [0, 0, 1, 1], [], []>} : vector<16x32xbf16>, vector<32x8xbf16>, vector<16x8xf32> -> vector<16x8xf32>
    %c0_42 = arith.constant 0 : index
    %c2_43 = arith.constant 2 : index
    %c0_44 = arith.constant 0 : index
    %c0_45 = arith.constant 0 : index
    %c0_46 = arith.constant 0 : index
    %48 = vector.load %arg4[%c0_42, %c2_43, %c0_44, %c0_45, %c0_46] : memref<2x3x4x1x8xf32, #tpu.memory_space<vmem>>, vector<1x1x1x1x8xf32>
    %49 = vector.shape_cast %48 : vector<1x1x1x1x8xf32> to vector<1x8xf32>
    %50 = vector.broadcast %49 : vector<1x8xf32> to vector<16x8xf32>
    %51 = arith.addf %47, %50 : vector<16x8xf32>
    %52 = vector.shape_cast %37 : vector<16x8xf32> to vector<2x8x8xf32>
    %53 = arith.truncf %52 : vector<2x8x8xf32> to vector<2x8x8xbf16>
    %54 = vector.shape_cast %44 : vector<16x8xf32> to vector<2x8x8xf32>
    %55 = arith.truncf %54 : vector<2x8x8xf32> to vector<2x8x8xbf16>
    %56 = vector.shape_cast %51 : vector<16x8xf32> to vector<2x8x8xf32>
    %57 = arith.truncf %56 : vector<2x8x8xf32> to vector<2x8x8xbf16>
    "tpu.trace_start"() <{level = 10 : i32, message = "bqd,bkd->bqk"}> : () -> ()
    %cst_47 = arith.constant dense<0.000000e+00> : vector<2x8x8xf32>
    %58 = tpu.matmul %53, %55, %cst_47 {dimension_numbers = #tpu.dot_dimension_numbers<[2], [2], [1], [1], [0, 0, 0, 1, 1, 1], [0], [0]>} : vector<2x8x8xbf16>, vector<2x8x8xbf16>, vector<2x8x8xf32> -> vector<2x8x8xf32>
    "tpu.trace_stop"() : () -> ()
    %cst_48 = arith.constant 0.353553385 : f32
    %59 = vector.broadcast %cst_48 : f32 to vector<2x8x8xf32>
    %60 = arith.mulf %58, %59 : vector<2x8x8xf32>
    %61 = arith.addf %60, %28 : vector<2x8x8xf32>
    %cst_49 = arith.constant dense<0xFF800000> : vector<2x8xf32>
    %62 = vector.multi_reduction <maximumf>, %61, %cst_49 [2] : vector<2x8x8xf32> to vector<2x8xf32>
    %63 = vector.shape_cast %62 : vector<2x8xf32> to vector<2x8x1xf32>
    %64 = vector.broadcast %63 : vector<2x8x1xf32> to vector<2x8x8xf32>
    %65 = arith.subf %61, %64 : vector<2x8x8xf32>
    %66 = math.exp %65 : vector<2x8x8xf32>
    %cst_50 = arith.constant dense<0.000000e+00> : vector<2x8xf32>
    %67 = vector.multi_reduction <add>, %66, %cst_50 [2] : vector<2x8x8xf32> to vector<2x8xf32>
    %68 = vector.shape_cast %67 : vector<2x8xf32> to vector<2x8x1xf32>
    %69 = tpu.reciprocal %68 {approx = true} : vector<2x8x1xf32> -> vector<2x8x1xf32>
    %70 = vector.broadcast %69 : vector<2x8x1xf32> to vector<2x8x8xf32>
    %71 = arith.mulf %66, %70 : vector<2x8x8xf32>
    %72 = arith.truncf %71 : vector<2x8x8xf32> to vector<2x8x8xbf16>
    "tpu.trace_start"() <{level = 10 : i32, message = "bqk,bkd->bqd"}> : () -> ()
    %cst_51 = arith.constant dense<0.000000e+00> : vector<2x8x8xf32>
    %73 = tpu.matmul %72, %57, %cst_51 {dimension_numbers = #tpu.dot_dimension_numbers<[2], [1], [1], [2], [0, 0, 0, 1, 1, 2], [0], [0]>} : vector<2x8x8xbf16>, vector<2x8x8xbf16>, vector<2x8x8xf32> -> vector<2x8x8xf32>
    "tpu.trace_stop"() : () -> ()
    %74 = vector.shape_cast %73 : vector<2x8x8xf32> to vector<16x8xf32>
    %75 = arith.truncf %74 : vector<16x8xf32> to vector<16x8xbf16>
    %c0_52 = arith.constant 0 : index
    %c0_53 = arith.constant 0 : index
    %c0_54 = arith.constant 0 : index
    %c0_55 = arith.constant 0 : index
    %76 = vector.load %arg5[%c0_52, %c0_53, %c0_54, %c0_55] : memref<2x4x8x32xbf16, #tpu.memory_space<vmem>>, vector<1x1x8x32xbf16>
    %77 = vector.shape_cast %76 : vector<1x1x8x32xbf16> to vector<8x32xbf16>
    %cst_56 = arith.constant dense<0.000000e+00> : vector<16x32xf32>
    %78 = tpu.matmul %75, %77, %cst_56 {dimension_numbers = #tpu.dot_dimension_numbers<[1], [0], [0], [1], [0, 0, 1, 1], [], []>} : vector<16x8xbf16>, vector<8x32xbf16>, vector<16x32xf32> -> vector<16x32xf32>
    %79 = arith.addf %30, %78 : vector<16x32xf32>
    %c0_57 = arith.constant 0 : index
    %c0_58 = arith.constant 0 : index
    %c1_59 = arith.constant 1 : index
    %c0_60 = arith.constant 0 : index
    %c0_61 = arith.constant 0 : index
    %80 = vector.load %arg3[%c0_57, %c0_58, %c1_59, %c0_60, %c0_61] : memref<2x3x4x32x8xbf16, #tpu.memory_space<vmem>>, vector<1x1x1x32x8xbf16>
    %81 = vector.shape_cast %80 : vector<1x1x1x32x8xbf16> to vector<32x8xbf16>
    %cst_62 = arith.constant dense<0.000000e+00> : vector<16x8xf32>
    %82 = tpu.matmul %29, %81, %cst_62 {dimension_numbers = #tpu.dot_dimension_numbers<[1], [0], [0], [1], [0, 0, 1, 1], [], []>} : vector<16x32xbf16>, vector<32x8xbf16>, vector<16x8xf32> -> vector<16x8xf32>
    %c0_63 = arith.constant 0 : index
    %c0_64 = arith.constant 0 : index
    %c1_65 = arith.constant 1 : index
    %c0_66 = arith.constant 0 : index
    %c0_67 = arith.constant 0 : index
    %83 = vector.load %arg4[%c0_63, %c0_64, %c1_65, %c0_66, %c0_67] : memref<2x3x4x1x8xf32, #tpu.memory_space<vmem>>, vector<1x1x1x1x8xf32>
    %84 = vector.shape_cast %83 : vector<1x1x1x1x8xf32> to vector<1x8xf32>
    %85 = vector.broadcast %84 : vector<1x8xf32> to vector<16x8xf32>
    %86 = arith.addf %82, %85 : vector<16x8xf32>
    %c0_68 = arith.constant 0 : index
    %c1_69 = arith.constant 1 : index
    %c1_70 = arith.constant 1 : index
    %c0_71 = arith.constant 0 : index
    %c0_72 = arith.constant 0 : index
    %87 = vector.load %arg3[%c0_68, %c1_69, %c1_70, %c0_71, %c0_72] : memref<2x3x4x32x8xbf16, #tpu.memory_space<vmem>>, vector<1x1x1x32x8xbf16>
    %88 = vector.shape_cast %87 : vector<1x1x1x32x8xbf16> to vector<32x8xbf16>
    %cst_73 = arith.constant dense<0.000000e+00> : vector<16x8xf32>
    %89 = tpu.matmul %29, %88, %cst_73 {dimension_numbers = #tpu.dot_dimension_numbers<[1], [0], [0], [1], [0, 0, 1, 1], [], []>} : vector<16x32xbf16>, vector<32x8xbf16>, vector<16x8xf32> -> vector<16x8xf32>
    %c0_74 = arith.constant 0 : index
    %c1_75 = arith.constant 1 : index
    %c1_76 = arith.constant 1 : index
    %c0_77 = arith.constant 0 : index
    %c0_78 = arith.constant 0 : index
    %90 = vector.load %arg4[%c0_74, %c1_75, %c1_76, %c0_77, %c0_78] : memref<2x3x4x1x8xf32, #tpu.memory_space<vmem>>, vector<1x1x1x1x8xf32>
    %91 = vector.shape_cast %90 : vector<1x1x1x1x8xf32> to vector<1x8xf32>
    %92 = vector.broadcast %91 : vector<1x8xf32> to vector<16x8xf32>
    %93 = arith.addf %89, %92 : vector<16x8xf32>
    %c0_79 = arith.constant 0 : index
    %c2_80 = arith.constant 2 : index
    %c1_81 = arith.constant 1 : index
    %c0_82 = arith.constant 0 : index
    %c0_83 = arith.constant 0 : index
    %94 = vector.load %arg3[%c0_79, %c2_80, %c1_81, %c0_82, %c0_83] : memref<2x3x4x32x8xbf16, #tpu.memory_space<vmem>>, vector<1x1x1x32x8xbf16>
    %95 = vector.shape_cast %94 : vector<1x1x1x32x8xbf16> to vector<32x8xbf16>
    %cst_84 = arith.constant dense<0.000000e+00> : vector<16x8xf32>
    %96 = tpu.matmul %29, %95, %cst_84 {dimension_numbers = #tpu.dot_dimension_numbers<[1], [0], [0], [1], [0, 0, 1, 1], [], []>} : vector<16x32xbf16>, vector<32x8xbf16>, vector<16x8xf32> -> vector<16x8xf32>
    %c0_85 = arith.constant 0 : index
    %c2_86 = arith.constant 2 : index
    %c1_87 = arith.constant 1 : index
    %c0_88 = arith.constant 0 : index
    %c0_89 = arith.constant 0 : index
    %97 = vector.load %arg4[%c0_85, %c2_86, %c1_87, %c0_88, %c0_89] : memref<2x3x4x1x8xf32, #tpu.memory_space<vmem>>, vector<1x1x1x1x8xf32>
    %98 = vector.shape_cast %97 : vector<1x1x1x1x8xf32> to vector<1x8xf32>
    %99 = vector.broadcast %98 : vector<1x8xf32> to vector<16x8xf32>
    %100 = arith.addf %96, %99 : vector<16x8xf32>
    %101 = vector.shape_cast %86 : vector<16x8xf32> to vector<2x8x8xf32>
    %102 = arith.truncf %101 : vector<2x8x8xf32> to vector<2x8x8xbf16>
    %103 = vector.shape_cast %93 : vector<16x8xf32> to vector<2x8x8xf32>
    %104 = arith.truncf %103 : vector<2x8x8xf32> to vector<2x8x8xbf16>
    %105 = vector.shape_cast %100 : vector<16x8xf32> to vector<2x8x8xf32>
    %106 = arith.truncf %105 : vector<2x8x8xf32> to vector<2x8x8xbf16>
    "tpu.trace_start"() <{level = 10 : i32, message = "bqd,bkd->bqk"}> : () -> ()
    %cst_90 = arith.constant dense<0.000000e+00> : vector<2x8x8xf32>
    %107 = tpu.matmul %102, %104, %cst_90 {dimension_numbers = #tpu.dot_dimension_numbers<[2], [2], [1], [1], [0, 0, 0, 1, 1, 1], [0], [0]>} : vector<2x8x8xbf16>, vector<2x8x8xbf16>, vector<2x8x8xf32> -> vector<2x8x8xf32>
    "tpu.trace_stop"() : () -> ()
    %cst_91 = arith.constant 0.353553385 : f32
    %108 = vector.broadcast %cst_91 : f32 to vector<2x8x8xf32>
    %109 = arith.mulf %107, %108 : vector<2x8x8xf32>
    %110 = arith.addf %109, %28 : vector<2x8x8xf32>
    %cst_92 = arith.constant dense<0xFF800000> : vector<2x8xf32>
    %111 = vector.multi_reduction <maximumf>, %110, %cst_92 [2] : vector<2x8x8xf32> to vector<2x8xf32>
    %112 = vector.shape_cast %111 : vector<2x8xf32> to vector<2x8x1xf32>
    %113 = vector.broadcast %112 : vector<2x8x1xf32> to vector<2x8x8xf32>
    %114 = arith.subf %110, %113 : vector<2x8x8xf32>
    %115 = math.exp %114 : vector<2x8x8xf32>
    %cst_93 = arith.constant dense<0.000000e+00> : vector<2x8xf32>
    %116 = vector.multi_reduction <add>, %115, %cst_93 [2] : vector<2x8x8xf32> to vector<2x8xf32>
    %117 = vector.shape_cast %116 : vector<2x8xf32> to vector<2x8x1xf32>
    %118 = tpu.reciprocal %117 {approx = true} : vector<2x8x1xf32> -> vector<2x8x1xf32>
    %119 = vector.broadcast %118 : vector<2x8x1xf32> to vector<2x8x8xf32>
    %120 = arith.mulf %115, %119 : vector<2x8x8xf32>
    %121 = arith.truncf %120 : vector<2x8x8xf32> to vector<2x8x8xbf16>
    "tpu.trace_start"() <{level = 10 : i32, message = "bqk,bkd->bqd"}> : () -> ()
    %cst_94 = arith.constant dense<0.000000e+00> : vector<2x8x8xf32>
    %122 = tpu.matmul %121, %106, %cst_94 {dimension_numbers = #tpu.dot_dimension_numbers<[2], [1], [1], [2], [0, 0, 0, 1, 1, 2], [0], [0]>} : vector<2x8x8xbf16>, vector<2x8x8xbf16>, vector<2x8x8xf32> -> vector<2x8x8xf32>
    "tpu.trace_stop"() : () -> ()
    %123 = vector.shape_cast %122 : vector<2x8x8xf32> to vector<16x8xf32>
    %124 = arith.truncf %123 : vector<16x8xf32> to vector<16x8xbf16>
    %c0_95 = arith.constant 0 : index
    %c1_96 = arith.constant 1 : index
    %c0_97 = arith.constant 0 : index
    %c0_98 = arith.constant 0 : index
    %125 = vector.load %arg5[%c0_95, %c1_96, %c0_97, %c0_98] : memref<2x4x8x32xbf16, #tpu.memory_space<vmem>>, vector<1x1x8x32xbf16>
    %126 = vector.shape_cast %125 : vector<1x1x8x32xbf16> to vector<8x32xbf16>
    %cst_99 = arith.constant dense<0.000000e+00> : vector<16x32xf32>
    %127 = tpu.matmul %124, %126, %cst_99 {dimension_numbers = #tpu.dot_dimension_numbers<[1], [0], [0], [1], [0, 0, 1, 1], [], []>} : vector<16x8xbf16>, vector<8x32xbf16>, vector<16x32xf32> -> vector<16x32xf32>
    %128 = arith.addf %79, %127 : vector<16x32xf32>
    %c0_100 = arith.constant 0 : index
    %c0_101 = arith.constant 0 : index
    %c2_102 = arith.constant 2 : index
    %c0_103 = arith.constant 0 : index
    %c0_104 = arith.constant 0 : index
    %129 = vector.load %arg3[%c0_100, %c0_101, %c2_102, %c0_103, %c0_104] : memref<2x3x4x32x8xbf16, #tpu.memory_space<vmem>>, vector<1x1x1x32x8xbf16>
    %130 = vector.shape_cast %129 : vector<1x1x1x32x8xbf16> to vector<32x8xbf16>
    %cst_105 = arith.constant dense<0.000000e+00> : vector<16x8xf32>
    %131 = tpu.matmul %29, %130, %cst_105 {dimension_numbers = #tpu.dot_dimension_numbers<[1], [0], [0], [1], [0, 0, 1, 1], [], []>} : vector<16x32xbf16>, vector<32x8xbf16>, vector<16x8xf32> -> vector<16x8xf32>
    %c0_106 = arith.constant 0 : index
    %c0_107 = arith.constant 0 : index
    %c2_108 = arith.constant 2 : index
    %c0_109 = arith.constant 0 : index
    %c0_110 = arith.constant 0 : index
    %132 = vector.load %arg4[%c0_106, %c0_107, %c2_108, %c0_109, %c0_110] : memref<2x3x4x1x8xf32, #tpu.memory_space<vmem>>, vector<1x1x1x1x8xf32>
    %133 = vector.shape_cast %132 : vector<1x1x1x1x8xf32> to vector<1x8xf32>
    %134 = vector.broadcast %133 : vector<1x8xf32> to vector<16x8xf32>
    %135 = arith.addf %131, %134 : vector<16x8xf32>
    %c0_111 = arith.constant 0 : index
    %c1_112 = arith.constant 1 : index
    %c2_113 = arith.constant 2 : index
    %c0_114 = arith.constant 0 : index
    %c0_115 = arith.constant 0 : index
    %136 = vector.load %arg3[%c0_111, %c1_112, %c2_113, %c0_114, %c0_115] : memref<2x3x4x32x8xbf16, #tpu.memory_space<vmem>>, vector<1x1x1x32x8xbf16>
    %137 = vector.shape_cast %136 : vector<1x1x1x32x8xbf16> to vector<32x8xbf16>
    %cst_116 = arith.constant dense<0.000000e+00> : vector<16x8xf32>
    %138 = tpu.matmul %29, %137, %cst_116 {dimension_numbers = #tpu.dot_dimension_numbers<[1], [0], [0], [1], [0, 0, 1, 1], [], []>} : vector<16x32xbf16>, vector<32x8xbf16>, vector<16x8xf32> -> vector<16x8xf32>
    %c0_117 = arith.constant 0 : index
    %c1_118 = arith.constant 1 : index
    %c2_119 = arith.constant 2 : index
    %c0_120 = arith.constant 0 : index
    %c0_121 = arith.constant 0 : index
    %139 = vector.load %arg4[%c0_117, %c1_118, %c2_119, %c0_120, %c0_121] : memref<2x3x4x1x8xf32, #tpu.memory_space<vmem>>, vector<1x1x1x1x8xf32>
    %140 = vector.shape_cast %139 : vector<1x1x1x1x8xf32> to vector<1x8xf32>
    %141 = vector.broadcast %140 : vector<1x8xf32> to vector<16x8xf32>
    %142 = arith.addf %138, %141 : vector<16x8xf32>
    %c0_122 = arith.constant 0 : index
    %c2_123 = arith.constant 2 : index
    %c2_124 = arith.constant 2 : index
    %c0_125 = arith.constant 0 : index
    %c0_126 = arith.constant 0 : index
    %143 = vector.load %arg3[%c0_122, %c2_123, %c2_124, %c0_125, %c0_126] : memref<2x3x4x32x8xbf16, #tpu.memory_space<vmem>>, vector<1x1x1x32x8xbf16>
    %144 = vector.shape_cast %143 : vector<1x1x1x32x8xbf16> to vector<32x8xbf16>
    %cst_127 = arith.constant dense<0.000000e+00> : vector<16x8xf32>
    %145 = tpu.matmul %29, %144, %cst_127 {dimension_numbers = #tpu.dot_dimension_numbers<[1], [0], [0], [1], [0, 0, 1, 1], [], []>} : vector<16x32xbf16>, vector<32x8xbf16>, vector<16x8xf32> -> vector<16x8xf32>
    %c0_128 = arith.constant 0 : index
    %c2_129 = arith.constant 2 : index
    %c2_130 = arith.constant 2 : index
    %c0_131 = arith.constant 0 : index
    %c0_132 = arith.constant 0 : index
    %146 = vector.load %arg4[%c0_128, %c2_129, %c2_130, %c0_131, %c0_132] : memref<2x3x4x1x8xf32, #tpu.memory_space<vmem>>, vector<1x1x1x1x8xf32>
    %147 = vector.shape_cast %146 : vector<1x1x1x1x8xf32> to vector<1x8xf32>
    %148 = vector.broadcast %147 : vector<1x8xf32> to vector<16x8xf32>
    %149 = arith.addf %145, %148 : vector<16x8xf32>
    %150 = vector.shape_cast %135 : vector<16x8xf32> to vector<2x8x8xf32>
    %151 = arith.truncf %150 : vector<2x8x8xf32> to vector<2x8x8xbf16>
    %152 = vector.shape_cast %142 : vector<16x8xf32> to vector<2x8x8xf32>
    %153 = arith.truncf %152 : vector<2x8x8xf32> to vector<2x8x8xbf16>
    %154 = vector.shape_cast %149 : vector<16x8xf32> to vector<2x8x8xf32>
    %155 = arith.truncf %154 : vector<2x8x8xf32> to vector<2x8x8xbf16>
    "tpu.trace_start"() <{level = 10 : i32, message = "bqd,bkd->bqk"}> : () -> ()
    %cst_133 = arith.constant dense<0.000000e+00> : vector<2x8x8xf32>
    %156 = tpu.matmul %151, %153, %cst_133 {dimension_numbers = #tpu.dot_dimension_numbers<[2], [2], [1], [1], [0, 0, 0, 1, 1, 1], [0], [0]>} : vector<2x8x8xbf16>, vector<2x8x8xbf16>, vector<2x8x8xf32> -> vector<2x8x8xf32>
    "tpu.trace_stop"() : () -> ()
    %cst_134 = arith.constant 0.353553385 : f32
    %157 = vector.broadcast %cst_134 : f32 to vector<2x8x8xf32>
    %158 = arith.mulf %156, %157 : vector<2x8x8xf32>
    %159 = arith.addf %158, %28 : vector<2x8x8xf32>
    %cst_135 = arith.constant dense<0xFF800000> : vector<2x8xf32>
    %160 = vector.multi_reduction <maximumf>, %159, %cst_135 [2] : vector<2x8x8xf32> to vector<2x8xf32>
    %161 = vector.shape_cast %160 : vector<2x8xf32> to vector<2x8x1xf32>
    %162 = vector.broadcast %161 : vector<2x8x1xf32> to vector<2x8x8xf32>
    %163 = arith.subf %159, %162 : vector<2x8x8xf32>
    %164 = math.exp %163 : vector<2x8x8xf32>
    %cst_136 = arith.constant dense<0.000000e+00> : vector<2x8xf32>
    %165 = vector.multi_reduction <add>, %164, %cst_136 [2] : vector<2x8x8xf32> to vector<2x8xf32>
    %166 = vector.shape_cast %165 : vector<2x8xf32> to vector<2x8x1xf32>
    %167 = tpu.reciprocal %166 {approx = true} : vector<2x8x1xf32> -> vector<2x8x1xf32>
    %168 = vector.broadcast %167 : vector<2x8x1xf32> to vector<2x8x8xf32>
    %169 = arith.mulf %164, %168 : vector<2x8x8xf32>
    %170 = arith.truncf %169 : vector<2x8x8xf32> to vector<2x8x8xbf16>
    "tpu.trace_start"() <{level = 10 : i32, message = "bqk,bkd->bqd"}> : () -> ()
    %cst_137 = arith.constant dense<0.000000e+00> : vector<2x8x8xf32>
    %171 = tpu.matmul %170, %155, %cst_137 {dimension_numbers = #tpu.dot_dimension_numbers<[2], [1], [1], [2], [0, 0, 0, 1, 1, 2], [0], [0]>} : vector<2x8x8xbf16>, vector<2x8x8xbf16>, vector<2x8x8xf32> -> vector<2x8x8xf32>
    "tpu.trace_stop"() : () -> ()
    %172 = vector.shape_cast %171 : vector<2x8x8xf32> to vector<16x8xf32>
    %173 = arith.truncf %172 : vector<16x8xf32> to vector<16x8xbf16>
    %c0_138 = arith.constant 0 : index
    %c2_139 = arith.constant 2 : index
    %c0_140 = arith.constant 0 : index
    %c0_141 = arith.constant 0 : index
    %174 = vector.load %arg5[%c0_138, %c2_139, %c0_140, %c0_141] : memref<2x4x8x32xbf16, #tpu.memory_space<vmem>>, vector<1x1x8x32xbf16>
    %175 = vector.shape_cast %174 : vector<1x1x8x32xbf16> to vector<8x32xbf16>
    %cst_142 = arith.constant dense<0.000000e+00> : vector<16x32xf32>
    %176 = tpu.matmul %173, %175, %cst_142 {dimension_numbers = #tpu.dot_dimension_numbers<[1], [0], [0], [1], [0, 0, 1, 1], [], []>} : vector<16x8xbf16>, vector<8x32xbf16>, vector<16x32xf32> -> vector<16x32xf32>
    %177 = arith.addf %128, %176 : vector<16x32xf32>
    %c0_143 = arith.constant 0 : index
    %c0_144 = arith.constant 0 : index
    %c3 = arith.constant 3 : index
    %c0_145 = arith.constant 0 : index
    %c0_146 = arith.constant 0 : index
    %178 = vector.load %arg3[%c0_143, %c0_144, %c3, %c0_145, %c0_146] : memref<2x3x4x32x8xbf16, #tpu.memory_space<vmem>>, vector<1x1x1x32x8xbf16>
    %179 = vector.shape_cast %178 : vector<1x1x1x32x8xbf16> to vector<32x8xbf16>
    %cst_147 = arith.constant dense<0.000000e+00> : vector<16x8xf32>
    %180 = tpu.matmul %29, %179, %cst_147 {dimension_numbers = #tpu.dot_dimension_numbers<[1], [0], [0], [1], [0, 0, 1, 1], [], []>} : vector<16x32xbf16>, vector<32x8xbf16>, vector<16x8xf32> -> vector<16x8xf32>
    %c0_148 = arith.constant 0 : index
    %c0_149 = arith.constant 0 : index
    %c3_150 = arith.constant 3 : index
    %c0_151 = arith.constant 0 : index
    %c0_152 = arith.constant 0 : index
    %181 = vector.load %arg4[%c0_148, %c0_149, %c3_150, %c0_151, %c0_152] : memref<2x3x4x1x8xf32, #tpu.memory_space<vmem>>, vector<1x1x1x1x8xf32>
    %182 = vector.shape_cast %181 : vector<1x1x1x1x8xf32> to vector<1x8xf32>
    %183 = vector.broadcast %182 : vector<1x8xf32> to vector<16x8xf32>
    %184 = arith.addf %180, %183 : vector<16x8xf32>
    %c0_153 = arith.constant 0 : index
    %c1_154 = arith.constant 1 : index
    %c3_155 = arith.constant 3 : index
    %c0_156 = arith.constant 0 : index
    %c0_157 = arith.constant 0 : index
    %185 = vector.load %arg3[%c0_153, %c1_154, %c3_155, %c0_156, %c0_157] : memref<2x3x4x32x8xbf16, #tpu.memory_space<vmem>>, vector<1x1x1x32x8xbf16>
    %186 = vector.shape_cast %185 : vector<1x1x1x32x8xbf16> to vector<32x8xbf16>
    %cst_158 = arith.constant dense<0.000000e+00> : vector<16x8xf32>
    %187 = tpu.matmul %29, %186, %cst_158 {dimension_numbers = #tpu.dot_dimension_numbers<[1], [0], [0], [1], [0, 0, 1, 1], [], []>} : vector<16x32xbf16>, vector<32x8xbf16>, vector<16x8xf32> -> vector<16x8xf32>
    %c0_159 = arith.constant 0 : index
    %c1_160 = arith.constant 1 : index
    %c3_161 = arith.constant 3 : index
    %c0_162 = arith.constant 0 : index
    %c0_163 = arith.constant 0 : index
    %188 = vector.load %arg4[%c0_159, %c1_160, %c3_161, %c0_162, %c0_163] : memref<2x3x4x1x8xf32, #tpu.memory_space<vmem>>, vector<1x1x1x1x8xf32>
    %189 = vector.shape_cast %188 : vector<1x1x1x1x8xf32> to vector<1x8xf32>
    %190 = vector.broadcast %189 : vector<1x8xf32> to vector<16x8xf32>
    %191 = arith.addf %187, %190 : vector<16x8xf32>
    %c0_164 = arith.constant 0 : index
    %c2_165 = arith.constant 2 : index
    %c3_166 = arith.constant 3 : index
    %c0_167 = arith.constant 0 : index
    %c0_168 = arith.constant 0 : index
    %192 = vector.load %arg3[%c0_164, %c2_165, %c3_166, %c0_167, %c0_168] : memref<2x3x4x32x8xbf16, #tpu.memory_space<vmem>>, vector<1x1x1x32x8xbf16>
    %193 = vector.shape_cast %192 : vector<1x1x1x32x8xbf16> to vector<32x8xbf16>
    %cst_169 = arith.constant dense<0.000000e+00> : vector<16x8xf32>
    %194 = tpu.matmul %29, %193, %cst_169 {dimension_numbers = #tpu.dot_dimension_numbers<[1], [0], [0], [1], [0, 0, 1, 1], [], []>} : vector<16x32xbf16>, vector<32x8xbf16>, vector<16x8xf32> -> vector<16x8xf32>
    %c0_170 = arith.constant 0 : index
    %c2_171 = arith.constant 2 : index
    %c3_172 = arith.constant 3 : index
    %c0_173 = arith.constant 0 : index
    %c0_174 = arith.constant 0 : index
    %195 = vector.load %arg4[%c0_170, %c2_171, %c3_172, %c0_173, %c0_174] : memref<2x3x4x1x8xf32, #tpu.memory_space<vmem>>, vector<1x1x1x1x8xf32>
    %196 = vector.shape_cast %195 : vector<1x1x1x1x8xf32> to vector<1x8xf32>
    %197 = vector.broadcast %196 : vector<1x8xf32> to vector<16x8xf32>
    %198 = arith.addf %194, %197 : vector<16x8xf32>
    %199 = vector.shape_cast %184 : vector<16x8xf32> to vector<2x8x8xf32>
    %200 = arith.truncf %199 : vector<2x8x8xf32> to vector<2x8x8xbf16>
    %201 = vector.shape_cast %191 : vector<16x8xf32> to vector<2x8x8xf32>
    %202 = arith.truncf %201 : vector<2x8x8xf32> to vector<2x8x8xbf16>
    %203 = vector.shape_cast %198 : vector<16x8xf32> to vector<2x8x8xf32>
    %204 = arith.truncf %203 : vector<2x8x8xf32> to vector<2x8x8xbf16>
    "tpu.trace_start"() <{level = 10 : i32, message = "bqd,bkd->bqk"}> : () -> ()
    %cst_175 = arith.constant dense<0.000000e+00> : vector<2x8x8xf32>
    %205 = tpu.matmul %200, %202, %cst_175 {dimension_numbers = #tpu.dot_dimension_numbers<[2], [2], [1], [1], [0, 0, 0, 1, 1, 1], [0], [0]>} : vector<2x8x8xbf16>, vector<2x8x8xbf16>, vector<2x8x8xf32> -> vector<2x8x8xf32>
    "tpu.trace_stop"() : () -> ()
    %cst_176 = arith.constant 0.353553385 : f32
    %206 = vector.broadcast %cst_176 : f32 to vector<2x8x8xf32>
    %207 = arith.mulf %205, %206 : vector<2x8x8xf32>
    %208 = arith.addf %207, %28 : vector<2x8x8xf32>
    %cst_177 = arith.constant dense<0xFF800000> : vector<2x8xf32>
    %209 = vector.multi_reduction <maximumf>, %208, %cst_177 [2] : vector<2x8x8xf32> to vector<2x8xf32>
    %210 = vector.shape_cast %209 : vector<2x8xf32> to vector<2x8x1xf32>
    %211 = vector.broadcast %210 : vector<2x8x1xf32> to vector<2x8x8xf32>
    %212 = arith.subf %208, %211 : vector<2x8x8xf32>
    %213 = math.exp %212 : vector<2x8x8xf32>
    %cst_178 = arith.constant dense<0.000000e+00> : vector<2x8xf32>
    %214 = vector.multi_reduction <add>, %213, %cst_178 [2] : vector<2x8x8xf32> to vector<2x8xf32>
    %215 = vector.shape_cast %214 : vector<2x8xf32> to vector<2x8x1xf32>
    %216 = tpu.reciprocal %215 {approx = true} : vector<2x8x1xf32> -> vector<2x8x1xf32>
    %217 = vector.broadcast %216 : vector<2x8x1xf32> to vector<2x8x8xf32>
    %218 = arith.mulf %213, %217 : vector<2x8x8xf32>
    %219 = arith.truncf %218 : vector<2x8x8xf32> to vector<2x8x8xbf16>
    "tpu.trace_start"() <{level = 10 : i32, message = "bqk,bkd->bqd"}> : () -> ()
    %cst_179 = arith.constant dense<0.000000e+00> : vector<2x8x8xf32>
    %220 = tpu.matmul %219, %204, %cst_179 {dimension_numbers = #tpu.dot_dimension_numbers<[2], [1], [1], [2], [0, 0, 0, 1, 1, 2], [0], [0]>} : vector<2x8x8xbf16>, vector<2x8x8xbf16>, vector<2x8x8xf32> -> vector<2x8x8xf32>
    "tpu.trace_stop"() : () -> ()
    %221 = vector.shape_cast %220 : vector<2x8x8xf32> to vector<16x8xf32>
    %222 = arith.truncf %221 : vector<16x8xf32> to vector<16x8xbf16>
    %c0_180 = arith.constant 0 : index
    %c3_181 = arith.constant 3 : index
    %c0_182 = arith.constant 0 : index
    %c0_183 = arith.constant 0 : index
    %223 = vector.load %arg5[%c0_180, %c3_181, %c0_182, %c0_183] : memref<2x4x8x32xbf16, #tpu.memory_space<vmem>>, vector<1x1x8x32xbf16>
    %224 = vector.shape_cast %223 : vector<1x1x8x32xbf16> to vector<8x32xbf16>
    %cst_184 = arith.constant dense<0.000000e+00> : vector<16x32xf32>
    %225 = tpu.matmul %222, %224, %cst_184 {dimension_numbers = #tpu.dot_dimension_numbers<[1], [0], [0], [1], [0, 0, 1, 1], [], []>} : vector<16x8xbf16>, vector<8x32xbf16>, vector<16x32xf32> -> vector<16x32xf32>
    %226 = arith.addf %177, %225 : vector<16x32xf32>
    %227 = arith.addf %27, %226 : vector<16x32xf32>
    %c0_185 = arith.constant 0 : index
    %c0_186 = arith.constant 0 : index
    %c0_187 = arith.constant 0 : index
    %228 = vector.load %arg6[%c0_185, %c0_186, %c0_187] : memref<2x1x32xf32, #tpu.memory_space<vmem>>, vector<1x1x32xf32>
    %229 = vector.shape_cast %228 : vector<1x1x32xf32> to vector<1x32xf32>
    %230 = vector.broadcast %229 : vector<1x32xf32> to vector<16x32xf32>
    %231 = arith.addf %227, %230 : vector<16x32xf32>
    %c0_188 = arith.constant 0 : index
    %c0_189 = arith.constant 0 : index
    %c0_190 = arith.constant 0 : index
    %c0_191 = arith.constant 0 : index
    %232 = vector.load %arg7[%c0_188, %c0_189, %c0_190, %c0_191] : memref<2x2x1x32xf32, #tpu.memory_space<vmem>>, vector<1x1x1x32xf32>
    %233 = vector.shape_cast %232 : vector<1x1x1x32xf32> to vector<1x32xf32>
    %c0_192 = arith.constant 0 : index
    %c1_193 = arith.constant 1 : index
    %c0_194 = arith.constant 0 : index
    %c0_195 = arith.constant 0 : index
    %234 = vector.load %arg7[%c0_192, %c1_193, %c0_194, %c0_195] : memref<2x2x1x32xf32, #tpu.memory_space<vmem>>, vector<1x1x1x32xf32>
    %235 = vector.shape_cast %234 : vector<1x1x1x32xf32> to vector<1x32xf32>
    %cst_196 = arith.constant dense<0.000000e+00> : vector<16xf32>
    %236 = vector.multi_reduction <add>, %231, %cst_196 [1] : vector<16x32xf32> to vector<16xf32>
    %237 = vector.shape_cast %236 : vector<16xf32> to vector<16x1xf32>
    %cst_197 = arith.constant 3.200000e+01 : f32
    %238 = vector.broadcast %cst_197 : f32 to vector<16x1xf32>
    %239 = arith.divf %237, %238 : vector<16x1xf32>
    %240 = vector.broadcast %239 : vector<16x1xf32> to vector<16x32xf32>
    %241 = arith.subf %231, %240 : vector<16x32xf32>
    %242 = arith.mulf %241, %241 : vector<16x32xf32>
    %cst_198 = arith.constant dense<0.000000e+00> : vector<16xf32>
    %243 = vector.multi_reduction <add>, %242, %cst_198 [1] : vector<16x32xf32> to vector<16xf32>
    %244 = vector.shape_cast %243 : vector<16xf32> to vector<16x1xf32>
    %cst_199 = arith.constant 3.200000e+01 : f32
    %245 = vector.broadcast %cst_199 : f32 to vector<16x1xf32>
    %246 = arith.divf %244, %245 : vector<16x1xf32>
    %247 = vector.broadcast %239 : vector<16x1xf32> to vector<16x32xf32>
    %248 = arith.subf %231, %247 : vector<16x32xf32>
    %cst_200 = arith.constant 9.99999996E-13 : f32
    %249 = vector.broadcast %cst_200 : f32 to vector<16x1xf32>
    %250 = arith.addf %246, %249 : vector<16x1xf32>
    %251 = math.rsqrt %250 : vector<16x1xf32>
    %252 = vector.broadcast %251 : vector<16x1xf32> to vector<16x32xf32>
    %253 = arith.mulf %248, %252 : vector<16x32xf32>
    %254 = vector.broadcast %233 : vector<1x32xf32> to vector<16x32xf32>
    %255 = arith.mulf %253, %254 : vector<16x32xf32>
    %256 = vector.broadcast %235 : vector<1x32xf32> to vector<16x32xf32>
    %257 = arith.addf %255, %256 : vector<16x32xf32>
    %258 = arith.truncf %257 : vector<16x32xf32> to vector<16x32xbf16>
    %c0_201 = arith.constant 0 : index
    %c0_202 = arith.constant 0 : index
    %c0_203 = arith.constant 0 : index
    %259 = vector.load %arg8[%c0_201, %c0_202, %c0_203] : memref<2x32x64xbf16, #tpu.memory_space<vmem>>, vector<1x32x64xbf16>
    %260 = vector.shape_cast %259 : vector<1x32x64xbf16> to vector<32x64xbf16>
    %cst_204 = arith.constant dense<0.000000e+00> : vector<16x64xf32>
    %261 = tpu.matmul %258, %260, %cst_204 {dimension_numbers = #tpu.dot_dimension_numbers<[1], [0], [0], [1], [0, 0, 1, 1], [], []>} : vector<16x32xbf16>, vector<32x64xbf16>, vector<16x64xf32> -> vector<16x64xf32>
    %c0_205 = arith.constant 0 : index
    %c0_206 = arith.constant 0 : index
    %c0_207 = arith.constant 0 : index
    %262 = vector.load %arg9[%c0_205, %c0_206, %c0_207] : memref<2x1x64xf32, #tpu.memory_space<vmem>>, vector<1x1x64xf32>
    %263 = vector.shape_cast %262 : vector<1x1x64xf32> to vector<1x64xf32>
    %264 = vector.broadcast %263 : vector<1x64xf32> to vector<16x64xf32>
    %265 = arith.addf %261, %264 : vector<16x64xf32>
    %cst_208 = arith.constant 5.000000e-01 : f32
    %266 = vector.broadcast %cst_208 : f32 to vector<16x64xf32>
    %267 = arith.mulf %266, %265 : vector<16x64xf32>
    %cst_209 = arith.constant 4.471500e-02 : f32
    %268 = vector.broadcast %cst_209 : f32 to vector<16x64xf32>
    %269 = arith.mulf %268, %265 : vector<16x64xf32>
    %270 = arith.mulf %269, %265 : vector<16x64xf32>
    %271 = arith.mulf %270, %265 : vector<16x64xf32>
    %272 = arith.addf %265, %271 : vector<16x64xf32>
    %cst_210 = arith.constant 0.797884583 : f32
    %273 = vector.broadcast %cst_210 : f32 to vector<16x64xf32>
    %274 = arith.mulf %273, %272 : vector<16x64xf32>
    %275 = math.tanh %274 : vector<16x64xf32>
    %cst_211 = arith.constant 1.000000e+00 : f32
    %276 = vector.broadcast %cst_211 : f32 to vector<16x64xf32>
    %277 = arith.addf %276, %275 : vector<16x64xf32>
    %278 = arith.mulf %267, %277 : vector<16x64xf32>
    %279 = arith.truncf %278 : vector<16x64xf32> to vector<16x64xbf16>
    %c0_212 = arith.constant 0 : index
    %c0_213 = arith.constant 0 : index
    %c0_214 = arith.constant 0 : index
    %280 = vector.load %arg10[%c0_212, %c0_213, %c0_214] : memref<2x64x32xbf16, #tpu.memory_space<vmem>>, vector<1x64x32xbf16>
    %281 = vector.shape_cast %280 : vector<1x64x32xbf16> to vector<64x32xbf16>
    %cst_215 = arith.constant dense<0.000000e+00> : vector<16x32xf32>
    %282 = tpu.matmul %279, %281, %cst_215 {dimension_numbers = #tpu.dot_dimension_numbers<[1], [0], [0], [1], [0, 0, 1, 1], [], []>} : vector<16x64xbf16>, vector<64x32xbf16>, vector<16x32xf32> -> vector<16x32xf32>
    %c0_216 = arith.constant 0 : index
    %c0_217 = arith.constant 0 : index
    %c0_218 = arith.constant 0 : index
    %283 = vector.load %arg11[%c0_216, %c0_217, %c0_218] : memref<2x1x32xf32, #tpu.memory_space<vmem>>, vector<1x1x32xf32>
    %284 = vector.shape_cast %283 : vector<1x1x32xf32> to vector<1x32xf32>
    %285 = vector.broadcast %284 : vector<1x32xf32> to vector<16x32xf32>
    %286 = arith.addf %282, %285 : vector<16x32xf32>
    %287 = arith.addf %257, %286 : vector<16x32xf32>
    %c0_219 = arith.constant 0 : index
    %c0_220 = arith.constant 0 : index
    %c0_221 = arith.constant 0 : index
    %c0_222 = arith.constant 0 : index
    %288 = vector.load %arg12[%c0_219, %c0_220, %c0_221, %c0_222] : memref<2x2x1x32xf32, #tpu.memory_space<vmem>>, vector<1x1x1x32xf32>
    %289 = vector.shape_cast %288 : vector<1x1x1x32xf32> to vector<1x32xf32>
    %c0_223 = arith.constant 0 : index
    %c1_224 = arith.constant 1 : index
    %c0_225 = arith.constant 0 : index
    %c0_226 = arith.constant 0 : index
    %290 = vector.load %arg12[%c0_223, %c1_224, %c0_225, %c0_226] : memref<2x2x1x32xf32, #tpu.memory_space<vmem>>, vector<1x1x1x32xf32>
    %291 = vector.shape_cast %290 : vector<1x1x1x32xf32> to vector<1x32xf32>
    %cst_227 = arith.constant dense<0.000000e+00> : vector<16xf32>
    %292 = vector.multi_reduction <add>, %287, %cst_227 [1] : vector<16x32xf32> to vector<16xf32>
    %293 = vector.shape_cast %292 : vector<16xf32> to vector<16x1xf32>
    %cst_228 = arith.constant 3.200000e+01 : f32
    %294 = vector.broadcast %cst_228 : f32 to vector<16x1xf32>
    %295 = arith.divf %293, %294 : vector<16x1xf32>
    %296 = vector.broadcast %295 : vector<16x1xf32> to vector<16x32xf32>
    %297 = arith.subf %287, %296 : vector<16x32xf32>
    %298 = arith.mulf %297, %297 : vector<16x32xf32>
    %cst_229 = arith.constant dense<0.000000e+00> : vector<16xf32>
    %299 = vector.multi_reduction <add>, %298, %cst_229 [1] : vector<16x32xf32> to vector<16xf32>
    %300 = vector.shape_cast %299 : vector<16xf32> to vector<16x1xf32>
    %cst_230 = arith.constant 3.200000e+01 : f32
    %301 = vector.broadcast %cst_230 : f32 to vector<16x1xf32>
    %302 = arith.divf %300, %301 : vector<16x1xf32>
    %303 = vector.broadcast %295 : vector<16x1xf32> to vector<16x32xf32>
    %304 = arith.subf %287, %303 : vector<16x32xf32>
    %cst_231 = arith.constant 9.99999996E-13 : f32
    %305 = vector.broadcast %cst_231 : f32 to vector<16x1xf32>
    %306 = arith.addf %302, %305 : vector<16x1xf32>
    %307 = math.rsqrt %306 : vector<16x1xf32>
    %308 = vector.broadcast %307 : vector<16x1xf32> to vector<16x32xf32>
    %309 = arith.mulf %304, %308 : vector<16x32xf32>
    %310 = vector.broadcast %289 : vector<1x32xf32> to vector<16x32xf32>
    %311 = arith.mulf %309, %310 : vector<16x32xf32>
    %312 = vector.broadcast %291 : vector<1x32xf32> to vector<16x32xf32>
    %313 = arith.addf %311, %312 : vector<16x32xf32>
    %314 = arith.truncf %313 : vector<16x32xf32> to vector<16x32xbf16>
    %cst_232 = arith.constant 0.000000e+00 : f32
    %315 = vector.broadcast %cst_232 : f32 to vector<16x32xf32>
    %c1_233 = arith.constant 1 : index
    %c0_234 = arith.constant 0 : index
    %c0_235 = arith.constant 0 : index
    %c0_236 = arith.constant 0 : index
    %c0_237 = arith.constant 0 : index
    %316 = vector.load %arg3[%c1_233, %c0_234, %c0_235, %c0_236, %c0_237] : memref<2x3x4x32x8xbf16, #tpu.memory_space<vmem>>, vector<1x1x1x32x8xbf16>
    %317 = vector.shape_cast %316 : vector<1x1x1x32x8xbf16> to vector<32x8xbf16>
    %cst_238 = arith.constant dense<0.000000e+00> : vector<16x8xf32>
    %318 = tpu.matmul %314, %317, %cst_238 {dimension_numbers = #tpu.dot_dimension_numbers<[1], [0], [0], [1], [0, 0, 1, 1], [], []>} : vector<16x32xbf16>, vector<32x8xbf16>, vector<16x8xf32> -> vector<16x8xf32>
    %c1_239 = arith.constant 1 : index
    %c0_240 = arith.constant 0 : index
    %c0_241 = arith.constant 0 : index
    %c0_242 = arith.constant 0 : index
    %c0_243 = arith.constant 0 : index
    %319 = vector.load %arg4[%c1_239, %c0_240, %c0_241, %c0_242, %c0_243] : memref<2x3x4x1x8xf32, #tpu.memory_space<vmem>>, vector<1x1x1x1x8xf32>
    %320 = vector.shape_cast %319 : vector<1x1x1x1x8xf32> to vector<1x8xf32>
    %321 = vector.broadcast %320 : vector<1x8xf32> to vector<16x8xf32>
    %322 = arith.addf %318, %321 : vector<16x8xf32>
    %c1_244 = arith.constant 1 : index
    %c1_245 = arith.constant 1 : index
    %c0_246 = arith.constant 0 : index
    %c0_247 = arith.constant 0 : index
    %c0_248 = arith.constant 0 : index
    %323 = vector.load %arg3[%c1_244, %c1_245, %c0_246, %c0_247, %c0_248] : memref<2x3x4x32x8xbf16, #tpu.memory_space<vmem>>, vector<1x1x1x32x8xbf16>
    %324 = vector.shape_cast %323 : vector<1x1x1x32x8xbf16> to vector<32x8xbf16>
    %cst_249 = arith.constant dense<0.000000e+00> : vector<16x8xf32>
    %325 = tpu.matmul %314, %324, %cst_249 {dimension_numbers = #tpu.dot_dimension_numbers<[1], [0], [0], [1], [0, 0, 1, 1], [], []>} : vector<16x32xbf16>, vector<32x8xbf16>, vector<16x8xf32> -> vector<16x8xf32>
    %c1_250 = arith.constant 1 : index
    %c1_251 = arith.constant 1 : index
    %c0_252 = arith.constant 0 : index
    %c0_253 = arith.constant 0 : index
    %c0_254 = arith.constant 0 : index
    %326 = vector.load %arg4[%c1_250, %c1_251, %c0_252, %c0_253, %c0_254] : memref<2x3x4x1x8xf32, #tpu.memory_space<vmem>>, vector<1x1x1x1x8xf32>
    %327 = vector.shape_cast %326 : vector<1x1x1x1x8xf32> to vector<1x8xf32>
    %328 = vector.broadcast %327 : vector<1x8xf32> to vector<16x8xf32>
    %329 = arith.addf %325, %328 : vector<16x8xf32>
    %c1_255 = arith.constant 1 : index
    %c2_256 = arith.constant 2 : index
    %c0_257 = arith.constant 0 : index
    %c0_258 = arith.constant 0 : index
    %c0_259 = arith.constant 0 : index
    %330 = vector.load %arg3[%c1_255, %c2_256, %c0_257, %c0_258, %c0_259] : memref<2x3x4x32x8xbf16, #tpu.memory_space<vmem>>, vector<1x1x1x32x8xbf16>
    %331 = vector.shape_cast %330 : vector<1x1x1x32x8xbf16> to vector<32x8xbf16>
    %cst_260 = arith.constant dense<0.000000e+00> : vector<16x8xf32>
    %332 = tpu.matmul %314, %331, %cst_260 {dimension_numbers = #tpu.dot_dimension_numbers<[1], [0], [0], [1], [0, 0, 1, 1], [], []>} : vector<16x32xbf16>, vector<32x8xbf16>, vector<16x8xf32> -> vector<16x8xf32>
    %c1_261 = arith.constant 1 : index
    %c2_262 = arith.constant 2 : index
    %c0_263 = arith.constant 0 : index
    %c0_264 = arith.constant 0 : index
    %c0_265 = arith.constant 0 : index
    %333 = vector.load %arg4[%c1_261, %c2_262, %c0_263, %c0_264, %c0_265] : memref<2x3x4x1x8xf32, #tpu.memory_space<vmem>>, vector<1x1x1x1x8xf32>
    %334 = vector.shape_cast %333 : vector<1x1x1x1x8xf32> to vector<1x8xf32>
    %335 = vector.broadcast %334 : vector<1x8xf32> to vector<16x8xf32>
    %336 = arith.addf %332, %335 : vector<16x8xf32>
    %337 = vector.shape_cast %322 : vector<16x8xf32> to vector<2x8x8xf32>
    %338 = arith.truncf %337 : vector<2x8x8xf32> to vector<2x8x8xbf16>
    %339 = vector.shape_cast %329 : vector<16x8xf32> to vector<2x8x8xf32>
    %340 = arith.truncf %339 : vector<2x8x8xf32> to vector<2x8x8xbf16>
    %341 = vector.shape_cast %336 : vector<16x8xf32> to vector<2x8x8xf32>
    %342 = arith.truncf %341 : vector<2x8x8xf32> to vector<2x8x8xbf16>
    "tpu.trace_start"() <{level = 10 : i32, message = "bqd,bkd->bqk"}> : () -> ()
    %cst_266 = arith.constant dense<0.000000e+00> : vector<2x8x8xf32>
    %343 = tpu.matmul %338, %340, %cst_266 {dimension_numbers = #tpu.dot_dimension_numbers<[2], [2], [1], [1], [0, 0, 0, 1, 1, 1], [0], [0]>} : vector<2x8x8xbf16>, vector<2x8x8xbf16>, vector<2x8x8xf32> -> vector<2x8x8xf32>
    "tpu.trace_stop"() : () -> ()
    %cst_267 = arith.constant 0.353553385 : f32
    %344 = vector.broadcast %cst_267 : f32 to vector<2x8x8xf32>
    %345 = arith.mulf %343, %344 : vector<2x8x8xf32>
    %346 = arith.addf %345, %28 : vector<2x8x8xf32>
    %cst_268 = arith.constant dense<0xFF800000> : vector<2x8xf32>
    %347 = vector.multi_reduction <maximumf>, %346, %cst_268 [2] : vector<2x8x8xf32> to vector<2x8xf32>
    %348 = vector.shape_cast %347 : vector<2x8xf32> to vector<2x8x1xf32>
    %349 = vector.broadcast %348 : vector<2x8x1xf32> to vector<2x8x8xf32>
    %350 = arith.subf %346, %349 : vector<2x8x8xf32>
    %351 = math.exp %350 : vector<2x8x8xf32>
    %cst_269 = arith.constant dense<0.000000e+00> : vector<2x8xf32>
    %352 = vector.multi_reduction <add>, %351, %cst_269 [2] : vector<2x8x8xf32> to vector<2x8xf32>
    %353 = vector.shape_cast %352 : vector<2x8xf32> to vector<2x8x1xf32>
    %354 = tpu.reciprocal %353 {approx = true} : vector<2x8x1xf32> -> vector<2x8x1xf32>
    %355 = vector.broadcast %354 : vector<2x8x1xf32> to vector<2x8x8xf32>
    %356 = arith.mulf %351, %355 : vector<2x8x8xf32>
    %357 = arith.truncf %356 : vector<2x8x8xf32> to vector<2x8x8xbf16>
    "tpu.trace_start"() <{level = 10 : i32, message = "bqk,bkd->bqd"}> : () -> ()
    %cst_270 = arith.constant dense<0.000000e+00> : vector<2x8x8xf32>
    %358 = tpu.matmul %357, %342, %cst_270 {dimension_numbers = #tpu.dot_dimension_numbers<[2], [1], [1], [2], [0, 0, 0, 1, 1, 2], [0], [0]>} : vector<2x8x8xbf16>, vector<2x8x8xbf16>, vector<2x8x8xf32> -> vector<2x8x8xf32>
    "tpu.trace_stop"() : () -> ()
    %359 = vector.shape_cast %358 : vector<2x8x8xf32> to vector<16x8xf32>
    %360 = arith.truncf %359 : vector<16x8xf32> to vector<16x8xbf16>
    %c1_271 = arith.constant 1 : index
    %c0_272 = arith.constant 0 : index
    %c0_273 = arith.constant 0 : index
    %c0_274 = arith.constant 0 : index
    %361 = vector.load %arg5[%c1_271, %c0_272, %c0_273, %c0_274] : memref<2x4x8x32xbf16, #tpu.memory_space<vmem>>, vector<1x1x8x32xbf16>
    %362 = vector.shape_cast %361 : vector<1x1x8x32xbf16> to vector<8x32xbf16>
    %cst_275 = arith.constant dense<0.000000e+00> : vector<16x32xf32>
    %363 = tpu.matmul %360, %362, %cst_275 {dimension_numbers = #tpu.dot_dimension_numbers<[1], [0], [0], [1], [0, 0, 1, 1], [], []>} : vector<16x8xbf16>, vector<8x32xbf16>, vector<16x32xf32> -> vector<16x32xf32>
    %364 = arith.addf %315, %363 : vector<16x32xf32>
    %c1_276 = arith.constant 1 : index
    %c0_277 = arith.constant 0 : index
    %c1_278 = arith.constant 1 : index
    %c0_279 = arith.constant 0 : index
    %c0_280 = arith.constant 0 : index
    %365 = vector.load %arg3[%c1_276, %c0_277, %c1_278, %c0_279, %c0_280] : memref<2x3x4x32x8xbf16, #tpu.memory_space<vmem>>, vector<1x1x1x32x8xbf16>
    %366 = vector.shape_cast %365 : vector<1x1x1x32x8xbf16> to vector<32x8xbf16>
    %cst_281 = arith.constant dense<0.000000e+00> : vector<16x8xf32>
    %367 = tpu.matmul %314, %366, %cst_281 {dimension_numbers = #tpu.dot_dimension_numbers<[1], [0], [0], [1], [0, 0, 1, 1], [], []>} : vector<16x32xbf16>, vector<32x8xbf16>, vector<16x8xf32> -> vector<16x8xf32>
    %c1_282 = arith.constant 1 : index
    %c0_283 = arith.constant 0 : index
    %c1_284 = arith.constant 1 : index
    %c0_285 = arith.constant 0 : index
    %c0_286 = arith.constant 0 : index
    %368 = vector.load %arg4[%c1_282, %c0_283, %c1_284, %c0_285, %c0_286] : memref<2x3x4x1x8xf32, #tpu.memory_space<vmem>>, vector<1x1x1x1x8xf32>
    %369 = vector.shape_cast %368 : vector<1x1x1x1x8xf32> to vector<1x8xf32>
    %370 = vector.broadcast %369 : vector<1x8xf32> to vector<16x8xf32>
    %371 = arith.addf %367, %370 : vector<16x8xf32>
    %c1_287 = arith.constant 1 : index
    %c1_288 = arith.constant 1 : index
    %c1_289 = arith.constant 1 : index
    %c0_290 = arith.constant 0 : index
    %c0_291 = arith.constant 0 : index
    %372 = vector.load %arg3[%c1_287, %c1_288, %c1_289, %c0_290, %c0_291] : memref<2x3x4x32x8xbf16, #tpu.memory_space<vmem>>, vector<1x1x1x32x8xbf16>
    %373 = vector.shape_cast %372 : vector<1x1x1x32x8xbf16> to vector<32x8xbf16>
    %cst_292 = arith.constant dense<0.000000e+00> : vector<16x8xf32>
    %374 = tpu.matmul %314, %373, %cst_292 {dimension_numbers = #tpu.dot_dimension_numbers<[1], [0], [0], [1], [0, 0, 1, 1], [], []>} : vector<16x32xbf16>, vector<32x8xbf16>, vector<16x8xf32> -> vector<16x8xf32>
    %c1_293 = arith.constant 1 : index
    %c1_294 = arith.constant 1 : index
    %c1_295 = arith.constant 1 : index
    %c0_296 = arith.constant 0 : index
    %c0_297 = arith.constant 0 : index
    %375 = vector.load %arg4[%c1_293, %c1_294, %c1_295, %c0_296, %c0_297] : memref<2x3x4x1x8xf32, #tpu.memory_space<vmem>>, vector<1x1x1x1x8xf32>
    %376 = vector.shape_cast %375 : vector<1x1x1x1x8xf32> to vector<1x8xf32>
    %377 = vector.broadcast %376 : vector<1x8xf32> to vector<16x8xf32>
    %378 = arith.addf %374, %377 : vector<16x8xf32>
    %c1_298 = arith.constant 1 : index
    %c2_299 = arith.constant 2 : index
    %c1_300 = arith.constant 1 : index
    %c0_301 = arith.constant 0 : index
    %c0_302 = arith.constant 0 : index
    %379 = vector.load %arg3[%c1_298, %c2_299, %c1_300, %c0_301, %c0_302] : memref<2x3x4x32x8xbf16, #tpu.memory_space<vmem>>, vector<1x1x1x32x8xbf16>
    %380 = vector.shape_cast %379 : vector<1x1x1x32x8xbf16> to vector<32x8xbf16>
    %cst_303 = arith.constant dense<0.000000e+00> : vector<16x8xf32>
    %381 = tpu.matmul %314, %380, %cst_303 {dimension_numbers = #tpu.dot_dimension_numbers<[1], [0], [0], [1], [0, 0, 1, 1], [], []>} : vector<16x32xbf16>, vector<32x8xbf16>, vector<16x8xf32> -> vector<16x8xf32>
    %c1_304 = arith.constant 1 : index
    %c2_305 = arith.constant 2 : index
    %c1_306 = arith.constant 1 : index
    %c0_307 = arith.constant 0 : index
    %c0_308 = arith.constant 0 : index
    %382 = vector.load %arg4[%c1_304, %c2_305, %c1_306, %c0_307, %c0_308] : memref<2x3x4x1x8xf32, #tpu.memory_space<vmem>>, vector<1x1x1x1x8xf32>
    %383 = vector.shape_cast %382 : vector<1x1x1x1x8xf32> to vector<1x8xf32>
    %384 = vector.broadcast %383 : vector<1x8xf32> to vector<16x8xf32>
    %385 = arith.addf %381, %384 : vector<16x8xf32>
    %386 = vector.shape_cast %371 : vector<16x8xf32> to vector<2x8x8xf32>
    %387 = arith.truncf %386 : vector<2x8x8xf32> to vector<2x8x8xbf16>
    %388 = vector.shape_cast %378 : vector<16x8xf32> to vector<2x8x8xf32>
    %389 = arith.truncf %388 : vector<2x8x8xf32> to vector<2x8x8xbf16>
    %390 = vector.shape_cast %385 : vector<16x8xf32> to vector<2x8x8xf32>
    %391 = arith.truncf %390 : vector<2x8x8xf32> to vector<2x8x8xbf16>
    "tpu.trace_start"() <{level = 10 : i32, message = "bqd,bkd->bqk"}> : () -> ()
    %cst_309 = arith.constant dense<0.000000e+00> : vector<2x8x8xf32>
    %392 = tpu.matmul %387, %389, %cst_309 {dimension_numbers = #tpu.dot_dimension_numbers<[2], [2], [1], [1], [0, 0, 0, 1, 1, 1], [0], [0]>} : vector<2x8x8xbf16>, vector<2x8x8xbf16>, vector<2x8x8xf32> -> vector<2x8x8xf32>
    "tpu.trace_stop"() : () -> ()
    %cst_310 = arith.constant 0.353553385 : f32
    %393 = vector.broadcast %cst_310 : f32 to vector<2x8x8xf32>
    %394 = arith.mulf %392, %393 : vector<2x8x8xf32>
    %395 = arith.addf %394, %28 : vector<2x8x8xf32>
    %cst_311 = arith.constant dense<0xFF800000> : vector<2x8xf32>
    %396 = vector.multi_reduction <maximumf>, %395, %cst_311 [2] : vector<2x8x8xf32> to vector<2x8xf32>
    %397 = vector.shape_cast %396 : vector<2x8xf32> to vector<2x8x1xf32>
    %398 = vector.broadcast %397 : vector<2x8x1xf32> to vector<2x8x8xf32>
    %399 = arith.subf %395, %398 : vector<2x8x8xf32>
    %400 = math.exp %399 : vector<2x8x8xf32>
    %cst_312 = arith.constant dense<0.000000e+00> : vector<2x8xf32>
    %401 = vector.multi_reduction <add>, %400, %cst_312 [2] : vector<2x8x8xf32> to vector<2x8xf32>
    %402 = vector.shape_cast %401 : vector<2x8xf32> to vector<2x8x1xf32>
    %403 = tpu.reciprocal %402 {approx = true} : vector<2x8x1xf32> -> vector<2x8x1xf32>
    %404 = vector.broadcast %403 : vector<2x8x1xf32> to vector<2x8x8xf32>
    %405 = arith.mulf %400, %404 : vector<2x8x8xf32>
    %406 = arith.truncf %405 : vector<2x8x8xf32> to vector<2x8x8xbf16>
    "tpu.trace_start"() <{level = 10 : i32, message = "bqk,bkd->bqd"}> : () -> ()
    %cst_313 = arith.constant dense<0.000000e+00> : vector<2x8x8xf32>
    %407 = tpu.matmul %406, %391, %cst_313 {dimension_numbers = #tpu.dot_dimension_numbers<[2], [1], [1], [2], [0, 0, 0, 1, 1, 2], [0], [0]>} : vector<2x8x8xbf16>, vector<2x8x8xbf16>, vector<2x8x8xf32> -> vector<2x8x8xf32>
    "tpu.trace_stop"() : () -> ()
    %408 = vector.shape_cast %407 : vector<2x8x8xf32> to vector<16x8xf32>
    %409 = arith.truncf %408 : vector<16x8xf32> to vector<16x8xbf16>
    %c1_314 = arith.constant 1 : index
    %c1_315 = arith.constant 1 : index
    %c0_316 = arith.constant 0 : index
    %c0_317 = arith.constant 0 : index
    %410 = vector.load %arg5[%c1_314, %c1_315, %c0_316, %c0_317] : memref<2x4x8x32xbf16, #tpu.memory_space<vmem>>, vector<1x1x8x32xbf16>
    %411 = vector.shape_cast %410 : vector<1x1x8x32xbf16> to vector<8x32xbf16>
    %cst_318 = arith.constant dense<0.000000e+00> : vector<16x32xf32>
    %412 = tpu.matmul %409, %411, %cst_318 {dimension_numbers = #tpu.dot_dimension_numbers<[1], [0], [0], [1], [0, 0, 1, 1], [], []>} : vector<16x8xbf16>, vector<8x32xbf16>, vector<16x32xf32> -> vector<16x32xf32>
    %413 = arith.addf %364, %412 : vector<16x32xf32>
    %c1_319 = arith.constant 1 : index
    %c0_320 = arith.constant 0 : index
    %c2_321 = arith.constant 2 : index
    %c0_322 = arith.constant 0 : index
    %c0_323 = arith.constant 0 : index
    %414 = vector.load %arg3[%c1_319, %c0_320, %c2_321, %c0_322, %c0_323] : memref<2x3x4x32x8xbf16, #tpu.memory_space<vmem>>, vector<1x1x1x32x8xbf16>
    %415 = vector.shape_cast %414 : vector<1x1x1x32x8xbf16> to vector<32x8xbf16>
    %cst_324 = arith.constant dense<0.000000e+00> : vector<16x8xf32>
    %416 = tpu.matmul %314, %415, %cst_324 {dimension_numbers = #tpu.dot_dimension_numbers<[1], [0], [0], [1], [0, 0, 1, 1], [], []>} : vector<16x32xbf16>, vector<32x8xbf16>, vector<16x8xf32> -> vector<16x8xf32>
    %c1_325 = arith.constant 1 : index
    %c0_326 = arith.constant 0 : index
    %c2_327 = arith.constant 2 : index
    %c0_328 = arith.constant 0 : index
    %c0_329 = arith.constant 0 : index
    %417 = vector.load %arg4[%c1_325, %c0_326, %c2_327, %c0_328, %c0_329] : memref<2x3x4x1x8xf32, #tpu.memory_space<vmem>>, vector<1x1x1x1x8xf32>
    %418 = vector.shape_cast %417 : vector<1x1x1x1x8xf32> to vector<1x8xf32>
    %419 = vector.broadcast %418 : vector<1x8xf32> to vector<16x8xf32>
    %420 = arith.addf %416, %419 : vector<16x8xf32>
    %c1_330 = arith.constant 1 : index
    %c1_331 = arith.constant 1 : index
    %c2_332 = arith.constant 2 : index
    %c0_333 = arith.constant 0 : index
    %c0_334 = arith.constant 0 : index
    %421 = vector.load %arg3[%c1_330, %c1_331, %c2_332, %c0_333, %c0_334] : memref<2x3x4x32x8xbf16, #tpu.memory_space<vmem>>, vector<1x1x1x32x8xbf16>
    %422 = vector.shape_cast %421 : vector<1x1x1x32x8xbf16> to vector<32x8xbf16>
    %cst_335 = arith.constant dense<0.000000e+00> : vector<16x8xf32>
    %423 = tpu.matmul %314, %422, %cst_335 {dimension_numbers = #tpu.dot_dimension_numbers<[1], [0], [0], [1], [0, 0, 1, 1], [], []>} : vector<16x32xbf16>, vector<32x8xbf16>, vector<16x8xf32> -> vector<16x8xf32>
    %c1_336 = arith.constant 1 : index
    %c1_337 = arith.constant 1 : index
    %c2_338 = arith.constant 2 : index
    %c0_339 = arith.constant 0 : index
    %c0_340 = arith.constant 0 : index
    %424 = vector.load %arg4[%c1_336, %c1_337, %c2_338, %c0_339, %c0_340] : memref<2x3x4x1x8xf32, #tpu.memory_space<vmem>>, vector<1x1x1x1x8xf32>
    %425 = vector.shape_cast %424 : vector<1x1x1x1x8xf32> to vector<1x8xf32>
    %426 = vector.broadcast %425 : vector<1x8xf32> to vector<16x8xf32>
    %427 = arith.addf %423, %426 : vector<16x8xf32>
    %c1_341 = arith.constant 1 : index
    %c2_342 = arith.constant 2 : index
    %c2_343 = arith.constant 2 : index
    %c0_344 = arith.constant 0 : index
    %c0_345 = arith.constant 0 : index
    %428 = vector.load %arg3[%c1_341, %c2_342, %c2_343, %c0_344, %c0_345] : memref<2x3x4x32x8xbf16, #tpu.memory_space<vmem>>, vector<1x1x1x32x8xbf16>
    %429 = vector.shape_cast %428 : vector<1x1x1x32x8xbf16> to vector<32x8xbf16>
    %cst_346 = arith.constant dense<0.000000e+00> : vector<16x8xf32>
    %430 = tpu.matmul %314, %429, %cst_346 {dimension_numbers = #tpu.dot_dimension_numbers<[1], [0], [0], [1], [0, 0, 1, 1], [], []>} : vector<16x32xbf16>, vector<32x8xbf16>, vector<16x8xf32> -> vector<16x8xf32>
    %c1_347 = arith.constant 1 : index
    %c2_348 = arith.constant 2 : index
    %c2_349 = arith.constant 2 : index
    %c0_350 = arith.constant 0 : index
    %c0_351 = arith.constant 0 : index
    %431 = vector.load %arg4[%c1_347, %c2_348, %c2_349, %c0_350, %c0_351] : memref<2x3x4x1x8xf32, #tpu.memory_space<vmem>>, vector<1x1x1x1x8xf32>
    %432 = vector.shape_cast %431 : vector<1x1x1x1x8xf32> to vector<1x8xf32>
    %433 = vector.broadcast %432 : vector<1x8xf32> to vector<16x8xf32>
    %434 = arith.addf %430, %433 : vector<16x8xf32>
    %435 = vector.shape_cast %420 : vector<16x8xf32> to vector<2x8x8xf32>
    %436 = arith.truncf %435 : vector<2x8x8xf32> to vector<2x8x8xbf16>
    %437 = vector.shape_cast %427 : vector<16x8xf32> to vector<2x8x8xf32>
    %438 = arith.truncf %437 : vector<2x8x8xf32> to vector<2x8x8xbf16>
    %439 = vector.shape_cast %434 : vector<16x8xf32> to vector<2x8x8xf32>
    %440 = arith.truncf %439 : vector<2x8x8xf32> to vector<2x8x8xbf16>
    "tpu.trace_start"() <{level = 10 : i32, message = "bqd,bkd->bqk"}> : () -> ()
    %cst_352 = arith.constant dense<0.000000e+00> : vector<2x8x8xf32>
    %441 = tpu.matmul %436, %438, %cst_352 {dimension_numbers = #tpu.dot_dimension_numbers<[2], [2], [1], [1], [0, 0, 0, 1, 1, 1], [0], [0]>} : vector<2x8x8xbf16>, vector<2x8x8xbf16>, vector<2x8x8xf32> -> vector<2x8x8xf32>
    "tpu.trace_stop"() : () -> ()
    %cst_353 = arith.constant 0.353553385 : f32
    %442 = vector.broadcast %cst_353 : f32 to vector<2x8x8xf32>
    %443 = arith.mulf %441, %442 : vector<2x8x8xf32>
    %444 = arith.addf %443, %28 : vector<2x8x8xf32>
    %cst_354 = arith.constant dense<0xFF800000> : vector<2x8xf32>
    %445 = vector.multi_reduction <maximumf>, %444, %cst_354 [2] : vector<2x8x8xf32> to vector<2x8xf32>
    %446 = vector.shape_cast %445 : vector<2x8xf32> to vector<2x8x1xf32>
    %447 = vector.broadcast %446 : vector<2x8x1xf32> to vector<2x8x8xf32>
    %448 = arith.subf %444, %447 : vector<2x8x8xf32>
    %449 = math.exp %448 : vector<2x8x8xf32>
    %cst_355 = arith.constant dense<0.000000e+00> : vector<2x8xf32>
    %450 = vector.multi_reduction <add>, %449, %cst_355 [2] : vector<2x8x8xf32> to vector<2x8xf32>
    %451 = vector.shape_cast %450 : vector<2x8xf32> to vector<2x8x1xf32>
    %452 = tpu.reciprocal %451 {approx = true} : vector<2x8x1xf32> -> vector<2x8x1xf32>
    %453 = vector.broadcast %452 : vector<2x8x1xf32> to vector<2x8x8xf32>
    %454 = arith.mulf %449, %453 : vector<2x8x8xf32>
    %455 = arith.truncf %454 : vector<2x8x8xf32> to vector<2x8x8xbf16>
    "tpu.trace_start"() <{level = 10 : i32, message = "bqk,bkd->bqd"}> : () -> ()
    %cst_356 = arith.constant dense<0.000000e+00> : vector<2x8x8xf32>
    %456 = tpu.matmul %455, %440, %cst_356 {dimension_numbers = #tpu.dot_dimension_numbers<[2], [1], [1], [2], [0, 0, 0, 1, 1, 2], [0], [0]>} : vector<2x8x8xbf16>, vector<2x8x8xbf16>, vector<2x8x8xf32> -> vector<2x8x8xf32>
    "tpu.trace_stop"() : () -> ()
    %457 = vector.shape_cast %456 : vector<2x8x8xf32> to vector<16x8xf32>
    %458 = arith.truncf %457 : vector<16x8xf32> to vector<16x8xbf16>
    %c1_357 = arith.constant 1 : index
    %c2_358 = arith.constant 2 : index
    %c0_359 = arith.constant 0 : index
    %c0_360 = arith.constant 0 : index
    %459 = vector.load %arg5[%c1_357, %c2_358, %c0_359, %c0_360] : memref<2x4x8x32xbf16, #tpu.memory_space<vmem>>, vector<1x1x8x32xbf16>
    %460 = vector.shape_cast %459 : vector<1x1x8x32xbf16> to vector<8x32xbf16>
    %cst_361 = arith.constant dense<0.000000e+00> : vector<16x32xf32>
    %461 = tpu.matmul %458, %460, %cst_361 {dimension_numbers = #tpu.dot_dimension_numbers<[1], [0], [0], [1], [0, 0, 1, 1], [], []>} : vector<16x8xbf16>, vector<8x32xbf16>, vector<16x32xf32> -> vector<16x32xf32>
    %462 = arith.addf %413, %461 : vector<16x32xf32>
    %c1_362 = arith.constant 1 : index
    %c0_363 = arith.constant 0 : index
    %c3_364 = arith.constant 3 : index
    %c0_365 = arith.constant 0 : index
    %c0_366 = arith.constant 0 : index
    %463 = vector.load %arg3[%c1_362, %c0_363, %c3_364, %c0_365, %c0_366] : memref<2x3x4x32x8xbf16, #tpu.memory_space<vmem>>, vector<1x1x1x32x8xbf16>
    %464 = vector.shape_cast %463 : vector<1x1x1x32x8xbf16> to vector<32x8xbf16>
    %cst_367 = arith.constant dense<0.000000e+00> : vector<16x8xf32>
    %465 = tpu.matmul %314, %464, %cst_367 {dimension_numbers = #tpu.dot_dimension_numbers<[1], [0], [0], [1], [0, 0, 1, 1], [], []>} : vector<16x32xbf16>, vector<32x8xbf16>, vector<16x8xf32> -> vector<16x8xf32>
    %c1_368 = arith.constant 1 : index
    %c0_369 = arith.constant 0 : index
    %c3_370 = arith.constant 3 : index
    %c0_371 = arith.constant 0 : index
    %c0_372 = arith.constant 0 : index
    %466 = vector.load %arg4[%c1_368, %c0_369, %c3_370, %c0_371, %c0_372] : memref<2x3x4x1x8xf32, #tpu.memory_space<vmem>>, vector<1x1x1x1x8xf32>
    %467 = vector.shape_cast %466 : vector<1x1x1x1x8xf32> to vector<1x8xf32>
    %468 = vector.broadcast %467 : vector<1x8xf32> to vector<16x8xf32>
    %469 = arith.addf %465, %468 : vector<16x8xf32>
    %c1_373 = arith.constant 1 : index
    %c1_374 = arith.constant 1 : index
    %c3_375 = arith.constant 3 : index
    %c0_376 = arith.constant 0 : index
    %c0_377 = arith.constant 0 : index
    %470 = vector.load %arg3[%c1_373, %c1_374, %c3_375, %c0_376, %c0_377] : memref<2x3x4x32x8xbf16, #tpu.memory_space<vmem>>, vector<1x1x1x32x8xbf16>
    %471 = vector.shape_cast %470 : vector<1x1x1x32x8xbf16> to vector<32x8xbf16>
    %cst_378 = arith.constant dense<0.000000e+00> : vector<16x8xf32>
    %472 = tpu.matmul %314, %471, %cst_378 {dimension_numbers = #tpu.dot_dimension_numbers<[1], [0], [0], [1], [0, 0, 1, 1], [], []>} : vector<16x32xbf16>, vector<32x8xbf16>, vector<16x8xf32> -> vector<16x8xf32>
    %c1_379 = arith.constant 1 : index
    %c1_380 = arith.constant 1 : index
    %c3_381 = arith.constant 3 : index
    %c0_382 = arith.constant 0 : index
    %c0_383 = arith.constant 0 : index
    %473 = vector.load %arg4[%c1_379, %c1_380, %c3_381, %c0_382, %c0_383] : memref<2x3x4x1x8xf32, #tpu.memory_space<vmem>>, vector<1x1x1x1x8xf32>
    %474 = vector.shape_cast %473 : vector<1x1x1x1x8xf32> to vector<1x8xf32>
    %475 = vector.broadcast %474 : vector<1x8xf32> to vector<16x8xf32>
    %476 = arith.addf %472, %475 : vector<16x8xf32>
    %c1_384 = arith.constant 1 : index
    %c2_385 = arith.constant 2 : index
    %c3_386 = arith.constant 3 : index
    %c0_387 = arith.constant 0 : index
    %c0_388 = arith.constant 0 : index
    %477 = vector.load %arg3[%c1_384, %c2_385, %c3_386, %c0_387, %c0_388] : memref<2x3x4x32x8xbf16, #tpu.memory_space<vmem>>, vector<1x1x1x32x8xbf16>
    %478 = vector.shape_cast %477 : vector<1x1x1x32x8xbf16> to vector<32x8xbf16>
    %cst_389 = arith.constant dense<0.000000e+00> : vector<16x8xf32>
    %479 = tpu.matmul %314, %478, %cst_389 {dimension_numbers = #tpu.dot_dimension_numbers<[1], [0], [0], [1], [0, 0, 1, 1], [], []>} : vector<16x32xbf16>, vector<32x8xbf16>, vector<16x8xf32> -> vector<16x8xf32>
    %c1_390 = arith.constant 1 : index
    %c2_391 = arith.constant 2 : index
    %c3_392 = arith.constant 3 : index
    %c0_393 = arith.constant 0 : index
    %c0_394 = arith.constant 0 : index
    %480 = vector.load %arg4[%c1_390, %c2_391, %c3_392, %c0_393, %c0_394] : memref<2x3x4x1x8xf32, #tpu.memory_space<vmem>>, vector<1x1x1x1x8xf32>
    %481 = vector.shape_cast %480 : vector<1x1x1x1x8xf32> to vector<1x8xf32>
    %482 = vector.broadcast %481 : vector<1x8xf32> to vector<16x8xf32>
    %483 = arith.addf %479, %482 : vector<16x8xf32>
    %484 = vector.shape_cast %469 : vector<16x8xf32> to vector<2x8x8xf32>
    %485 = arith.truncf %484 : vector<2x8x8xf32> to vector<2x8x8xbf16>
    %486 = vector.shape_cast %476 : vector<16x8xf32> to vector<2x8x8xf32>
    %487 = arith.truncf %486 : vector<2x8x8xf32> to vector<2x8x8xbf16>
    %488 = vector.shape_cast %483 : vector<16x8xf32> to vector<2x8x8xf32>
    %489 = arith.truncf %488 : vector<2x8x8xf32> to vector<2x8x8xbf16>
    "tpu.trace_start"() <{level = 10 : i32, message = "bqd,bkd->bqk"}> : () -> ()
    %cst_395 = arith.constant dense<0.000000e+00> : vector<2x8x8xf32>
    %490 = tpu.matmul %485, %487, %cst_395 {dimension_numbers = #tpu.dot_dimension_numbers<[2], [2], [1], [1], [0, 0, 0, 1, 1, 1], [0], [0]>} : vector<2x8x8xbf16>, vector<2x8x8xbf16>, vector<2x8x8xf32> -> vector<2x8x8xf32>
    "tpu.trace_stop"() : () -> ()
    %cst_396 = arith.constant 0.353553385 : f32
    %491 = vector.broadcast %cst_396 : f32 to vector<2x8x8xf32>
    %492 = arith.mulf %490, %491 : vector<2x8x8xf32>
    %493 = arith.addf %492, %28 : vector<2x8x8xf32>
    %cst_397 = arith.constant dense<0xFF800000> : vector<2x8xf32>
    %494 = vector.multi_reduction <maximumf>, %493, %cst_397 [2] : vector<2x8x8xf32> to vector<2x8xf32>
    %495 = vector.shape_cast %494 : vector<2x8xf32> to vector<2x8x1xf32>
    %496 = vector.broadcast %495 : vector<2x8x1xf32> to vector<2x8x8xf32>
    %497 = arith.subf %493, %496 : vector<2x8x8xf32>
    %498 = math.exp %497 : vector<2x8x8xf32>
    %cst_398 = arith.constant dense<0.000000e+00> : vector<2x8xf32>
    %499 = vector.multi_reduction <add>, %498, %cst_398 [2] : vector<2x8x8xf32> to vector<2x8xf32>
    %500 = vector.shape_cast %499 : vector<2x8xf32> to vector<2x8x1xf32>
    %501 = tpu.reciprocal %500 {approx = true} : vector<2x8x1xf32> -> vector<2x8x1xf32>
    %502 = vector.broadcast %501 : vector<2x8x1xf32> to vector<2x8x8xf32>
    %503 = arith.mulf %498, %502 : vector<2x8x8xf32>
    %504 = arith.truncf %503 : vector<2x8x8xf32> to vector<2x8x8xbf16>
    "tpu.trace_start"() <{level = 10 : i32, message = "bqk,bkd->bqd"}> : () -> ()
    %cst_399 = arith.constant dense<0.000000e+00> : vector<2x8x8xf32>
    %505 = tpu.matmul %504, %489, %cst_399 {dimension_numbers = #tpu.dot_dimension_numbers<[2], [1], [1], [2], [0, 0, 0, 1, 1, 2], [0], [0]>} : vector<2x8x8xbf16>, vector<2x8x8xbf16>, vector<2x8x8xf32> -> vector<2x8x8xf32>
    "tpu.trace_stop"() : () -> ()
    %506 = vector.shape_cast %505 : vector<2x8x8xf32> to vector<16x8xf32>
    %507 = arith.truncf %506 : vector<16x8xf32> to vector<16x8xbf16>
    %c1_400 = arith.constant 1 : index
    %c3_401 = arith.constant 3 : index
    %c0_402 = arith.constant 0 : index
    %c0_403 = arith.constant 0 : index
    %508 = vector.load %arg5[%c1_400, %c3_401, %c0_402, %c0_403] : memref<2x4x8x32xbf16, #tpu.memory_space<vmem>>, vector<1x1x8x32xbf16>
    %509 = vector.shape_cast %508 : vector<1x1x8x32xbf16> to vector<8x32xbf16>
    %cst_404 = arith.constant dense<0.000000e+00> : vector<16x32xf32>
    %510 = tpu.matmul %507, %509, %cst_404 {dimension_numbers = #tpu.dot_dimension_numbers<[1], [0], [0], [1], [0, 0, 1, 1], [], []>} : vector<16x8xbf16>, vector<8x32xbf16>, vector<16x32xf32> -> vector<16x32xf32>
    %511 = arith.addf %462, %510 : vector<16x32xf32>
    %512 = arith.addf %313, %511 : vector<16x32xf32>
    %c1_405 = arith.constant 1 : index
    %c0_406 = arith.constant 0 : index
    %c0_407 = arith.constant 0 : index
    %513 = vector.load %arg6[%c1_405, %c0_406, %c0_407] : memref<2x1x32xf32, #tpu.memory_space<vmem>>, vector<1x1x32xf32>
    %514 = vector.shape_cast %513 : vector<1x1x32xf32> to vector<1x32xf32>
    %515 = vector.broadcast %514 : vector<1x32xf32> to vector<16x32xf32>
    %516 = arith.addf %512, %515 : vector<16x32xf32>
    %c1_408 = arith.constant 1 : index
    %c0_409 = arith.constant 0 : index
    %c0_410 = arith.constant 0 : index
    %c0_411 = arith.constant 0 : index
    %517 = vector.load %arg7[%c1_408, %c0_409, %c0_410, %c0_411] : memref<2x2x1x32xf32, #tpu.memory_space<vmem>>, vector<1x1x1x32xf32>
    %518 = vector.shape_cast %517 : vector<1x1x1x32xf32> to vector<1x32xf32>
    %c1_412 = arith.constant 1 : index
    %c1_413 = arith.constant 1 : index
    %c0_414 = arith.constant 0 : index
    %c0_415 = arith.constant 0 : index
    %519 = vector.load %arg7[%c1_412, %c1_413, %c0_414, %c0_415] : memref<2x2x1x32xf32, #tpu.memory_space<vmem>>, vector<1x1x1x32xf32>
    %520 = vector.shape_cast %519 : vector<1x1x1x32xf32> to vector<1x32xf32>
    %cst_416 = arith.constant dense<0.000000e+00> : vector<16xf32>
    %521 = vector.multi_reduction <add>, %516, %cst_416 [1] : vector<16x32xf32> to vector<16xf32>
    %522 = vector.shape_cast %521 : vector<16xf32> to vector<16x1xf32>
    %cst_417 = arith.constant 3.200000e+01 : f32
    %523 = vector.broadcast %cst_417 : f32 to vector<16x1xf32>
    %524 = arith.divf %522, %523 : vector<16x1xf32>
    %525 = vector.broadcast %524 : vector<16x1xf32> to vector<16x32xf32>
    %526 = arith.subf %516, %525 : vector<16x32xf32>
    %527 = arith.mulf %526, %526 : vector<16x32xf32>
    %cst_418 = arith.constant dense<0.000000e+00> : vector<16xf32>
    %528 = vector.multi_reduction <add>, %527, %cst_418 [1] : vector<16x32xf32> to vector<16xf32>
    %529 = vector.shape_cast %528 : vector<16xf32> to vector<16x1xf32>
    %cst_419 = arith.constant 3.200000e+01 : f32
    %530 = vector.broadcast %cst_419 : f32 to vector<16x1xf32>
    %531 = arith.divf %529, %530 : vector<16x1xf32>
    %532 = vector.broadcast %524 : vector<16x1xf32> to vector<16x32xf32>
    %533 = arith.subf %516, %532 : vector<16x32xf32>
    %cst_420 = arith.constant 9.99999996E-13 : f32
    %534 = vector.broadcast %cst_420 : f32 to vector<16x1xf32>
    %535 = arith.addf %531, %534 : vector<16x1xf32>
    %536 = math.rsqrt %535 : vector<16x1xf32>
    %537 = vector.broadcast %536 : vector<16x1xf32> to vector<16x32xf32>
    %538 = arith.mulf %533, %537 : vector<16x32xf32>
    %539 = vector.broadcast %518 : vector<1x32xf32> to vector<16x32xf32>
    %540 = arith.mulf %538, %539 : vector<16x32xf32>
    %541 = vector.broadcast %520 : vector<1x32xf32> to vector<16x32xf32>
    %542 = arith.addf %540, %541 : vector<16x32xf32>
    %543 = arith.truncf %542 : vector<16x32xf32> to vector<16x32xbf16>
    %c1_421 = arith.constant 1 : index
    %c0_422 = arith.constant 0 : index
    %c0_423 = arith.constant 0 : index
    %544 = vector.load %arg8[%c1_421, %c0_422, %c0_423] : memref<2x32x64xbf16, #tpu.memory_space<vmem>>, vector<1x32x64xbf16>
    %545 = vector.shape_cast %544 : vector<1x32x64xbf16> to vector<32x64xbf16>
    %cst_424 = arith.constant dense<0.000000e+00> : vector<16x64xf32>
    %546 = tpu.matmul %543, %545, %cst_424 {dimension_numbers = #tpu.dot_dimension_numbers<[1], [0], [0], [1], [0, 0, 1, 1], [], []>} : vector<16x32xbf16>, vector<32x64xbf16>, vector<16x64xf32> -> vector<16x64xf32>
    %c1_425 = arith.constant 1 : index
    %c0_426 = arith.constant 0 : index
    %c0_427 = arith.constant 0 : index
    %547 = vector.load %arg9[%c1_425, %c0_426, %c0_427] : memref<2x1x64xf32, #tpu.memory_space<vmem>>, vector<1x1x64xf32>
    %548 = vector.shape_cast %547 : vector<1x1x64xf32> to vector<1x64xf32>
    %549 = vector.broadcast %548 : vector<1x64xf32> to vector<16x64xf32>
    %550 = arith.addf %546, %549 : vector<16x64xf32>
    %cst_428 = arith.constant 5.000000e-01 : f32
    %551 = vector.broadcast %cst_428 : f32 to vector<16x64xf32>
    %552 = arith.mulf %551, %550 : vector<16x64xf32>
    %cst_429 = arith.constant 4.471500e-02 : f32
    %553 = vector.broadcast %cst_429 : f32 to vector<16x64xf32>
    %554 = arith.mulf %553, %550 : vector<16x64xf32>
    %555 = arith.mulf %554, %550 : vector<16x64xf32>
    %556 = arith.mulf %555, %550 : vector<16x64xf32>
    %557 = arith.addf %550, %556 : vector<16x64xf32>
    %cst_430 = arith.constant 0.797884583 : f32
    %558 = vector.broadcast %cst_430 : f32 to vector<16x64xf32>
    %559 = arith.mulf %558, %557 : vector<16x64xf32>
    %560 = math.tanh %559 : vector<16x64xf32>
    %cst_431 = arith.constant 1.000000e+00 : f32
    %561 = vector.broadcast %cst_431 : f32 to vector<16x64xf32>
    %562 = arith.addf %561, %560 : vector<16x64xf32>
    %563 = arith.mulf %552, %562 : vector<16x64xf32>
    %564 = arith.truncf %563 : vector<16x64xf32> to vector<16x64xbf16>
    %c1_432 = arith.constant 1 : index
    %c0_433 = arith.constant 0 : index
    %c0_434 = arith.constant 0 : index
    %565 = vector.load %arg10[%c1_432, %c0_433, %c0_434] : memref<2x64x32xbf16, #tpu.memory_space<vmem>>, vector<1x64x32xbf16>
    %566 = vector.shape_cast %565 : vector<1x64x32xbf16> to vector<64x32xbf16>
    %cst_435 = arith.constant dense<0.000000e+00> : vector<16x32xf32>
    %567 = tpu.matmul %564, %566, %cst_435 {dimension_numbers = #tpu.dot_dimension_numbers<[1], [0], [0], [1], [0, 0, 1, 1], [], []>} : vector<16x64xbf16>, vector<64x32xbf16>, vector<16x32xf32> -> vector<16x32xf32>
    %c1_436 = arith.constant 1 : index
    %c0_437 = arith.constant 0 : index
    %c0_438 = arith.constant 0 : index
    %568 = vector.load %arg11[%c1_436, %c0_437, %c0_438] : memref<2x1x32xf32, #tpu.memory_space<vmem>>, vector<1x1x32xf32>
    %569 = vector.shape_cast %568 : vector<1x1x32xf32> to vector<1x32xf32>
    %570 = vector.broadcast %569 : vector<1x32xf32> to vector<16x32xf32>
    %571 = arith.addf %567, %570 : vector<16x32xf32>
    %572 = arith.addf %542, %571 : vector<16x32xf32>
    %c1_439 = arith.constant 1 : index
    %c0_440 = arith.constant 0 : index
    %c0_441 = arith.constant 0 : index
    %c0_442 = arith.constant 0 : index
    %573 = vector.load %arg12[%c1_439, %c0_440, %c0_441, %c0_442] : memref<2x2x1x32xf32, #tpu.memory_space<vmem>>, vector<1x1x1x32xf32>
    %574 = vector.shape_cast %573 : vector<1x1x1x32xf32> to vector<1x32xf32>
    %c1_443 = arith.constant 1 : index
    %c1_444 = arith.constant 1 : index
    %c0_445 = arith.constant 0 : index
    %c0_446 = arith.constant 0 : index
    %575 = vector.load %arg12[%c1_443, %c1_444, %c0_445, %c0_446] : memref<2x2x1x32xf32, #tpu.memory_space<vmem>>, vector<1x1x1x32xf32>
    %576 = vector.shape_cast %575 : vector<1x1x1x32xf32> to vector<1x32xf32>
    %cst_447 = arith.constant dense<0.000000e+00> : vector<16xf32>
    %577 = vector.multi_reduction <add>, %572, %cst_447 [1] : vector<16x32xf32> to vector<16xf32>
    %578 = vector.shape_cast %577 : vector<16xf32> to vector<16x1xf32>
    %cst_448 = arith.constant 3.200000e+01 : f32
    %579 = vector.broadcast %cst_448 : f32 to vector<16x1xf32>
    %580 = arith.divf %578, %579 : vector<16x1xf32>
    %581 = vector.broadcast %580 : vector<16x1xf32> to vector<16x32xf32>
    %582 = arith.subf %572, %581 : vector<16x32xf32>
    %583 = arith.mulf %582, %582 : vector<16x32xf32>
    %cst_449 = arith.constant dense<0.000000e+00> : vector<16xf32>
    %584 = vector.multi_reduction <add>, %583, %cst_449 [1] : vector<16x32xf32> to vector<16xf32>
    %585 = vector.shape_cast %584 : vector<16xf32> to vector<16x1xf32>
    %cst_450 = arith.constant 3.200000e+01 : f32
    %586 = vector.broadcast %cst_450 : f32 to vector<16x1xf32>
    %587 = arith.divf %585, %586 : vector<16x1xf32>
    %588 = vector.broadcast %580 : vector<16x1xf32> to vector<16x32xf32>
    %589 = arith.subf %572, %588 : vector<16x32xf32>
    %cst_451 = arith.constant 9.99999996E-13 : f32
    %590 = vector.broadcast %cst_451 : f32 to vector<16x1xf32>
    %591 = arith.addf %587, %590 : vector<16x1xf32>
    %592 = math.rsqrt %591 : vector<16x1xf32>
    %593 = vector.broadcast %592 : vector<16x1xf32> to vector<16x32xf32>
    %594 = arith.mulf %589, %593 : vector<16x32xf32>
    %595 = vector.broadcast %574 : vector<1x32xf32> to vector<16x32xf32>
    %596 = arith.mulf %594, %595 : vector<16x32xf32>
    %597 = vector.broadcast %576 : vector<1x32xf32> to vector<16x32xf32>
    %598 = arith.addf %596, %597 : vector<16x32xf32>
    %599 = vector.shape_cast %598 : vector<16x32xf32> to vector<2x8x32xf32>
    %c0_452 = arith.constant 0 : index
    %c0_453 = arith.constant 0 : index
    %c0_454 = arith.constant 0 : index
    %600 = vector.load %arg13[%c0_452, %c0_453, %c0_454] : memref<2x8x32xf32, #tpu.memory_space<vmem>>, vector<2x8x32xf32>
    tpu.vector_store %arg13[%c0_452, %c0_453, %c0_454], %599 {strides = array<i32>} : memref<2x8x32xf32, #tpu.memory_space<vmem>>, vector<2x8x32xf32>,
    return
  }
}

</mosaic_0001>

<llo_original>
// kernel: bert_text_encoder.1
$region0: #{bert_text_encoder.1}
  #allocation0 [shape = 'u32[]', space=smem, size = 0x4, offset = 0x4, fixed_abs, tag = 'smem constant byte address 0x4 - core index']
  #allocation1 [shape = 'u32[144,128]{1,0:T(1,128)}', space=vmem, size = 0x12000, scoped, tag = 'internal scratch']
  %s0 = inlined_call_operand.vmem [shape: f32[2,8,32], index: 0, kind: input, shape index: {}]
  %s1 = inlined_call_operand.vmem [shape: f32[2,8,8], index: 1, kind: input, shape index: {}]
  %s2 = inlined_call_operand.vmem [shape: f32[2,1,32], index: 2, kind: input, shape index: {}]
  %s3 = inlined_call_operand.vmem [shape: bf16[2,3,4,32,8], index: 3, kind: input, shape index: {}]
  %s4 = inlined_call_operand.vmem [shape: f32[2,3,4,1,8], index: 4, kind: input, shape index: {}]
  %s5 = inlined_call_operand.vmem [shape: bf16[2,4,8,32], index: 5, kind: input, shape index: {}]
  %s6 = inlined_call_operand.vmem [shape: f32[2,1,32], index: 6, kind: input, shape index: {}]
  %s7 = inlined_call_operand.vmem [shape: f32[2,2,1,32], index: 7, kind: input, shape index: {}]
  %s8 = inlined_call_operand.vmem [shape: bf16[2,32,64], index: 8, kind: input, shape index: {}]
  %s9 = inlined_call_operand.vmem [shape: f32[2,1,64], index: 9, kind: input, shape index: {}]
  %s10 = inlined_call_operand.vmem [shape: bf16[2,64,32], index: 10, kind: input, shape index: {}]
  %s11 = inlined_call_operand.vmem [shape: f32[2,1,32], index: 11, kind: input, shape index: {}]
  %s12 = inlined_call_operand.vmem [shape: f32[2,2,1,32], index: 12, kind: input, shape index: {}]
  %s13 = inlined_call_operand.vmem [shape: f32[2,8,32], index: 13, kind: output, shape index: {}]
  %s14 = sld [smem:[#allocation0]]
  $region62: #{bert_text_encoder.1} parent=0
    _
  %s16 = ssub.s32 1, %s14
  %s17 = scalar_select 0, %s16, %s14
  // Predicated region
  $region2: #{bert_text_encoder.1} parent=0 // pred_check
    _
  $region3: #{bert_text_encoder.1} parent=0 // pred_check_branch
    %19 = sbr.rel (0) target = $region5
  $region4: #{bert_text_encoder.1} parent=0 // pred_region
    _
  $region5: #{bert_text_encoder.1} parent=0 // pred_fallthru
    _
  // Predicated region
  $region6: #{bert_text_encoder.1} parent=0 // pred_check
    _
  $region7: #{bert_text_encoder.1} parent=0 // pred_check_branch
    %21 = sbr.rel (0) target = $region9
  $region8: #{bert_text_encoder.1} parent=0 // pred_region
    _
  $region9: #{bert_text_encoder.1} parent=0 // pred_fallthru
    _
  // Predicated region
  $region10: #{bert_text_encoder.1} parent=0 // pred_check
    _
  $region11: #{bert_text_encoder.1} parent=0 // pred_check_branch
    %23 = sbr.rel (0) target = $region13
  $region12: #{bert_text_encoder.1} parent=0 // pred_region
    _
  $region13: #{bert_text_encoder.1} parent=0 // pred_fallthru
    _
  // Predicated region
  $region14: #{bert_text_encoder.1} parent=0 // pred_check
    _
  $region15: #{bert_text_encoder.1} parent=0 // pred_check_branch
    %25 = sbr.rel (0) target = $region17
  $region16: #{bert_text_encoder.1} parent=0 // pred_region
    _
  $region17: #{bert_text_encoder.1} parent=0 // pred_fallthru
    _
  // Predicated region
  $region18: #{bert_text_encoder.1} parent=0 // pred_check
    _
  $region19: #{bert_text_encoder.1} parent=0 // pred_check_branch
    %27 = sbr.rel (0) target = $region21
  $region20: #{bert_text_encoder.1} parent=0 // pred_region
    _
  $region21: #{bert_text_encoder.1} parent=0 // pred_fallthru
    _
  // Predicated region
  $region22: #{bert_text_encoder.1} parent=0 // pred_check
    _
  $region23: #{bert_text_encoder.1} parent=0 // pred_check_branch
    %29 = sbr.rel (0) target = $region25
  $region24: #{bert_text_encoder.1} parent=0 // pred_region
    _
  $region25: #{bert_text_encoder.1} parent=0 // pred_fallthru
    _
  // Predicated region
  $region26: #{bert_text_encoder.1} parent=0 // pred_check
    _
  $region27: #{bert_text_encoder.1} parent=0 // pred_check_branch
    %31 = sbr.rel (0) target = $region29
  $region28: #{bert_text_encoder.1} parent=0 // pred_region
    _
  $region29: #{bert_text_encoder.1} parent=0 // pred_fallthru
    _
  // Predicated region
  $region30: #{bert_text_encoder.1} parent=0 // pred_check
    _
  $region31: #{bert_text_encoder.1} parent=0 // pred_check_branch
    %33 = sbr.rel (0) target = $region33
  $region32: #{bert_text_encoder.1} parent=0 // pred_region
    _
  $region33: #{bert_text_encoder.1} parent=0 // pred_fallthru
    _
  // Predicated region
  $region34: #{bert_text_encoder.1} parent=0 // pred_check
    _
  $region35: #{bert_text_encoder.1} parent=0 // pred_check_branch
    %35 = sbr.rel (0) target = $region37
  $region36: #{bert_text_encoder.1} parent=0 // pred_region
    _
  $region37: #{bert_text_encoder.1} parent=0 // pred_fallthru
    _
  // Predicated region
  $region38: #{bert_text_encoder.1} parent=0 // pred_check
    _
  $region39: #{bert_text_encoder.1} parent=0 // pred_check_branch
    %37 = sbr.rel (0) target = $region41
  $region40: #{bert_text_encoder.1} parent=0 // pred_region
    _
  $region41: #{bert_text_encoder.1} parent=0 // pred_fallthru
    _
  // Predicated region
  $region42: #{bert_text_encoder.1} parent=0 // pred_check
    _
  $region43: #{bert_text_encoder.1} parent=0 // pred_check_branch
    %39 = sbr.rel (0) target = $region45
  $region44: #{bert_text_encoder.1} parent=0 // pred_region
    _
  $region45: #{bert_text_encoder.1} parent=0 // pred_fallthru
    _
  // Predicated region
  $region46: #{bert_text_encoder.1} parent=0 // pred_check
    _
  $region47: #{bert_text_encoder.1} parent=0 // pred_check_branch
    %41 = sbr.rel (0) target = $region49
  $region48: #{bert_text_encoder.1} parent=0 // pred_region
    _
  $region49: #{bert_text_encoder.1} parent=0 // pred_fallthru
    _
  // Predicated region
  $region50: #{bert_text_encoder.1} parent=0 // pred_check
    _
  $region51: #{bert_text_encoder.1} parent=0 // pred_check_branch
    %43 = sbr.rel (0) target = $region53
  $region52: #{bert_text_encoder.1} parent=0 // pred_region
    _
  $region53: #{bert_text_encoder.1} parent=0 // pred_fallthru
    _
  %v45 = vld [vmem:[%s0] sm:$0xff]
  %v46 = vld [vmem:[%s0 + $0x8] sm:$0xff]
  %v47 = vld [vmem:[%s2] sm:$0x1]
  %s48 = scalar_lea.vmem %s2, 1
  %v49 = vld [vmem:[%s48] sm:$0x1]
  %vm50 = vcmask 261120
  %v51 = vsel %vm50, %v45, 0.0
  %52 = vadd.xlane.f32.xlu0 %v51
  %v53 = vpop.xlane.xlu0 %52
  %v54 = vsel %vm50, %v46, 0.0
  %55 = vadd.xlane.f32.xlu0 %v54
  %v56 = vpop.xlane.xlu0 %55
  %v57 = vrcp.pop 32.0
  %v58 = vmul.f32 %v53, %v57
  %v59 = vmul.f32 %v56, %v57
  %v60 = vsub.f32 %v45, %v58
  %v61 = vsub.f32 %v46, %v59
  %v62 = vmul.f32 %v60, %v60
  %v63 = vmul.f32 %v61, %v61
  %v64 = vsel %vm50, %v62, 0.0
  %65 = vadd.xlane.f32.xlu0 %v64
  %v66 = vpop.xlane.xlu0 %65
  %v67 = vsel %vm50, %v63, 0.0
  %68 = vadd.xlane.f32.xlu0 %v67
  %v69 = vpop.xlane.xlu0 %68
  %v70 = vmul.f32 %v66, %v57
  %v71 = vmul.f32 %v69, %v57
  %v72 = vadd.f32 %v70, 1e-12
  %v73 = vadd.f32 %v71, 1e-12
  %v74 = vrsqrt.pop %v72
  %v75 = vrsqrt.pop %v73
  %v76 = vmul.f32 %v60, %v74
  %v77 = vmul.f32 %v61, %v75
  %v79 = vlaneseq
  %v80 = vshrl.u32 %v79, 7
  %v81 = vsub.s32 0, %v80
  %v82 = vrot.slane %v47, %v81
  %v84 = vmul.f32 %v76, %v82
  %v85 = vmul.f32 %v77, %v82
  %v87 = vlaneseq
  %v88 = vshrl.u32 %v87, 7
  %v89 = vsub.s32 0, %v88
  %v90 = vrot.slane %v49, %v89
  %v92 = vadd.f32 %v84, %v90
  %v93 = vadd.f32 %v85, %v90
  %v94 = vld [vmem:[%s1] sm:$0xff]
  %v95 = vld [vmem:[%s1 + $0x8] sm:$0xff]
  %v96 = vpack.c.bf16 %v93, %v92
  %v97 = vld [vmem:[%s3] sm:$0xf]
  %v98 = vld [vmem:[%s3 + $0x4] sm:$0xf]
  %v99 = vld [vmem:[%s3 + $0x8] sm:$0xf]
  %v100 = vld [vmem:[%s3 + $0xc] sm:$0xf]
  %v101 = vld [vmem:[%s4] sm:$0x1]
  %v103 = vlaneseq
  %v104 = vshrl.u32 %v103, 7
  %v105 = vsub.s32 0, %v104
  %v106 = vrot.slane %v101, %v105
  %v112 = vunpack.c.l.b16 %v97
  %v113 = vunpack.c.l.b16 %v98
  %v114 = vunpack.c.l.b16 %v99
  %v115 = vunpack.c.l.b16 %v100
  %v116 = vpack.c.b16 %v113, %v112
  %v117 = vpack.c.b16 %v115, %v114
  %v121 = vsel %vm50, %v96, 0
  %123 = vmatprep.subr.bf16.mxu0 0
  %124 = vmatpush1.bf16.msra.mxu0 %v116
  %125 = vmatprep.subr.bf16.mxu0 0
  %126 = vmatpush1.bf16.msra.mxu0 %v117
  %127 = vmatprep.subr.bf16.mxu0 0
  %128 = vmatpush1.bf16.msra.mxu0 0
  %129 = vmatprep.subr.bf16.mxu0 0
  %130 = vmatpush1.bf16.msra.mxu0 0
  %131 = vmatprep.subr.bf16.mxu0 0
  %132 = vmatpush1.bf16.msra.mxu0 0
  %133 = vmatprep.subr.bf16.mxu0 0
  %134 = vmatpush1.bf16.msra.mxu0 0
  %135 = vmatprep.subr.bf16.mxu0 0
  %136 = vmatpush1.bf16.msra.mxu0 0
  %137 = vmatprep.subr.bf16.mxu0 0
  %138 = vmatpush1.bf16.msra.mxu0 0
  %139 = vmatprep.subr.bf16.mxu0 0
  %140 = vmatpush1.bf16.msra.mxu0 0
  %141 = vmatprep.subr.bf16.mxu0 0
  %142 = vmatpush1.bf16.msra.mxu0 0
  %143 = vmatprep.subr.bf16.mxu0 0
  %144 = vmatpush1.bf16.msra.mxu0 0
  %145 = vmatprep.subr.bf16.mxu0 0
  %146 = vmatpush1.bf16.msra.mxu0 0
  %147 = vmatprep.subr.bf16.mxu0 0
  %148 = vmatpush1.bf16.msra.mxu0 0
  %149 = vmatprep.subr.bf16.mxu0 0
  %150 = vmatpush1.bf16.msra.mxu0 0
  %151 = vmatprep.subr.bf16.mxu0 0
  %152 = vmatpush1.bf16.msra.mxu0 0
  %153 = vmatprep.subr.bf16.mxu0 0
  %154 = vmatpush1.bf16.msra.mxu0 0
  %155 = vmatprep.mubr.bf16.mxu0 0
  %156 = vmatmul.mubr.bf16.gmra.mrb[0].mxu0 %v121
  %v157 = vpop.f32.mrb[0].mxu0
  %v158 = vadd.f32 %v106, %v157
  %v159 = vpop.f32.mrb[0].mxu0
  %v160 = vpop.f32.mrb[0].mxu0
  %v161 = vadd.f32 %v106, %v160
  %v162 = vpop.f32.mrb[0].mxu0
  %163 = vdwg.mxu0
  %s164 = scalar_lea.vmem %s3, 64
  %v165 = vld [vmem:[%s164] sm:$0xf]
  %v166 = vld [vmem:[%s164 + $0x4] sm:$0xf]
  %v167 = vld [vmem:[%s164 + $0x8] sm:$0xf]
  %v168 = vld [vmem:[%s164 + $0xc] sm:$0xf]
  %s169 = scalar_lea.vmem %s4, 4
  %v170 = vld [vmem:[%s169] sm:$0x1]
  %v172 = vlaneseq
  %v173 = vshrl.u32 %v172, 7
  %v174 = vsub.s32 0, %v173
  %v175 = vrot.slane %v170, %v174
  %v181 = vunpack.c.l.b16 %v165
  %v182 = vunpack.c.l.b16 %v166
  %v183 = vunpack.c.l.b16 %v167
  %v184 = vunpack.c.l.b16 %v168
  %v185 = vpack.c.b16 %v182, %v181
  %v186 = vpack.c.b16 %v184, %v183
  %189 = vmatprep.subr.bf16.mxu0 0
  %190 = vmatpush1.bf16.msra.mxu0 %v185
  %191 = vmatprep.subr.bf16.mxu0 0
  %192 = vmatpush1.bf16.msra.mxu0 %v186
  %193 = vmatprep.subr.bf16.mxu0 0
  %194 = vmatpush1.bf16.msra.mxu0 0
  %195 = vmatprep.subr.bf16.mxu0 0
  %196 = vmatpush1.bf16.msra.mxu0 0
  %197 = vmatprep.subr.bf16.mxu0 0
  %198 = vmatpush1.bf16.msra.mxu0 0
  %199 = vmatprep.subr.bf16.mxu0 0
  %200 = vmatpush1.bf16.msra.mxu0 0
  %201 = vmatprep.subr.bf16.mxu0 0
  %202 = vmatpush1.bf16.msra.mxu0 0
  %203 = vmatprep.subr.bf16.mxu0 0
  %204 = vmatpush1.bf16.msra.mxu0 0
  %205 = vmatprep.subr.bf16.mxu0 0
  %206 = vmatpush1.bf16.msra.mxu0 0
  %207 = vmatprep.subr.bf16.mxu0 0
  %208 = vmatpush1.bf16.msra.mxu0 0
  %209 = vmatprep.subr.bf16.mxu0 0
  %210 = vmatpush1.bf16.msra.mxu0 0
  %211 = vmatprep.subr.bf16.mxu0 0
  %212 = vmatpush1.bf16.msra.mxu0 0
  %213 = vmatprep.subr.bf16.mxu0 0
  %214 = vmatpush1.bf16.msra.mxu0 0
  %215 = vmatprep.subr.bf16.mxu0 0
  %216 = vmatpush1.bf16.msra.mxu0 0
  %217 = vmatprep.subr.bf16.mxu0 0
  %218 = vmatpush1.bf16.msra.mxu0 0
  %219 = vmatprep.subr.bf16.mxu0 0
  %220 = vmatpush1.bf16.msra.mxu0 0
  %221 = vmatprep.mubr.bf16.mxu0 0
  %222 = vmatmul.mubr.bf16.gmra.mrb[0].mxu0 %v121
  %v223 = vpop.f32.mrb[0].mxu0
  %v224 = vadd.f32 %v175, %v223
  %v225 = vpop.f32.mrb[0].mxu0
  %v226 = vpop.f32.mrb[0].mxu0
  %v227 = vadd.f32 %v175, %v226
  %v228 = vpop.f32.mrb[0].mxu0
  %229 = vdwg.mxu0
  %s230 = scalar_lea.vmem %s3, 128
  %v231 = vld [vmem:[%s230] sm:$0xf]
  %v232 = vld [vmem:[%s230 + $0x4] sm:$0xf]
  %v233 = vld [vmem:[%s230 + $0x8] sm:$0xf]
  %v234 = vld [vmem:[%s230 + $0xc] sm:$0xf]
  %s235 = scalar_lea.vmem %s4, 8
  %v236 = vld [vmem:[%s235] sm:$0x1]
  %v238 = vlaneseq
  %v239 = vshrl.u32 %v238, 7
  %v240 = vsub.s32 0, %v239
  %v241 = vrot.slane %v236, %v240
  %v247 = vunpack.c.l.b16 %v231
  %v248 = vunpack.c.l.b16 %v232
  %v249 = vunpack.c.l.b16 %v233
  %v250 = vunpack.c.l.b16 %v234
  %v251 = vpack.c.b16 %v248, %v247
  %v252 = vpack.c.b16 %v250, %v249
  %255 = vmatprep.subr.bf16.mxu0 0
  %256 = vmatpush1.bf16.msra.mxu0 %v251
  %257 = vmatprep.subr.bf16.mxu0 0
  %258 = vmatpush1.bf16.msra.mxu0 %v252
  %259 = vmatprep.subr.bf16.mxu0 0
  %260 = vmatpush1.bf16.msra.mxu0 0
  %261 = vmatprep.subr.bf16.mxu0 0
  %262 = vmatpush1.bf16.msra.mxu0 0
  %263 = vmatprep.subr.bf16.mxu0 0
  %264 = vmatpush1.bf16.msra.mxu0 0
  %265 = vmatprep.subr.bf16.mxu0 0
  %266 = vmatpush1.bf16.msra.mxu0 0
  %267 = vmatprep.subr.bf16.mxu0 0
  %268 = vmatpush1.bf16.msra.mxu0 0
  %269 = vmatprep.subr.bf16.mxu0 0
  %270 = vmatpush1.bf16.msra.mxu0 0
  %271 = vmatprep.subr.bf16.mxu0 0
  %272 = vmatpush1.bf16.msra.mxu0 0
  %273 = vmatprep.subr.bf16.mxu0 0
  %274 = vmatpush1.bf16.msra.mxu0 0
  %275 = vmatprep.subr.bf16.mxu0 0
  %276 = vmatpush1.bf16.msra.mxu0 0
  %277 = vmatprep.subr.bf16.mxu0 0
  %278 = vmatpush1.bf16.msra.mxu0 0
  %279 = vmatprep.subr.bf16.mxu0 0
  %280 = vmatpush1.bf16.msra.mxu0 0
  %281 = vmatprep.subr.bf16.mxu0 0
  %282 = vmatpush1.bf16.msra.mxu0 0
  %283 = vmatprep.subr.bf16.mxu0 0
  %284 = vmatpush1.bf16.msra.mxu0 0
  %285 = vmatprep.subr.bf16.mxu0 0
  %286 = vmatpush1.bf16.msra.mxu0 0
  %287 = vmatprep.mubr.bf16.mxu0 0
  %288 = vmatmul.mubr.bf16.gmra.mrb[0].mxu0 %v121
  %v289 = vpop.f32.mrb[0].mxu0
  %v290 = vadd.f32 %v241, %v289
  %v291 = vpop.f32.mrb[0].mxu0
  %v292 = vpop.f32.mrb[0].mxu0
  %v293 = vadd.f32 %v241, %v292
  %v294 = vpop.f32.mrb[0].mxu0
  %295 = vdwg.mxu0
  %v296 = vpack.c.bf16 %v158, %v158
  %v297 = vpack.c.bf16 %v161, %v161
  %v298 = vpack.c.bf16 %v224, %v224
  %v299 = vpack.c.bf16 %v227, %v227
  %v300 = vpack.c.bf16 %v290, %v290
  %v301 = vpack.c.bf16 %v293, %v293
  %vm302 = vcmask 64512
  %v304 = vsel %vm302, %v296, 0
  %v307 = vsel %vm302, %v298, 0
  %309 = vmatprep.subr.bf16.mxu0 0
  %310 = vmatpush1.bf16.xpose.msra.mxu0 %v307
  %311 = vmatprep.subr.bf16.mxu0 0
  %312 = vmatpush1.bf16.xpose.msra.mxu0 0
  %313 = vmatprep.subr.bf16.mxu0 0
  %314 = vmatpush1.bf16.xpose.msra.mxu0 0
  %315 = vmatprep.subr.bf16.mxu0 0
  %316 = vmatpush1.bf16.xpose.msra.mxu0 0
  %317 = vmatprep.subr.bf16.mxu0 0
  %318 = vmatpush1.bf16.xpose.msra.mxu0 0
  %319 = vmatprep.subr.bf16.mxu0 0
  %320 = vmatpush1.bf16.xpose.msra.mxu0 0
  %321 = vmatprep.subr.bf16.mxu0 0
  %322 = vmatpush1.bf16.xpose.msra.mxu0 0
  %323 = vmatprep.subr.bf16.mxu0 0
  %324 = vmatpush1.bf16.xpose.msra.mxu0 0
  %325 = vmatprep.subr.bf16.mxu0 0
  %326 = vmatpush1.bf16.xpose.msra.mxu0 0
  %327 = vmatprep.subr.bf16.mxu0 0
  %328 = vmatpush1.bf16.xpose.msra.mxu0 0
  %329 = vmatprep.subr.bf16.mxu0 0
  %330 = vmatpush1.bf16.xpose.msra.mxu0 0
  %331 = vmatprep.subr.bf16.mxu0 0
  %332 = vmatpush1.bf16.xpose.msra.mxu0 0
  %333 = vmatprep.subr.bf16.mxu0 0
  %334 = vmatpush1.bf16.xpose.msra.mxu0 0
  %335 = vmatprep.subr.bf16.mxu0 0
  %336 = vmatpush1.bf16.xpose.msra.mxu0 0
  %337 = vmatprep.subr.bf16.mxu0 0
  %338 = vmatpush1.bf16.xpose.msra.mxu0 0
  %339 = vmatprep.subr.bf16.mxu0 0
  %340 = vmatpush1.bf16.xpose.msra.mxu0 0
  %341 = vmatprep.mubr.bf16.mxu0 0
  %342 = vmatmul.mubr.bf16.gmra.mrb[0].mxu0 %v304
  %v343 = vpop.f32.mrb[0].mxu0
  %v344 = vadd.f32 0.0, %v343
  %v345 = vpop.f32.mrb[0].mxu0
  %v346 = vpop.f32.mrb[0].mxu0
  %v347 = vpop.f32.mrb[0].mxu0
  %348 = vdwg.mxu0
  %v350 = vsel %vm302, %v297, 0
  %v353 = vsel %vm302, %v299, 0
  %355 = vmatprep.subr.bf16.mxu0 0
  %356 = vmatpush1.bf16.xpose.msra.mxu0 %v353
  %357 = vmatprep.subr.bf16.mxu0 0
  %358 = vmatpush1.bf16.xpose.msra.mxu0 0
  %359 = vmatprep.subr.bf16.mxu0 0
  %360 = vmatpush1.bf16.xpose.msra.mxu0 0
  %361 = vmatprep.subr.bf16.mxu0 0
  %362 = vmatpush1.bf16.xpose.msra.mxu0 0
  %363 = vmatprep.subr.bf16.mxu0 0
  %364 = vmatpush1.bf16.xpose.msra.mxu0 0
  %365 = vmatprep.subr.bf16.mxu0 0
  %366 = vmatpush1.bf16.xpose.msra.mxu0 0
  %367 = vmatprep.subr.bf16.mxu0 0
  %368 = vmatpush1.bf16.xpose.msra.mxu0 0
  %369 = vmatprep.subr.bf16.mxu0 0
  %370 = vmatpush1.bf16.xpose.msra.mxu0 0
  %371 = vmatprep.subr.bf16.mxu0 0
  %372 = vmatpush1.bf16.xpose.msra.mxu0 0
  %373 = vmatprep.subr.bf16.mxu0 0
  %374 = vmatpush1.bf16.xpose.msra.mxu0 0
  %375 = vmatprep.subr.bf16.mxu0 0
  %376 = vmatpush1.bf16.xpose.msra.mxu0 0
  %377 = vmatprep.subr.bf16.mxu0 0
  %378 = vmatpush1.bf16.xpose.msra.mxu0 0
  %379 = vmatprep.subr.bf16.mxu0 0
  %380 = vmatpush1.bf16.xpose.msra.mxu0 0
  %381 = vmatprep.subr.bf16.mxu0 0
  %382 = vmatpush1.bf16.xpose.msra.mxu0 0
  %383 = vmatprep.subr.bf16.mxu0 0
  %384 = vmatpush1.bf16.xpose.msra.mxu0 0
  %385 = vmatprep.subr.bf16.mxu0 0
  %386 = vmatpush1.bf16.xpose.msra.mxu0 0
  %387 = vmatprep.mubr.bf16.mxu0 0
  %388 = vmatmul.mubr.bf16.gmra.mrb[0].mxu0 %v350
  %v389 = vpop.f32.mrb[0].mxu0
  %v390 = vadd.f32 0.0, %v389
  %v391 = vpop.f32.mrb[0].mxu0
  %v392 = vpop.f32.mrb[0].mxu0
  %v393 = vpop.f32.mrb[0].mxu0
  %394 = vdwg.mxu0
  %v395 = vmul.f32 %v344, 0.35355338
  %v396 = vmul.f32 %v390, 0.35355338
  %v397 = vadd.f32 %v395, %v94
  %v398 = vadd.f32 %v396, %v95
  %v399 = vsel %vm302, %v397, -inf
  %400 = vmax.xlane.f32.xlu0 %v399
  %v401 = vpop.xlane.xlu0 %400
  %v402 = vsel %vm302, %v398, -inf
  %403 = vmax.xlane.f32.xlu0 %v402
  %v404 = vpop.xlane.xlu0 %403
  %v405 = vsub.f32 %v397, %v401
  %v406 = vsub.f32 %v398, %v404
  %v407 = vmul.f32 %v405, 1.442695
  %v408 = vpow.pop %v407
  %v409 = vmul.f32 %v406, 1.442695
  %v410 = vpow.pop %v409
  %v411 = vsel %vm302, %v408, 0.0
  %412 = vadd.xlane.f32.xlu0 %v411
  %v413 = vpop.xlane.xlu0 %412
  %v414 = vsel %vm302, %v410, 0.0
  %415 = vadd.xlane.f32.xlu0 %v414
  %v416 = vpop.xlane.xlu0 %415
  %v417 = vrcp.pop %v413
  %v418 = vrcp.pop %v416
  %v419 = vmul.f32 %v408, %v417
  %v420 = vmul.f32 %v410, %v418
  %v421 = vpack.c.bf16 %v419, %v419
  %v422 = vpack.c.bf16 %v420, %v420
  %v424 = vsel %vm302, %v421, 0
  %vm426 = vcmask 1043456
  %v428 = vsel %vm426, %v300, 0
  %430 = vmatprep.subr.bf16.mxu0 0
  %431 = vmatpush1.bf16.msra.mxu0 %v428
  %432 = vmatprep.subr.bf16.mxu0 0
  %433 = vmatpush1.bf16.msra.mxu0 0
  %434 = vmatprep.subr.bf16.mxu0 0
  %435 = vmatpush1.bf16.msra.mxu0 0
  %436 = vmatprep.subr.bf16.mxu0 0
  %437 = vmatpush1.bf16.msra.mxu0 0
  %438 = vmatprep.subr.bf16.mxu0 0
  %439 = vmatpush1.bf16.msra.mxu0 0
  %440 = vmatprep.subr.bf16.mxu0 0
  %441 = vmatpush1.bf16.msra.mxu0 0
  %442 = vmatprep.subr.bf16.mxu0 0
  %443 = vmatpush1.bf16.msra.mxu0 0
  %444 = vmatprep.subr.bf16.mxu0 0
  %445 = vmatpush1.bf16.msra.mxu0 0
  %446 = vmatprep.subr.bf16.mxu0 0
  %447 = vmatpush1.bf16.msra.mxu0 0
  %448 = vmatprep.subr.bf16.mxu0 0
  %449 = vmatpush1.bf16.msra.mxu0 0
  %450 = vmatprep.subr.bf16.mxu0 0
  %451 = vmatpush1.bf16.msra.mxu0 0
  %452 = vmatprep.subr.bf16.mxu0 0
  %453 = vmatpush1.bf16.msra.mxu0 0
  %454 = vmatprep.subr.bf16.mxu0 0
  %455 = vmatpush1.bf16.msra.mxu0 0
  %456 = vmatprep.subr.bf16.mxu0 0
  %457 = vmatpush1.bf16.msra.mxu0 0
  %458 = vmatprep.subr.bf16.mxu0 0
  %459 = vmatpush1.bf16.msra.mxu0 0
  %460 = vmatprep.subr.bf16.mxu0 0
  %461 = vmatpush1.bf16.msra.mxu0 0
  %462 = vmatprep.mubr.bf16.mxu0 0
  %463 = vmatmul.mubr.bf16.gmra.mrb[0].mxu0 %v424
  %v464 = vpop.f32.mrb[0].mxu0
  %v465 = vadd.f32 0.0, %v464
  %v466 = vpop.f32.mrb[0].mxu0
  %v467 = vpop.f32.mrb[0].mxu0
  %v468 = vpop.f32.mrb[0].mxu0
  %469 = vdwg.mxu0
  %v471 = vsel %vm302, %v422, 0
  %v474 = vsel %vm426, %v301, 0
  %476 = vmatprep.subr.bf16.mxu0 0
  %477 = vmatpush1.bf16.msra.mxu0 %v474
  %478 = vmatprep.subr.bf16.mxu0 0
  %479 = vmatpush1.bf16.msra.mxu0 0
  %480 = vmatprep.subr.bf16.mxu0 0
  %481 = vmatpush1.bf16.msra.mxu0 0
  %482 = vmatprep.subr.bf16.mxu0 0
  %483 = vmatpush1.bf16.msra.mxu0 0
  %484 = vmatprep.subr.bf16.mxu0 0
  %485 = vmatpush1.bf16.msra.mxu0 0
  %486 = vmatprep.subr.bf16.mxu0 0
  %487 = vmatpush1.bf16.msra.mxu0 0
  %488 = vmatprep.subr.bf16.mxu0 0
  %489 = vmatpush1.bf16.msra.mxu0 0
  %490 = vmatprep.subr.bf16.mxu0 0
  %491 = vmatpush1.bf16.msra.mxu0 0
  %492 = vmatprep.subr.bf16.mxu0 0
  %493 = vmatpush1.bf16.msra.mxu0 0
  %494 = vmatprep.subr.bf16.mxu0 0
  %495 = vmatpush1.bf16.msra.mxu0 0
  %496 = vmatprep.subr.bf16.mxu0 0
  %497 = vmatpush1.bf16.msra.mxu0 0
  %498 = vmatprep.subr.bf16.mxu0 0
  %499 = vmatpush1.bf16.msra.mxu0 0
  %500 = vmatprep.subr.bf16.mxu0 0
  %501 = vmatpush1.bf16.msra.mxu0 0
  %502 = vmatprep.subr.bf16.mxu0 0
  %503 = vmatpush1.bf16.msra.mxu0 0
  %504 = vmatprep.subr.bf16.mxu0 0
  %505 = vmatpush1.bf16.msra.mxu0 0
  %506 = vmatprep.subr.bf16.mxu0 0
  %507 = vmatpush1.bf16.msra.mxu0 0
  %508 = vmatprep.mubr.bf16.mxu0 0
  %509 = vmatmul.mubr.bf16.gmra.mrb[0].mxu0 %v471
  %v510 = vpop.f32.mrb[0].mxu0
  %v511 = vadd.f32 0.0, %v510
  %v512 = vpop.f32.mrb[0].mxu0
  %v513 = vpop.f32.mrb[0].mxu0
  %v514 = vpop.f32.mrb[0].mxu0
  %515 = vdwg.mxu0
  %v516 = vpack.c.bf16 %v511, %v465
  %v517 = vld [vmem:[%s5] sm:$0xf]
  %s518 = scalar_lea.vmem %s3, 16
  %v519 = vld [vmem:[%s518] sm:$0xf]
  %v520 = vld [vmem:[%s518 + $0x4] sm:$0xf]
  %v521 = vld [vmem:[%s518 + $0x8] sm:$0xf]
  %v522 = vld [vmem:[%s518 + $0xc] sm:$0xf]
  %s523 = scalar_lea.vmem %s4, 1
  %v524 = vld [vmem:[%s523] sm:$0x1]
  %v526 = vlaneseq
  %v527 = vshrl.u32 %v526, 7
  %v528 = vsub.s32 0, %v527
  %v529 = vrot.slane %v524, %v528
  %v535 = vunpack.c.l.b16 %v519
  %v536 = vunpack.c.l.b16 %v520
  %v537 = vunpack.c.l.b16 %v521
  %v538 = vunpack.c.l.b16 %v522
  %v539 = vpack.c.b16 %v536, %v535
  %v540 = vpack.c.b16 %v538, %v537
  %543 = vmatprep.subr.bf16.mxu0 0
  %544 = vmatpush1.bf16.msra.mxu0 %v539
  %545 = vmatprep.subr.bf16.mxu0 0
  %546 = vmatpush1.bf16.msra.mxu0 %v540
  %547 = vmatprep.subr.bf16.mxu0 0
  %548 = vmatpush1.bf16.msra.mxu0 0
  %549 = vmatprep.subr.bf16.mxu0 0
  %550 = vmatpush1.bf16.msra.mxu0 0
  %551 = vmatprep.subr.bf16.mxu0 0
  %552 = vmatpush1.bf16.msra.mxu0 0
  %553 = vmatprep.subr.bf16.mxu0 0
  %554 = vmatpush1.bf16.msra.mxu0 0
  %555 = vmatprep.subr.bf16.mxu0 0
  %556 = vmatpush1.bf16.msra.mxu0 0
  %557 = vmatprep.subr.bf16.mxu0 0
  %558 = vmatpush1.bf16.msra.mxu0 0
  %559 = vmatprep.subr.bf16.mxu0 0
  %560 = vmatpush1.bf16.msra.mxu0 0
  %561 = vmatprep.subr.bf16.mxu0 0
  %562 = vmatpush1.bf16.msra.mxu0 0
  %563 = vmatprep.subr.bf16.mxu0 0
  %564 = vmatpush1.bf16.msra.mxu0 0
  %565 = vmatprep.subr.bf16.mxu0 0
  %566 = vmatpush1.bf16.msra.mxu0 0
  %567 = vmatprep.subr.bf16.mxu0 0
  %568 = vmatpush1.bf16.msra.mxu0 0
  %569 = vmatprep.subr.bf16.mxu0 0
  %570 = vmatpush1.bf16.msra.mxu0 0
  %571 = vmatprep.subr.bf16.mxu0 0
  %572 = vmatpush1.bf16.msra.mxu0 0
  %573 = vmatprep.subr.bf16.mxu0 0
  %574 = vmatpush1.bf16.msra.mxu0 0
  %575 = vmatprep.mubr.bf16.mxu0 0
  %576 = vmatmul.mubr.bf16.gmra.mrb[0].mxu0 %v121
  %v577 = vpop.f32.mrb[0].mxu0
  %v578 = vadd.f32 %v529, %v577
  %v579 = vpop.f32.mrb[0].mxu0
  %v580 = vpop.f32.mrb[0].mxu0
  %v581 = vadd.f32 %v529, %v580
  %v582 = vpop.f32.mrb[0].mxu0
  %583 = vdwg.mxu0
  %s584 = scalar_lea.vmem %s3, 80
  %v585 = vld [vmem:[%s584] sm:$0xf]
  %v586 = vld [vmem:[%s584 + $0x4] sm:$0xf]
  %v587 = vld [vmem:[%s584 + $0x8] sm:$0xf]
  %v588 = vld [vmem:[%s584 + $0xc] sm:$0xf]
  %s589 = scalar_lea.vmem %s4, 5
  %v590 = vld [vmem:[%s589] sm:$0x1]
  %v592 = vlaneseq
  %v593 = vshrl.u32 %v592, 7
  %v594 = vsub.s32 0, %v593
  %v595 = vrot.slane %v590, %v594
  %v601 = vunpack.c.l.b16 %v585
  %v602 = vunpack.c.l.b16 %v586
  %v603 = vunpack.c.l.b16 %v587
  %v604 = vunpack.c.l.b16 %v588
  %v605 = vpack.c.b16 %v602, %v601
  %v606 = vpack.c.b16 %v604, %v603
  %609 = vmatprep.subr.bf16.mxu0 0
  %610 = vmatpush1.bf16.msra.mxu0 %v605
  %611 = vmatprep.subr.bf16.mxu0 0
  %612 = vmatpush1.bf16.msra.mxu0 %v606
  %613 = vmatprep.subr.bf16.mxu0 0
  %614 = vmatpush1.bf16.msra.mxu0 0
  %615 = vmatprep.subr.bf16.mxu0 0
  %616 = vmatpush1.bf16.msra.mxu0 0
  %617 = vmatprep.subr.bf16.mxu0 0
  %618 = vmatpush1.bf16.msra.mxu0 0
  %619 = vmatprep.subr.bf16.mxu0 0
  %620 = vmatpush1.bf16.msra.mxu0 0
  %621 = vmatprep.subr.bf16.mxu0 0
  %622 = vmatpush1.bf16.msra.mxu0 0
  %623 = vmatprep.subr.bf16.mxu0 0
  %624 = vmatpush1.bf16.msra.mxu0 0
  %625 = vmatprep.subr.bf16.mxu0 0
  %626 = vmatpush1.bf16.msra.mxu0 0
  %627 = vmatprep.subr.bf16.mxu0 0
  %628 = vmatpush1.bf16.msra.mxu0 0
  %629 = vmatprep.subr.bf16.mxu0 0
  %630 = vmatpush1.bf16.msra.mxu0 0
  %631 = vmatprep.subr.bf16.mxu0 0
  %632 = vmatpush1.bf16.msra.mxu0 0
  %633 = vmatprep.subr.bf16.mxu0 0
  %634 = vmatpush1.bf16.msra.mxu0 0
  %635 = vmatprep.subr.bf16.mxu0 0
  %636 = vmatpush1.bf16.msra.mxu0 0
  %637 = vmatprep.subr.bf16.mxu0 0
  %638 = vmatpush1.bf16.msra.mxu0 0
  %639 = vmatprep.subr.bf16.mxu0 0
  %640 = vmatpush1.bf16.msra.mxu0 0
  %641 = vmatprep.mubr.bf16.mxu0 0
  %642 = vmatmul.mubr.bf16.gmra.mrb[0].mxu0 %v121
  %v643 = vpop.f32.mrb[0].mxu0
  %v644 = vadd.f32 %v595, %v643
  %v645 = vpop.f32.mrb[0].mxu0
  %v646 = vpop.f32.mrb[0].mxu0
  %v647 = vadd.f32 %v595, %v646
  %v648 = vpop.f32.mrb[0].mxu0
  %649 = vdwg.mxu0
  %s650 = scalar_lea.vmem %s3, 144
  %v651 = vld [vmem:[%s650] sm:$0xf]
  %v652 = vld [vmem:[%s650 + $0x4] sm:$0xf]
  %v653 = vld [vmem:[%s650 + $0x8] sm:$0xf]
  %v654 = vld [vmem:[%s650 + $0xc] sm:$0xf]
  %s655 = scalar_lea.vmem %s4, 9
  %v656 = vld [vmem:[%s655] sm:$0x1]
  %v658 = vlaneseq
  %v659 = vshrl.u32 %v658, 7
  %v660 = vsub.s32 0, %v659
  %v661 = vrot.slane %v656, %v660
  %v667 = vunpack.c.l.b16 %v651
  %v668 = vunpack.c.l.b16 %v652
  %v669 = vunpack.c.l.b16 %v653
  %v670 = vunpack.c.l.b16 %v654
  %v671 = vpack.c.b16 %v668, %v667
  %v672 = vpack.c.b16 %v670, %v669
  %675 = vmatprep.subr.bf16.mxu0 0
  %676 = vmatpush1.bf16.msra.mxu0 %v671
  %677 = vmatprep.subr.bf16.mxu0 0
  %678 = vmatpush1.bf16.msra.mxu0 %v672
  %679 = vmatprep.subr.bf16.mxu0 0
  %680 = vmatpush1.bf16.msra.mxu0 0
  %681 = vmatprep.subr.bf16.mxu0 0
  %682 = vmatpush1.bf16.msra.mxu0 0
  %683 = vmatprep.subr.bf16.mxu0 0
  %684 = vmatpush1.bf16.msra.mxu0 0
  %685 = vmatprep.subr.bf16.mxu0 0
  %686 = vmatpush1.bf16.msra.mxu0 0
  %687 = vmatprep.subr.bf16.mxu0 0
  %688 = vmatpush1.bf16.msra.mxu0 0
  %689 = vmatprep.subr.bf16.mxu0 0
  %690 = vmatpush1.bf16.msra.mxu0 0
  %691 = vmatprep.subr.bf16.mxu0 0
  %692 = vmatpush1.bf16.msra.mxu0 0
  %693 = vmatprep.subr.bf16.mxu0 0
  %694 = vmatpush1.bf16.msra.mxu0 0
  %695 = vmatprep.subr.bf16.mxu0 0
  %696 = vmatpush1.bf16.msra.mxu0 0
  %697 = vmatprep.subr.bf16.mxu0 0
  %698 = vmatpush1.bf16.msra.mxu0 0
  %699 = vmatprep.subr.bf16.mxu0 0
  %700 = vmatpush1.bf16.msra.mxu0 0
  %701 = vmatprep.subr.bf16.mxu0 0
  %702 = vmatpush1.bf16.msra.mxu0 0
  %703 = vmatprep.subr.bf16.mxu0 0
  %704 = vmatpush1.bf16.msra.mxu0 0
  %705 = vmatprep.subr.bf16.mxu0 0
  %706 = vmatpush1.bf16.msra.mxu0 0
  %707 = vmatprep.mubr.bf16.mxu0 0
  %708 = vmatmul.mubr.bf16.gmra.mrb[0].mxu0 %v121
  %v709 = vpop.f32.mrb[0].mxu0
  %v710 = vadd.f32 %v661, %v709
  %v711 = vpop.f32.mrb[0].mxu0
  %v712 = vpop.f32.mrb[0].mxu0
  %v713 = vadd.f32 %v661, %v712
  %v714 = vpop.f32.mrb[0].mxu0
  %715 = vdwg.mxu0
  %v716 = vpack.c.bf16 %v578, %v578
  %v717 = vpack.c.bf16 %v581, %v581
  %v718 = vpack.c.bf16 %v644, %v644
  %v719 = vpack.c.bf16 %v647, %v647
  %v720 = vpack.c.bf16 %v710, %v710
  %v721 = vpack.c.bf16 %v713, %v713
  %v723 = vsel %vm302, %v716, 0
  %v726 = vsel %vm302, %v718, 0
  %728 = vmatprep.subr.bf16.mxu0 0
  %729 = vmatpush1.bf16.xpose.msra.mxu0 %v726
  %730 = vmatprep.subr.bf16.mxu0 0
  %731 = vmatpush1.bf16.xpose.msra.mxu0 0
  %732 = vmatprep.subr.bf16.mxu0 0
  %733 = vmatpush1.bf16.xpose.msra.mxu0 0
  %734 = vmatprep.subr.bf16.mxu0 0
  %735 = vmatpush1.bf16.xpose.msra.mxu0 0
  %736 = vmatprep.subr.bf16.mxu0 0
  %737 = vmatpush1.bf16.xpose.msra.mxu0 0
  %738 = vmatprep.subr.bf16.mxu0 0
  %739 = vmatpush1.bf16.xpose.msra.mxu0 0
  %740 = vmatprep.subr.bf16.mxu0 0
  %741 = vmatpush1.bf16.xpose.msra.mxu0 0
  %742 = vmatprep.subr.bf16.mxu0 0
  %743 = vmatpush1.bf16.xpose.msra.mxu0 0
  %744 = vmatprep.subr.bf16.mxu0 0
  %745 = vmatpush1.bf16.xpose.msra.mxu0 0
  %746 = vmatprep.subr.bf16.mxu0 0
  %747 = vmatpush1.bf16.xpose.msra.mxu0 0
  %748 = vmatprep.subr.bf16.mxu0 0
  %749 = vmatpush1.bf16.xpose.msra.mxu0 0
  %750 = vmatprep.subr.bf16.mxu0 0
  %751 = vmatpush1.bf16.xpose.msra.mxu0 0
  %752 = vmatprep.subr.bf16.mxu0 0
  %753 = vmatpush1.bf16.xpose.msra.mxu0 0
  %754 = vmatprep.subr.bf16.mxu0 0
  %755 = vmatpush1.bf16.xpose.msra.mxu0 0
  %756 = vmatprep.subr.bf16.mxu0 0
  %757 = vmatpush1.bf16.xpose.msra.mxu0 0
  %758 = vmatprep.subr.bf16.mxu0 0
  %759 = vmatpush1.bf16.xpose.msra.mxu0 0
  %760 = vmatprep.mubr.bf16.mxu0 0
  %761 = vmatmul.mubr.bf16.gmra.mrb[0].mxu0 %v723
  %v762 = vpop.f32.mrb[0].mxu0
  %v763 = vadd.f32 0.0, %v762
  %v764 = vpop.f32.mrb[0].mxu0
  %v765 = vpop.f32.mrb[0].mxu0
  %v766 = vpop.f32.mrb[0].mxu0
  %767 = vdwg.mxu0
  %v769 = vsel %vm302, %v717, 0
  %v772 = vsel %vm302, %v719, 0
  %774 = vmatprep.subr.bf16.mxu0 0
  %775 = vmatpush1.bf16.xpose.msra.mxu0 %v772
  %776 = vmatprep.subr.bf16.mxu0 0
  %777 = vmatpush1.bf16.xpose.msra.mxu0 0
  %778 = vmatprep.subr.bf16.mxu0 0
  %779 = vmatpush1.bf16.xpose.msra.mxu0 0
  %780 = vmatprep.subr.bf16.mxu0 0
  %781 = vmatpush1.bf16.xpose.msra.mxu0 0
  %782 = vmatprep.subr.bf16.mxu0 0
  %783 = vmatpush1.bf16.xpose.msra.mxu0 0
  %784 = vmatprep.subr.bf16.mxu0 0
  %785 = vmatpush1.bf16.xpose.msra.mxu0 0
  %786 = vmatprep.subr.bf16.mxu0 0
  %787 = vmatpush1.bf16.xpose.msra.mxu0 0
  %788 = vmatprep.subr.bf16.mxu0 0
  %789 = vmatpush1.bf16.xpose.msra.mxu0 0
  %790 = vmatprep.subr.bf16.mxu0 0
  %791 = vmatpush1.bf16.xpose.msra.mxu0 0
  %792 = vmatprep.subr.bf16.mxu0 0
  %793 = vmatpush1.bf16.xpose.msra.mxu0 0
  %794 = vmatprep.subr.bf16.mxu0 0
  %795 = vmatpush1.bf16.xpose.msra.mxu0 0
  %796 = vmatprep.subr.bf16.mxu0 0
  %797 = vmatpush1.bf16.xpose.msra.mxu0 0
  %798 = vmatprep.subr.bf16.mxu0 0
  %799 = vmatpush1.bf16.xpose.msra.mxu0 0
  %800 = vmatprep.subr.bf16.mxu0 0
  %801 = vmatpush1.bf16.xpose.msra.mxu0 0
  %802 = vmatprep.subr.bf16.mxu0 0
  %803 = vmatpush1.bf16.xpose.msra.mxu0 0
  %804 = vmatprep.subr.bf16.mxu0 0
  %805 = vmatpush1.bf16.xpose.msra.mxu0 0
  %806 = vmatprep.mubr.bf16.mxu0 0
  %807 = vmatmul.mubr.bf16.gmra.mrb[0].mxu0 %v769
  %v808 = vpop.f32.mrb[0].mxu0
  %v809 = vadd.f32 0.0, %v808
  %v810 = vpop.f32.mrb[0].mxu0
  %v811 = vpop.f32.mrb[0].mxu0
  %v812 = vpop.f32.mrb[0].mxu0
  %813 = vdwg.mxu0
  %v814 = vmul.f32 %v763, 0.35355338
  %v815 = vmul.f32 %v809, 0.35355338
  %v816 = vadd.f32 %v814, %v94
  %v817 = vadd.f32 %v815, %v95
  %v818 = vsel %vm302, %v816, -inf
  %819 = vmax.xlane.f32.xlu0 %v818
  %v820 = vpop.xlane.xlu0 %819
  %v821 = vsel %vm302, %v817, -inf
  %822 = vmax.xlane.f32.xlu0 %v821
  %v823 = vpop.xlane.xlu0 %822
  %v824 = vsub.f32 %v816, %v820
  %v825 = vsub.f32 %v817, %v823
  %v826 = vmul.f32 %v824, 1.442695
  %v827 = vpow.pop %v826
  %v828 = vmul.f32 %v825, 1.442695
  %v829 = vpow.pop %v828
  %v830 = vsel %vm302, %v827, 0.0
  %831 = vadd.xlane.f32.xlu0 %v830
  %v832 = vpop.xlane.xlu0 %831
  %v833 = vsel %vm302, %v829, 0.0
  %834 = vadd.xlane.f32.xlu0 %v833
  %v835 = vpop.xlane.xlu0 %834
  %v836 = vrcp.pop %v832
  %v837 = vrcp.pop %v835
  %v838 = vmul.f32 %v827, %v836
  %v839 = vmul.f32 %v829, %v837
  %v840 = vpack.c.bf16 %v838, %v838
  %v841 = vpack.c.bf16 %v839, %v839
  %v843 = vsel %vm302, %v840, 0
  %v846 = vsel %vm426, %v720, 0
  %848 = vmatprep.subr.bf16.mxu0 0
  %849 = vmatpush1.bf16.msra.mxu0 %v846
  %850 = vmatprep.subr.bf16.mxu0 0
  %851 = vmatpush1.bf16.msra.mxu0 0
  %852 = vmatprep.subr.bf16.mxu0 0
  %853 = vmatpush1.bf16.msra.mxu0 0
  %854 = vmatprep.subr.bf16.mxu0 0
  %855 = vmatpush1.bf16.msra.mxu0 0
  %856 = vmatprep.subr.bf16.mxu0 0
  %857 = vmatpush1.bf16.msra.mxu0 0
  %858 = vmatprep.subr.bf16.mxu0 0
  %859 = vmatpush1.bf16.msra.mxu0 0
  %860 = vmatprep.subr.bf16.mxu0 0
  %861 = vmatpush1.bf16.msra.mxu0 0
  %862 = vmatprep.subr.bf16.mxu0 0
  %863 = vmatpush1.bf16.msra.mxu0 0
  %864 = vmatprep.subr.bf16.mxu0 0
  %865 = vmatpush1.bf16.msra.mxu0 0
  %866 = vmatprep.subr.bf16.mxu0 0
  %867 = vmatpush1.bf16.msra.mxu0 0
  %868 = vmatprep.subr.bf16.mxu0 0
  %869 = vmatpush1.bf16.msra.mxu0 0
  %870 = vmatprep.subr.bf16.mxu0 0
  %871 = vmatpush1.bf16.msra.mxu0 0
  %872 = vmatprep.subr.bf16.mxu0 0
  %873 = vmatpush1.bf16.msra.mxu0 0
  %874 = vmatprep.subr.bf16.mxu0 0
  %875 = vmatpush1.bf16.msra.mxu0 0
  %876 = vmatprep.subr.bf16.mxu0 0
  %877 = vmatpush1.bf16.msra.mxu0 0
  %878 = vmatprep.subr.bf16.mxu0 0
  %879 = vmatpush1.bf16.msra.mxu0 0
  %880 = vmatprep.mubr.bf16.mxu0 0
  %881 = vmatmul.mubr.bf16.gmra.mrb[0].mxu0 %v843
  %v882 = vpop.f32.mrb[0].mxu0
  %v883 = vadd.f32 0.0, %v882
  %v884 = vpop.f32.mrb[0].mxu0
  %v885 = vpop.f32.mrb[0].mxu0
  %v886 = vpop.f32.mrb[0].mxu0
  %887 = vdwg.mxu0
  %v889 = vsel %vm302, %v841, 0
  %v892 = vsel %vm426, %v721, 0
  %894 = vmatprep.subr.bf16.mxu0 0
  %895 = vmatpush1.bf16.msra.mxu0 %v892
  %896 = vmatprep.subr.bf16.mxu0 0
  %897 = vmatpush1.bf16.msra.mxu0 0
  %898 = vmatprep.subr.bf16.mxu0 0
  %899 = vmatpush1.bf16.msra.mxu0 0
  %900 = vmatprep.subr.bf16.mxu0 0
  %901 = vmatpush1.bf16.msra.mxu0 0
  %902 = vmatprep.subr.bf16.mxu0 0
  %903 = vmatpush1.bf16.msra.mxu0 0
  %904 = vmatprep.subr.bf16.mxu0 0
  %905 = vmatpush1.bf16.msra.mxu0 0
  %906 = vmatprep.subr.bf16.mxu0 0
  %907 = vmatpush1.bf16.msra.mxu0 0
  %908 = vmatprep.subr.bf16.mxu0 0
  %909 = vmatpush1.bf16.msra.mxu0 0
  %910 = vmatprep.subr.bf16.mxu0 0
  %911 = vmatpush1.bf16.msra.mxu0 0
  %912 = vmatprep.subr.bf16.mxu0 0
  %913 = vmatpush1.bf16.msra.mxu0 0
  %914 = vmatprep.subr.bf16.mxu0 0
  %915 = vmatpush1.bf16.msra.mxu0 0
  %916 = vmatprep.subr.bf16.mxu0 0
  %917 = vmatpush1.bf16.msra.mxu0 0
  %918 = vmatprep.subr.bf16.mxu0 0
  %919 = vmatpush1.bf16.msra.mxu0 0
  %920 = vmatprep.subr.bf16.mxu0 0
  %921 = vmatpush1.bf16.msra.mxu0 0
  %922 = vmatprep.subr.bf16.mxu0 0
  %923 = vmatpush1.bf16.msra.mxu0 0
  %924 = vmatprep.subr.bf16.mxu0 0
  %925 = vmatpush1.bf16.msra.mxu0 0
  %926 = vmatprep.mubr.bf16.mxu0 0
  %927 = vmatmul.mubr.bf16.gmra.mrb[0].mxu0 %v889
  %v928 = vpop.f32.mrb[0].mxu0
  %v929 = vadd.f32 0.0, %v928
  %v930 = vpop.f32.mrb[0].mxu0
  %v931 = vpop.f32.mrb[0].mxu0
  %v932 = vpop.f32.mrb[0].mxu0
  %933 = vdwg.mxu0
  %v934 = vpack.c.bf16 %v929, %v883
  %s935 = scalar_lea.vmem %s5, 4
  %v936 = vld [vmem:[%s935] sm:$0xf]
  %v938 = vsel %vm302, %v934, 0
  %v941 = vsel %vm426, %v936, 0
  %943 = vmatprep.subr.bf16.mxu0 0
  %944 = vmatpush1.bf16.msra.mxu0 %v941
  %945 = vmatprep.subr.bf16.mxu0 0
  %946 = vmatpush1.bf16.msra.mxu0 0
  %947 = vmatprep.subr.bf16.mxu0 0
  %948 = vmatpush1.bf16.msra.mxu0 0
  %949 = vmatprep.subr.bf16.mxu0 0
  %950 = vmatpush1.bf16.msra.mxu0 0
  %951 = vmatprep.subr.bf16.mxu0 0
  %952 = vmatpush1.bf16.msra.mxu0 0
  %953 = vmatprep.subr.bf16.mxu0 0
  %954 = vmatpush1.bf16.msra.mxu0 0
  %955 = vmatprep.subr.bf16.mxu0 0
  %956 = vmatpush1.bf16.msra.mxu0 0
  %957 = vmatprep.subr.bf16.mxu0 0
  %958 = vmatpush1.bf16.msra.mxu0 0
  %959 = vmatprep.subr.bf16.mxu0 0
  %960 = vmatpush1.bf16.msra.mxu0 0
  %961 = vmatprep.subr.bf16.mxu0 0
  %962 = vmatpush1.bf16.msra.mxu0 0
  %963 = vmatprep.subr.bf16.mxu0 0
  %964 = vmatpush1.bf16.msra.mxu0 0
  %965 = vmatprep.subr.bf16.mxu0 0
  %966 = vmatpush1.bf16.msra.mxu0 0
  %967 = vmatprep.subr.bf16.mxu0 0
  %968 = vmatpush1.bf16.msra.mxu0 0
  %969 = vmatprep.subr.bf16.mxu0 0
  %970 = vmatpush1.bf16.msra.mxu0 0
  %971 = vmatprep.subr.bf16.mxu0 0
  %972 = vmatpush1.bf16.msra.mxu0 0
  %973 = vmatprep.subr.bf16.mxu0 0
  %974 = vmatpush1.bf16.msra.mxu0 0
  %975 = vmatprep.mubr.bf16.mxu0 0
  %976 = vmatmul.mubr.bf16.gmra.mrb[0].mxu0 %v938
  %v977 = vpop.f32.mrb[0].mxu0
  %v978 = vadd.f32 0.0, %v977
  %v979 = vpop.f32.mrb[0].mxu0
  %v980 = vpop.f32.mrb[0].mxu0
  %v981 = vadd.f32 0.0, %v980
  %v982 = vpop.f32.mrb[0].mxu0
  %983 = vdwg.mxu0
  %v985 = vsel %vm302, %v516, 0
  %v988 = vsel %vm426, %v517, 0
  %990 = vmatprep.subr.bf16.mxu0 0
  %991 = vmatpush1.bf16.msra.mxu0 %v988
  %992 = vmatprep.subr.bf16.mxu0 0
  %993 = vmatpush1.bf16.msra.mxu0 0
  %994 = vmatprep.subr.bf16.mxu0 0
  %995 = vmatpush1.bf16.msra.mxu0 0
  %996 = vmatprep.subr.bf16.mxu0 0
  %997 = vmatpush1.bf16.msra.mxu0 0
  %998 = vmatprep.subr.bf16.mxu0 0
  %999 = vmatpush1.bf16.msra.mxu0 0
  %1000 = vmatprep.subr.bf16.mxu0 0
  %1001 = vmatpush1.bf16.msra.mxu0 0
  %1002 = vmatprep.subr.bf16.mxu0 0
  %1003 = vmatpush1.bf16.msra.mxu0 0
  %1004 = vmatprep.subr.bf16.mxu0 0
  %1005 = vmatpush1.bf16.msra.mxu0 0
  %1006 = vmatprep.subr.bf16.mxu0 0
  %1007 = vmatpush1.bf16.msra.mxu0 0
  %1008 = vmatprep.subr.bf16.mxu0 0
  %1009 = vmatpush1.bf16.msra.mxu0 0
  %1010 = vmatprep.subr.bf16.mxu0 0
  %1011 = vmatpush1.bf16.msra.mxu0 0
  %1012 = vmatprep.subr.bf16.mxu0 0
  %1013 = vmatpush1.bf16.msra.mxu0 0
  %1014 = vmatprep.subr.bf16.mxu0 0
  %1015 = vmatpush1.bf16.msra.mxu0 0
  %1016 = vmatprep.subr.bf16.mxu0 0
  %1017 = vmatpush1.bf16.msra.mxu0 0
  %1018 = vmatprep.subr.bf16.mxu0 0
  %1019 = vmatpush1.bf16.msra.mxu0 0
  %1020 = vmatprep.subr.bf16.mxu0 0
  %1021 = vmatpush1.bf16.msra.mxu0 0
  %1022 = vmatprep.mubr.bf16.mxu0 0
  %1023 = vmatmul.mubr.bf16.gmra.mrb[0].mxu0 %v985
  %v1024 = vpop.f32.mrb[0].mxu0
  %v1025 = vadd.f32 %v978, %v1024
  %v1026 = vpop.f32.mrb[0].mxu0
  %v1027 = vpop.f32.mrb[0].mxu0
  %v1028 = vadd.f32 %v981, %v1027
  %v1029 = vpop.f32.mrb[0].mxu0
  %1030 = vdwg.mxu0
  %s1031 = scalar_lea.vmem %s3, 32
  %v1032 = vld [vmem:[%s1031] sm:$0xf]
  %v1033 = vld [vmem:[%s1031 + $0x4] sm:$0xf]
  %v1034 = vld [vmem:[%s1031 + $0x8] sm:$0xf]
  %v1035 = vld [vmem:[%s1031 + $0xc] sm:$0xf]
  %s1036 = scalar_lea.vmem %s4, 2
  %v1037 = vld [vmem:[%s1036] sm:$0x1]
  %v1039 = vlaneseq
  %v1040 = vshrl.u32 %v1039, 7
  %v1041 = vsub.s32 0, %v1040
  %v1042 = vrot.slane %v1037, %v1041
  %v1048 = vunpack.c.l.b16 %v1032
  %v1049 = vunpack.c.l.b16 %v1033
  %v1050 = vunpack.c.l.b16 %v1034
  %v1051 = vunpack.c.l.b16 %v1035
  %v1052 = vpack.c.b16 %v1049, %v1048
  %v1053 = vpack.c.b16 %v1051, %v1050
  %1056 = vmatprep.subr.bf16.mxu0 0
  %1057 = vmatpush1.bf16.msra.mxu0 %v1052
  %1058 = vmatprep.subr.bf16.mxu0 0
  %1059 = vmatpush1.bf16.msra.mxu0 %v1053
  %1060 = vmatprep.subr.bf16.mxu0 0
  %1061 = vmatpush1.bf16.msra.mxu0 0
  %1062 = vmatprep.subr.bf16.mxu0 0
  %1063 = vmatpush1.bf16.msra.mxu0 0
  %1064 = vmatprep.subr.bf16.mxu0 0
  %1065 = vmatpush1.bf16.msra.mxu0 0
  %1066 = vmatprep.subr.bf16.mxu0 0
  %1067 = vmatpush1.bf16.msra.mxu0 0
  %1068 = vmatprep.subr.bf16.mxu0 0
  %1069 = vmatpush1.bf16.msra.mxu0 0
  %1070 = vmatprep.subr.bf16.mxu0 0
  %1071 = vmatpush1.bf16.msra.mxu0 0
  %1072 = vmatprep.subr.bf16.mxu0 0
  %1073 = vmatpush1.bf16.msra.mxu0 0
  %1074 = vmatprep.subr.bf16.mxu0 0
  %1075 = vmatpush1.bf16.msra.mxu0 0
  %1076 = vmatprep.subr.bf16.mxu0 0
  %1077 = vmatpush1.bf16.msra.mxu0 0
  %1078 = vmatprep.subr.bf16.mxu0 0
  %1079 = vmatpush1.bf16.msra.mxu0 0
  %1080 = vmatprep.subr.bf16.mxu0 0
  %1081 = vmatpush1.bf16.msra.mxu0 0
  %1082 = vmatprep.subr.bf16.mxu0 0
  %1083 = vmatpush1.bf16.msra.mxu0 0
  %1084 = vmatprep.subr.bf16.mxu0 0
  %1085 = vmatpush1.bf16.msra.mxu0 0
  %1086 = vmatprep.subr.bf16.mxu0 0
  %1087 = vmatpush1.bf16.msra.mxu0 0
  %1088 = vmatprep.mubr.bf16.mxu0 0
  %1089 = vmatmul.mubr.bf16.gmra.mrb[0].mxu0 %v121
  %v1090 = vpop.f32.mrb[0].mxu0
  %v1091 = vadd.f32 %v1042, %v1090
  %v1092 = vpop.f32.mrb[0].mxu0
  %v1093 = vpop.f32.mrb[0].mxu0
  %v1094 = vadd.f32 %v1042, %v1093
  %v1095 = vpop.f32.mrb[0].mxu0
  %1096 = vdwg.mxu0
  %s1097 = scalar_lea.vmem %s3, 96
  %v1098 = vld [vmem:[%s1097] sm:$0xf]
  %v1099 = vld [vmem:[%s1097 + $0x4] sm:$0xf]
  %v1100 = vld [vmem:[%s1097 + $0x8] sm:$0xf]
  %v1101 = vld [vmem:[%s1097 + $0xc] sm:$0xf]
  %s1102 = scalar_lea.vmem %s4, 6
  %v1103 = vld [vmem:[%s1102] sm:$0x1]
  %v1105 = vlaneseq
  %v1106 = vshrl.u32 %v1105, 7
  %v1107 = vsub.s32 0, %v1106
  %v1108 = vrot.slane %v1103, %v1107
  %v1114 = vunpack.c.l.b16 %v1098
  %v1115 = vunpack.c.l.b16 %v1099
  %v1116 = vunpack.c.l.b16 %v1100
  %v1117 = vunpack.c.l.b16 %v1101
  %v1118 = vpack.c.b16 %v1115, %v1114
  %v1119 = vpack.c.b16 %v1117, %v1116
  %1122 = vmatprep.subr.bf16.mxu0 0
  %1123 = vmatpush1.bf16.msra.mxu0 %v1118
  %1124 = vmatprep.subr.bf16.mxu0 0
  %1125 = vmatpush1.bf16.msra.mxu0 %v1119
  %1126 = vmatprep.subr.bf16.mxu0 0
  %1127 = vmatpush1.bf16.msra.mxu0 0
  %1128 = vmatprep.subr.bf16.mxu0 0
  %1129 = vmatpush1.bf16.msra.mxu0 0
  %1130 = vmatprep.subr.bf16.mxu0 0
  %1131 = vmatpush1.bf16.msra.mxu0 0
  %1132 = vmatprep.subr.bf16.mxu0 0
  %1133 = vmatpush1.bf16.msra.mxu0 0
  %1134 = vmatprep.subr.bf16.mxu0 0
  %1135 = vmatpush1.bf16.msra.mxu0 0
  %1136 = vmatprep.subr.bf16.mxu0 0
  %1137 = vmatpush1.bf16.msra.mxu0 0
  %1138 = vmatprep.subr.bf16.mxu0 0
  %1139 = vmatpush1.bf16.msra.mxu0 0
  %1140 = vmatprep.subr.bf16.mxu0 0
  %1141 = vmatpush1.bf16.msra.mxu0 0
  %1142 = vmatprep.subr.bf16.mxu0 0
  %1143 = vmatpush1.bf16.msra.mxu0 0
  %1144 = vmatprep.subr.bf16.mxu0 0
  %1145 = vmatpush1.bf16.msra.mxu0 0
  %1146 = vmatprep.subr.bf16.mxu0 0
  %1147 = vmatpush1.bf16.msra.mxu0 0
  %1148 = vmatprep.subr.bf16.mxu0 0
  %1149 = vmatpush1.bf16.msra.mxu0 0
  %1150 = vmatprep.subr.bf16.mxu0 0
  %1151 = vmatpush1.bf16.msra.mxu0 0
  %1152 = vmatprep.subr.bf16.mxu0 0
  %1153 = vmatpush1.bf16.msra.mxu0 0
  %1154 = vmatprep.mubr.bf16.mxu0 0
  %1155 = vmatmul.mubr.bf16.gmra.mrb[0].mxu0 %v121
  %v1156 = vpop.f32.mrb[0].mxu0
  %v1157 = vadd.f32 %v1108, %v1156
  %v1158 = vpop.f32.mrb[0].mxu0
  %v1159 = vpop.f32.mrb[0].mxu0
  %v1160 = vadd.f32 %v1108, %v1159
  %v1161 = vpop.f32.mrb[0].mxu0
  %1162 = vdwg.mxu0
  %s1163 = scalar_lea.vmem %s3, 160
  %v1164 = vld [vmem:[%s1163] sm:$0xf]
  %v1165 = vld [vmem:[%s1163 + $0x4] sm:$0xf]
  %v1166 = vld [vmem:[%s1163 + $0x8] sm:$0xf]
  %v1167 = vld [vmem:[%s1163 + $0xc] sm:$0xf]
  %s1168 = scalar_lea.vmem %s4, 10
  %v1169 = vld [vmem:[%s1168] sm:$0x1]
  %v1171 = vlaneseq
  %v1172 = vshrl.u32 %v1171, 7
  %v1173 = vsub.s32 0, %v1172
  %v1174 = vrot.slane %v1169, %v1173
  %v1180 = vunpack.c.l.b16 %v1164
  %v1181 = vunpack.c.l.b16 %v1165
  %v1182 = vunpack.c.l.b16 %v1166
  %v1183 = vunpack.c.l.b16 %v1167
  %v1184 = vpack.c.b16 %v1181, %v1180
  %v1185 = vpack.c.b16 %v1183, %v1182
  %1188 = vmatprep.subr.bf16.mxu0 0
  %1189 = vmatpush1.bf16.msra.mxu0 %v1184
  %1190 = vmatprep.subr.bf16.mxu0 0
  %1191 = vmatpush1.bf16.msra.mxu0 %v1185
  %1192 = vmatprep.subr.bf16.mxu0 0
  %1193 = vmatpush1.bf16.msra.mxu0 0
  %1194 = vmatprep.subr.bf16.mxu0 0
  %1195 = vmatpush1.bf16.msra.mxu0 0
  %1196 = vmatprep.subr.bf16.mxu0 0
  %1197 = vmatpush1.bf16.msra.mxu0 0
  %1198 = vmatprep.subr.bf16.mxu0 0
  %1199 = vmatpush1.bf16.msra.mxu0 0
  %1200 = vmatprep.subr.bf16.mxu0 0
  %1201 = vmatpush1.bf16.msra.mxu0 0
  %1202 = vmatprep.subr.bf16.mxu0 0
  %1203 = vmatpush1.bf16.msra.mxu0 0
  %1204 = vmatprep.subr.bf16.mxu0 0
  %1205 = vmatpush1.bf16.msra.mxu0 0
  %1206 = vmatprep.subr.bf16.mxu0 0
  %1207 = vmatpush1.bf16.msra.mxu0 0
  %1208 = vmatprep.subr.bf16.mxu0 0
  %1209 = vmatpush1.bf16.msra.mxu0 0
  %1210 = vmatprep.subr.bf16.mxu0 0
  %1211 = vmatpush1.bf16.msra.mxu0 0
  %1212 = vmatprep.subr.bf16.mxu0 0
  %1213 = vmatpush1.bf16.msra.mxu0 0
  %1214 = vmatprep.subr.bf16.mxu0 0
  %1215 = vmatpush1.bf16.msra.mxu0 0
  %1216 = vmatprep.subr.bf16.mxu0 0
  %1217 = vmatpush1.bf16.msra.mxu0 0
  %1218 = vmatprep.subr.bf16.mxu0 0
  %1219 = vmatpush1.bf16.msra.mxu0 0
  %1220 = vmatprep.mubr.bf16.mxu0 0
  %1221 = vmatmul.mubr.bf16.gmra.mrb[0].mxu0 %v121
  %v1222 = vpop.f32.mrb[0].mxu0
  %v1223 = vadd.f32 %v1174, %v1222
  %v1224 = vpop.f32.mrb[0].mxu0
  %v1225 = vpop.f32.mrb[0].mxu0
  %v1226 = vadd.f32 %v1174, %v1225
  %v1227 = vpop.f32.mrb[0].mxu0
  %1228 = vdwg.mxu0
  %v1229 = vpack.c.bf16 %v1091, %v1091
  %v1230 = vpack.c.bf16 %v1094, %v1094
  %v1231 = vpack.c.bf16 %v1157, %v1157
  %v1232 = vpack.c.bf16 %v1160, %v1160
  %v1233 = vpack.c.bf16 %v1223, %v1223
  %v1234 = vpack.c.bf16 %v1226, %v1226
  %v1236 = vsel %vm302, %v1229, 0
  %v1239 = vsel %vm302, %v1231, 0
  %1241 = vmatprep.subr.bf16.mxu0 0
  %1242 = vmatpush1.bf16.xpose.msra.mxu0 %v1239
  %1243 = vmatprep.subr.bf16.mxu0 0
  %1244 = vmatpush1.bf16.xpose.msra.mxu0 0
  %1245 = vmatprep.subr.bf16.mxu0 0
  %1246 = vmatpush1.bf16.xpose.msra.mxu0 0
  %1247 = vmatprep.subr.bf16.mxu0 0
  %1248 = vmatpush1.bf16.xpose.msra.mxu0 0
  %1249 = vmatprep.subr.bf16.mxu0 0
  %1250 = vmatpush1.bf16.xpose.msra.mxu0 0
  %1251 = vmatprep.subr.bf16.mxu0 0
  %1252 = vmatpush1.bf16.xpose.msra.mxu0 0
  %1253 = vmatprep.subr.bf16.mxu0 0
  %1254 = vmatpush1.bf16.xpose.msra.mxu0 0
  %1255 = vmatprep.subr.bf16.mxu0 0
  %1256 = vmatpush1.bf16.xpose.msra.mxu0 0
  %1257 = vmatprep.subr.bf16.mxu0 0
  %1258 = vmatpush1.bf16.xpose.msra.mxu0 0
  %1259 = vmatprep.subr.bf16.mxu0 0
  %1260 = vmatpush1.bf16.xpose.msra.mxu0 0
  %1261 = vmatprep.subr.bf16.mxu0 0
  %1262 = vmatpush1.bf16.xpose.msra.mxu0 0
  %1263 = vmatprep.subr.bf16.mxu0 0
  %1264 = vmatpush1.bf16.xpose.msra.mxu0 0
  %1265 = vmatprep.subr.bf16.mxu0 0
  %1266 = vmatpush1.bf16.xpose.msra.mxu0 0
  %1267 = vmatprep.subr.bf16.mxu0 0
  %1268 = vmatpush1.bf16.xpose.msra.mxu0 0
  %1269 = vmatprep.subr.bf16.mxu0 0
  %1270 = vmatpush1.bf16.xpose.msra.mxu0 0
  %1271 = vmatprep.subr.bf16.mxu0 0
  %1272 = vmatpush1.bf16.xpose.msra.mxu0 0
  %1273 = vmatprep.mubr.bf16.mxu0 0
  %1274 = vmatmul.mubr.bf16.gmra.mrb[0].mxu0 %v1236
  %v1275 = vpop.f32.mrb[0].mxu0
  %v1276 = vadd.f32 0.0, %v1275
  %v1277 = vpop.f32.mrb[0].mxu0
  %v1278 = vpop.f32.mrb[0].mxu0
  %v1279 = vpop.f32.mrb[0].mxu0
  %1280 = vdwg.mxu0
  %v1282 = vsel %vm302, %v1230, 0
  %v1285 = vsel %vm302, %v1232, 0
  %1287 = vmatprep.subr.bf16.mxu0 0
  %1288 = vmatpush1.bf16.xpose.msra.mxu0 %v1285
  %1289 = vmatprep.subr.bf16.mxu0 0
  %1290 = vmatpush1.bf16.xpose.msra.mxu0 0
  %1291 = vmatprep.subr.bf16.mxu0 0
  %1292 = vmatpush1.bf16.xpose.msra.mxu0 0
  %1293 = vmatprep.subr.bf16.mxu0 0
  %1294 = vmatpush1.bf16.xpose.msra.mxu0 0
  %1295 = vmatprep.subr.bf16.mxu0 0
  %1296 = vmatpush1.bf16.xpose.msra.mxu0 0
  %1297 = vmatprep.subr.bf16.mxu0 0
  %1298 = vmatpush1.bf16.xpose.msra.mxu0 0
  %1299 = vmatprep.subr.bf16.mxu0 0
  %1300 = vmatpush1.bf16.xpose.msra.mxu0 0
  %1301 = vmatprep.subr.bf16.mxu0 0
  %1302 = vmatpush1.bf16.xpose.msra.mxu0 0
  %1303 = vmatprep.subr.bf16.mxu0 0
  %1304 = vmatpush1.bf16.xpose.msra.mxu0 0
  %1305 = vmatprep.subr.bf16.mxu0 0
  %1306 = vmatpush1.bf16.xpose.msra.mxu0 0
  %1307 = vmatprep.subr.bf16.mxu0 0
  %1308 = vmatpush1.bf16.xpose.msra.mxu0 0
  %1309 = vmatprep.subr.bf16.mxu0 0
  %1310 = vmatpush1.bf16.xpose.msra.mxu0 0
  %1311 = vmatprep.subr.bf16.mxu0 0
  %1312 = vmatpush1.bf16.xpose.msra.mxu0 0
  %1313 = vmatprep.subr.bf16.mxu0 0
  %1314 = vmatpush1.bf16.xpose.msra.mxu0 0
  %1315 = vmatprep.subr.bf16.mxu0 0
  %1316 = vmatpush1.bf16.xpose.msra.mxu0 0
  %1317 = vmatprep.subr.bf16.mxu0 0
  %1318 = vmatpush1.bf16.xpose.msra.mxu0 0
  %1319 = vmatprep.mubr.bf16.mxu0 0
  %1320 = vmatmul.mubr.bf16.gmra.mrb[0].mxu0 %v1282
  %v1321 = vpop.f32.mrb[0].mxu0
  %v1322 = vadd.f32 0.0, %v1321
  %v1323 = vpop.f32.mrb[0].mxu0
  %v1324 = vpop.f32.mrb[0].mxu0
  %v1325 = vpop.f32.mrb[0].mxu0
  %1326 = vdwg.mxu0
  %v1327 = vmul.f32 %v1276, 0.35355338
  %v1328 = vmul.f32 %v1322, 0.35355338
  %v1329 = vadd.f32 %v1327, %v94
  %v1330 = vadd.f32 %v1328, %v95
  %v1331 = vsel %vm302, %v1329, -inf
  %1332 = vmax.xlane.f32.xlu0 %v1331
  %v1333 = vpop.xlane.xlu0 %1332
  %v1334 = vsel %vm302, %v1330, -inf
  %1335 = vmax.xlane.f32.xlu0 %v1334
  %v1336 = vpop.xlane.xlu0 %1335
  %v1337 = vsub.f32 %v1329, %v1333
  %v1338 = vsub.f32 %v1330, %v1336
  %v1339 = vmul.f32 %v1337, 1.442695
  %v1340 = vpow.pop %v1339
  %v1341 = vmul.f32 %v1338, 1.442695
  %v1342 = vpow.pop %v1341
  %v1343 = vsel %vm302, %v1340, 0.0
  %1344 = vadd.xlane.f32.xlu0 %v1343
  %v1345 = vpop.xlane.xlu0 %1344
  %v1346 = vsel %vm302, %v1342, 0.0
  %1347 = vadd.xlane.f32.xlu0 %v1346
  %v1348 = vpop.xlane.xlu0 %1347
  %v1349 = vrcp.pop %v1345
  %v1350 = vrcp.pop %v1348
  %v1351 = vmul.f32 %v1340, %v1349
  %v1352 = vmul.f32 %v1342, %v1350
  %v1353 = vpack.c.bf16 %v1351, %v1351
  %v1354 = vpack.c.bf16 %v1352, %v1352
  %v1356 = vsel %vm302, %v1353, 0
  %v1359 = vsel %vm426, %v1233, 0
  %1361 = vmatprep.subr.bf16.mxu0 0
  %1362 = vmatpush1.bf16.msra.mxu0 %v1359
  %1363 = vmatprep.subr.bf16.mxu0 0
  %1364 = vmatpush1.bf16.msra.mxu0 0
  %1365 = vmatprep.subr.bf16.mxu0 0
  %1366 = vmatpush1.bf16.msra.mxu0 0
  %1367 = vmatprep.subr.bf16.mxu0 0
  %1368 = vmatpush1.bf16.msra.mxu0 0
  %1369 = vmatprep.subr.bf16.mxu0 0
  %1370 = vmatpush1.bf16.msra.mxu0 0
  %1371 = vmatprep.subr.bf16.mxu0 0
  %1372 = vmatpush1.bf16.msra.mxu0 0
  %1373 = vmatprep.subr.bf16.mxu0 0
  %1374 = vmatpush1.bf16.msra.mxu0 0
  %1375 = vmatprep.subr.bf16.mxu0 0
  %1376 = vmatpush1.bf16.msra.mxu0 0
  %1377 = vmatprep.subr.bf16.mxu0 0
  %1378 = vmatpush1.bf16.msra.mxu0 0
  %1379 = vmatprep.subr.bf16.mxu0 0
  %1380 = vmatpush1.bf16.msra.mxu0 0
  %1381 = vmatprep.subr.bf16.mxu0 0
  %1382 = vmatpush1.bf16.msra.mxu0 0
  %1383 = vmatprep.subr.bf16.mxu0 0
  %1384 = vmatpush1.bf16.msra.mxu0 0
  %1385 = vmatprep.subr.bf16.mxu0 0
  %1386 = vmatpush1.bf16.msra.mxu0 0
  %1387 = vmatprep.subr.bf16.mxu0 0
  %1388 = vmatpush1.bf16.msra.mxu0 0
  %1389 = vmatprep.subr.bf16.mxu0 0
  %1390 = vmatpush1.bf16.msra.mxu0 0
  %1391 = vmatprep.subr.bf16.mxu0 0
  %1392 = vmatpush1.bf16.msra.mxu0 0
  %1393 = vmatprep.mubr.bf16.mxu0 0
  %1394 = vmatmul.mubr.bf16.gmra.mrb[0].mxu0 %v1356
  %v1395 = vpop.f32.mrb[0].mxu0
  %v1396 = vadd.f32 0.0, %v1395
  %v1397 = vpop.f32.mrb[0].mxu0
  %v1398 = vpop.f32.mrb[0].mxu0
  %v1399 = vpop.f32.mrb[0].mxu0
  %1400 = vdwg.mxu0
  %v1402 = vsel %vm302, %v1354, 0
  %v1405 = vsel %vm426, %v1234, 0
  %1407 = vmatprep.subr.bf16.mxu0 0
  %1408 = vmatpush1.bf16.msra.mxu0 %v1405
  %1409 = vmatprep.subr.bf16.mxu0 0
  %1410 = vmatpush1.bf16.msra.mxu0 0
  %1411 = vmatprep.subr.bf16.mxu0 0
  %1412 = vmatpush1.bf16.msra.mxu0 0
  %1413 = vmatprep.subr.bf16.mxu0 0
  %1414 = vmatpush1.bf16.msra.mxu0 0
  %1415 = vmatprep.subr.bf16.mxu0 0
  %1416 = vmatpush1.bf16.msra.mxu0 0
  %1417 = vmatprep.subr.bf16.mxu0 0
  %1418 = vmatpush1.bf16.msra.mxu0 0
  %1419 = vmatprep.subr.bf16.mxu0 0
  %1420 = vmatpush1.bf16.msra.mxu0 0
  %1421 = vmatprep.subr.bf16.mxu0 0
  %1422 = vmatpush1.bf16.msra.mxu0 0
  %1423 = vmatprep.subr.bf16.mxu0 0
  %1424 = vmatpush1.bf16.msra.mxu0 0
  %1425 = vmatprep.subr.bf16.mxu0 0
  %1426 = vmatpush1.bf16.msra.mxu0 0
  %1427 = vmatprep.subr.bf16.mxu0 0
  %1428 = vmatpush1.bf16.msra.mxu0 0
  %1429 = vmatprep.subr.bf16.mxu0 0
  %1430 = vmatpush1.bf16.msra.mxu0 0
  %1431 = vmatprep.subr.bf16.mxu0 0
  %1432 = vmatpush1.bf16.msra.mxu0 0
  %1433 = vmatprep.subr.bf16.mxu0 0
  %1434 = vmatpush1.bf16.msra.mxu0 0
  %1435 = vmatprep.subr.bf16.mxu0 0
  %1436 = vmatpush1.bf16.msra.mxu0 0
  %1437 = vmatprep.subr.bf16.mxu0 0
  %1438 = vmatpush1.bf16.msra.mxu0 0
  %1439 = vmatprep.mubr.bf16.mxu0 0
  %1440 = vmatmul.mubr.bf16.gmra.mrb[0].mxu0 %v1402
  %v1441 = vpop.f32.mrb[0].mxu0
  %v1442 = vadd.f32 0.0, %v1441
  %v1443 = vpop.f32.mrb[0].mxu0
  %v1444 = vpop.f32.mrb[0].mxu0
  %v1445 = vpop.f32.mrb[0].mxu0
  %1446 = vdwg.mxu0
  %v1447 = vpack.c.bf16 %v1442, %v1396
  %s1448 = scalar_lea.vmem %s5, 8
  %v1449 = vld [vmem:[%s1448] sm:$0xf]
  %v1451 = vsel %vm302, %v1447, 0
  %v1454 = vsel %vm426, %v1449, 0
  %1456 = vmatprep.subr.bf16.mxu0 0
  %1457 = vmatpush1.bf16.msra.mxu0 %v1454
  %1458 = vmatprep.subr.bf16.mxu0 0
  %1459 = vmatpush1.bf16.msra.mxu0 0
  %1460 = vmatprep.subr.bf16.mxu0 0
  %1461 = vmatpush1.bf16.msra.mxu0 0
  %1462 = vmatprep.subr.bf16.mxu0 0
  %1463 = vmatpush1.bf16.msra.mxu0 0
  %1464 = vmatprep.subr.bf16.mxu0 0
  %1465 = vmatpush1.bf16.msra.mxu0 0
  %1466 = vmatprep.subr.bf16.mxu0 0
  %1467 = vmatpush1.bf16.msra.mxu0 0
  %1468 = vmatprep.subr.bf16.mxu0 0
  %1469 = vmatpush1.bf16.msra.mxu0 0
  %1470 = vmatprep.subr.bf16.mxu0 0
  %1471 = vmatpush1.bf16.msra.mxu0 0
  %1472 = vmatprep.subr.bf16.mxu0 0
  %1473 = vmatpush1.bf16.msra.mxu0 0
  %1474 = vmatprep.subr.bf16.mxu0 0
  %1475 = vmatpush1.bf16.msra.mxu0 0
  %1476 = vmatprep.subr.bf16.mxu0 0
  %1477 = vmatpush1.bf16.msra.mxu0 0
  %1478 = vmatprep.subr.bf16.mxu0 0
  %1479 = vmatpush1.bf16.msra.mxu0 0
  %1480 = vmatprep.subr.bf16.mxu0 0
  %1481 = vmatpush1.bf16.msra.mxu0 0
  %1482 = vmatprep.subr.bf16.mxu0 0
  %1483 = vmatpush1.bf16.msra.mxu0 0
  %1484 = vmatprep.subr.bf16.mxu0 0
  %1485 = vmatpush1.bf16.msra.mxu0 0
  %1486 = vmatprep.subr.bf16.mxu0 0
  %1487 = vmatpush1.bf16.msra.mxu0 0
  %1488 = vmatprep.mubr.bf16.mxu0 0
  %1489 = vmatmul.mubr.bf16.gmra.mrb[0].mxu0 %v1451
  %v1490 = vpop.f32.mrb[0].mxu0
  %v1491 = vadd.f32 0.0, %v1490
  %v1492 = vpop.f32.mrb[0].mxu0
  %v1493 = vpop.f32.mrb[0].mxu0
  %v1494 = vadd.f32 0.0, %v1493
  %v1495 = vpop.f32.mrb[0].mxu0
  %1496 = vdwg.mxu0
  %v1497 = vadd.f32 %v1025, %v1491
  %v1498 = vadd.f32 %v1028, %v1494
  %s1499 = scalar_lea.vmem %s3, 48
  %v1500 = vld [vmem:[%s1499] sm:$0xf]
  %v1501 = vld [vmem:[%s1499 + $0x4] sm:$0xf]
  %v1502 = vld [vmem:[%s1499 + $0x8] sm:$0xf]
  %v1503 = vld [vmem:[%s1499 + $0xc] sm:$0xf]
  %s1504 = scalar_lea.vmem %s4, 3
  %v1505 = vld [vmem:[%s1504] sm:$0x1]
  %v1507 = vlaneseq
  %v1508 = vshrl.u32 %v1507, 7
  %v1509 = vsub.s32 0, %v1508
  %v1510 = vrot.slane %v1505, %v1509
  %v1516 = vunpack.c.l.b16 %v1500
  %v1517 = vunpack.c.l.b16 %v1501
  %v1518 = vunpack.c.l.b16 %v1502
  %v1519 = vunpack.c.l.b16 %v1503
  %v1520 = vpack.c.b16 %v1517, %v1516
  %v1521 = vpack.c.b16 %v1519, %v1518
  %1524 = vmatprep.subr.bf16.mxu0 0
  %1525 = vmatpush1.bf16.msra.mxu0 %v1520
  %1526 = vmatprep.subr.bf16.mxu0 0
  %1527 = vmatpush1.bf16.msra.mxu0 %v1521
  %1528 = vmatprep.subr.bf16.mxu0 0
  %1529 = vmatpush1.bf16.msra.mxu0 0
  %1530 = vmatprep.subr.bf16.mxu0 0
  %1531 = vmatpush1.bf16.msra.mxu0 0
  %1532 = vmatprep.subr.bf16.mxu0 0
  %1533 = vmatpush1.bf16.msra.mxu0 0
  %1534 = vmatprep.subr.bf16.mxu0 0
  %1535 = vmatpush1.bf16.msra.mxu0 0
  %1536 = vmatprep.subr.bf16.mxu0 0
  %1537 = vmatpush1.bf16.msra.mxu0 0
  %1538 = vmatprep.subr.bf16.mxu0 0
  %1539 = vmatpush1.bf16.msra.mxu0 0
  %1540 = vmatprep.subr.bf16.mxu0 0
  %1541 = vmatpush1.bf16.msra.mxu0 0
  %1542 = vmatprep.subr.bf16.mxu0 0
  %1543 = vmatpush1.bf16.msra.mxu0 0
  %1544 = vmatprep.subr.bf16.mxu0 0
  %1545 = vmatpush1.bf16.msra.mxu0 0
  %1546 = vmatprep.subr.bf16.mxu0 0
  %1547 = vmatpush1.bf16.msra.mxu0 0
  %1548 = vmatprep.subr.bf16.mxu0 0
  %1549 = vmatpush1.bf16.msra.mxu0 0
  %1550 = vmatprep.subr.bf16.mxu0 0
  %1551 = vmatpush1.bf16.msra.mxu0 0
  %1552 = vmatprep.subr.bf16.mxu0 0
  %1553 = vmatpush1.bf16.msra.mxu0 0
  %1554 = vmatprep.subr.bf16.mxu0 0
  %1555 = vmatpush1.bf16.msra.mxu0 0
  %1556 = vmatprep.mubr.bf16.mxu0 0
  %1557 = vmatmul.mubr.bf16.gmra.mrb[0].mxu0 %v121
  %v1558 = vpop.f32.mrb[0].mxu0
  %v1559 = vadd.f32 %v1510, %v1558
  %v1560 = vpop.f32.mrb[0].mxu0
  %v1561 = vpop.f32.mrb[0].mxu0
  %v1562 = vadd.f32 %v1510, %v1561
  %v1563 = vpop.f32.mrb[0].mxu0
  %1564 = vdwg.mxu0
  %s1565 = scalar_lea.vmem %s3, 112
  %v1566 = vld [vmem:[%s1565] sm:$0xf]
  %v1567 = vld [vmem:[%s1565 + $0x4] sm:$0xf]
  %v1568 = vld [vmem:[%s1565 + $0x8] sm:$0xf]
  %v1569 = vld [vmem:[%s1565 + $0xc] sm:$0xf]
  %s1570 = scalar_lea.vmem %s4, 7
  %v1571 = vld [vmem:[%s1570] sm:$0x1]
  %v1573 = vlaneseq
  %v1574 = vshrl.u32 %v1573, 7
  %v1575 = vsub.s32 0, %v1574
  %v1576 = vrot.slane %v1571, %v1575
  %v1582 = vunpack.c.l.b16 %v1566
  %v1583 = vunpack.c.l.b16 %v1567
  %v1584 = vunpack.c.l.b16 %v1568
  %v1585 = vunpack.c.l.b16 %v1569
  %v1586 = vpack.c.b16 %v1583, %v1582
  %v1587 = vpack.c.b16 %v1585, %v1584
  %1590 = vmatprep.subr.bf16.mxu0 0
  %1591 = vmatpush1.bf16.msra.mxu0 %v1586
  %1592 = vmatprep.subr.bf16.mxu0 0
  %1593 = vmatpush1.bf16.msra.mxu0 %v1587
  %1594 = vmatprep.subr.bf16.mxu0 0
  %1595 = vmatpush1.bf16.msra.mxu0 0
  %1596 = vmatprep.subr.bf16.mxu0 0
  %1597 = vmatpush1.bf16.msra.mxu0 0
  %1598 = vmatprep.subr.bf16.mxu0 0
  %1599 = vmatpush1.bf16.msra.mxu0 0
  %1600 = vmatprep.subr.bf16.mxu0 0
  %1601 = vmatpush1.bf16.msra.mxu0 0
  %1602 = vmatprep.subr.bf16.mxu0 0
  %1603 = vmatpush1.bf16.msra.mxu0 0
  %1604 = vmatprep.subr.bf16.mxu0 0
  %1605 = vmatpush1.bf16.msra.mxu0 0
  %1606 = vmatprep.subr.bf16.mxu0 0
  %1607 = vmatpush1.bf16.msra.mxu0 0
  %1608 = vmatprep.subr.bf16.mxu0 0
  %1609 = vmatpush1.bf16.msra.mxu0 0
  %1610 = vmatprep.subr.bf16.mxu0 0
  %1611 = vmatpush1.bf16.msra.mxu0 0
  %1612 = vmatprep.subr.bf16.mxu0 0
  %1613 = vmatpush1.bf16.msra.mxu0 0
  %1614 = vmatprep.subr.bf16.mxu0 0
  %1615 = vmatpush1.bf16.msra.mxu0 0
  %1616 = vmatprep.subr.bf16.mxu0 0
  %1617 = vmatpush1.bf16.msra.mxu0 0
  %1618 = vmatprep.subr.bf16.mxu0 0
  %1619 = vmatpush1.bf16.msra.mxu0 0
  %1620 = vmatprep.subr.bf16.mxu0 0
  %1621 = vmatpush1.bf16.msra.mxu0 0
  %1622 = vmatprep.mubr.bf16.mxu0 0
  %1623 = vmatmul.mubr.bf16.gmra.mrb[0].mxu0 %v121
  %v1624 = vpop.f32.mrb[0].mxu0
  %v1625 = vadd.f32 %v1576, %v1624
  %v1626 = vpop.f32.mrb[0].mxu0
  %v1627 = vpop.f32.mrb[0].mxu0
  %v1628 = vadd.f32 %v1576, %v1627
  %v1629 = vpop.f32.mrb[0].mxu0
  %1630 = vdwg.mxu0
  %s1631 = scalar_lea.vmem %s3, 176
  %v1632 = vld [vmem:[%s1631] sm:$0xf]
  %v1633 = vld [vmem:[%s1631 + $0x4] sm:$0xf]
  %v1634 = vld [vmem:[%s1631 + $0x8] sm:$0xf]
  %v1635 = vld [vmem:[%s1631 + $0xc] sm:$0xf]
  %s1636 = scalar_lea.vmem %s4, 11
  %v1637 = vld [vmem:[%s1636] sm:$0x1]
  %v1639 = vlaneseq
  %v1640 = vshrl.u32 %v1639, 7
  %v1641 = vsub.s32 0, %v1640
  %v1642 = vrot.slane %v1637, %v1641
  %v1648 = vunpack.c.l.b16 %v1632
  %v1649 = vunpack.c.l.b16 %v1633
  %v1650 = vunpack.c.l.b16 %v1634
  %v1651 = vunpack.c.l.b16 %v1635
  %v1652 = vpack.c.b16 %v1649, %v1648
  %v1653 = vpack.c.b16 %v1651, %v1650
  %1656 = vmatprep.subr.bf16.mxu0 0
  %1657 = vmatpush1.bf16.msra.mxu0 %v1652
  %1658 = vmatprep.subr.bf16.mxu0 0
  %1659 = vmatpush1.bf16.msra.mxu0 %v1653
  %1660 = vmatprep.subr.bf16.mxu0 0
  %1661 = vmatpush1.bf16.msra.mxu0 0
  %1662 = vmatprep.subr.bf16.mxu0 0
  %1663 = vmatpush1.bf16.msra.mxu0 0
  %1664 = vmatprep.subr.bf16.mxu0 0
  %1665 = vmatpush1.bf16.msra.mxu0 0
  %1666 = vmatprep.subr.bf16.mxu0 0
  %1667 = vmatpush1.bf16.msra.mxu0 0
  %1668 = vmatprep.subr.bf16.mxu0 0
  %1669 = vmatpush1.bf16.msra.mxu0 0
  %1670 = vmatprep.subr.bf16.mxu0 0
  %1671 = vmatpush1.bf16.msra.mxu0 0
  %1672 = vmatprep.subr.bf16.mxu0 0
  %1673 = vmatpush1.bf16.msra.mxu0 0
  %1674 = vmatprep.subr.bf16.mxu0 0
  %1675 = vmatpush1.bf16.msra.mxu0 0
  %1676 = vmatprep.subr.bf16.mxu0 0
  %1677 = vmatpush1.bf16.msra.mxu0 0
  %1678 = vmatprep.subr.bf16.mxu0 0
  %1679 = vmatpush1.bf16.msra.mxu0 0
  %1680 = vmatprep.subr.bf16.mxu0 0
  %1681 = vmatpush1.bf16.msra.mxu0 0
  %1682 = vmatprep.subr.bf16.mxu0 0
  %1683 = vmatpush1.bf16.msra.mxu0 0
  %1684 = vmatprep.subr.bf16.mxu0 0
  %1685 = vmatpush1.bf16.msra.mxu0 0
  %1686 = vmatprep.subr.bf16.mxu0 0
  %1687 = vmatpush1.bf16.msra.mxu0 0
  %1688 = vmatprep.mubr.bf16.mxu0 0
  %1689 = vmatmul.mubr.bf16.gmra.mrb[0].mxu0 %v121
  %v1690 = vpop.f32.mrb[0].mxu0
  %v1691 = vadd.f32 %v1642, %v1690
  %v1692 = vpop.f32.mrb[0].mxu0
  %v1693 = vpop.f32.mrb[0].mxu0
  %v1694 = vadd.f32 %v1642, %v1693
  %v1695 = vpop.f32.mrb[0].mxu0
  %1696 = vdwg.mxu0
  %v1697 = vpack.c.bf16 %v1559, %v1559
  %v1698 = vpack.c.bf16 %v1562, %v1562
  %v1699 = vpack.c.bf16 %v1625, %v1625
  %v1700 = vpack.c.bf16 %v1628, %v1628
  %v1701 = vpack.c.bf16 %v1691, %v1691
  %v1702 = vpack.c.bf16 %v1694, %v1694
  %v1704 = vsel %vm302, %v1697, 0
  %v1707 = vsel %vm302, %v1699, 0
  %1709 = vmatprep.subr.bf16.mxu0 0
  %1710 = vmatpush1.bf16.xpose.msra.mxu0 %v1707
  %1711 = vmatprep.subr.bf16.mxu0 0
  %1712 = vmatpush1.bf16.xpose.msra.mxu0 0
  %1713 = vmatprep.subr.bf16.mxu0 0
  %1714 = vmatpush1.bf16.xpose.msra.mxu0 0
  %1715 = vmatprep.subr.bf16.mxu0 0
  %1716 = vmatpush1.bf16.xpose.msra.mxu0 0
  %1717 = vmatprep.subr.bf16.mxu0 0
  %1718 = vmatpush1.bf16.xpose.msra.mxu0 0
  %1719 = vmatprep.subr.bf16.mxu0 0
  %1720 = vmatpush1.bf16.xpose.msra.mxu0 0
  %1721 = vmatprep.subr.bf16.mxu0 0
  %1722 = vmatpush1.bf16.xpose.msra.mxu0 0
  %1723 = vmatprep.subr.bf16.mxu0 0
  %1724 = vmatpush1.bf16.xpose.msra.mxu0 0
  %1725 = vmatprep.subr.bf16.mxu0 0
  %1726 = vmatpush1.bf16.xpose.msra.mxu0 0
  %1727 = vmatprep.subr.bf16.mxu0 0
  %1728 = vmatpush1.bf16.xpose.msra.mxu0 0
  %1729 = vmatprep.subr.bf16.mxu0 0
  %1730 = vmatpush1.bf16.xpose.msra.mxu0 0
  %1731 = vmatprep.subr.bf16.mxu0 0
  %1732 = vmatpush1.bf16.xpose.msra.mxu0 0
  %1733 = vmatprep.subr.bf16.mxu0 0
  %1734 = vmatpush1.bf16.xpose.msra.mxu0 0
  %1735 = vmatprep.subr.bf16.mxu0 0
  %1736 = vmatpush1.bf16.xpose.msra.mxu0 0
  %1737 = vmatprep.subr.bf16.mxu0 0
  %1738 = vmatpush1.bf16.xpose.msra.mxu0 0
  %1739 = vmatprep.subr.bf16.mxu0 0
  %1740 = vmatpush1.bf16.xpose.msra.mxu0 0
  %1741 = vmatprep.mubr.bf16.mxu0 0
  %1742 = vmatmul.mubr.bf16.gmra.mrb[0].mxu0 %v1704
  %v1743 = vpop.f32.mrb[0].mxu0
  %v1744 = vadd.f32 0.0, %v1743
  %v1745 = vpop.f32.mrb[0].mxu0
  %v1746 = vpop.f32.mrb[0].mxu0
  %v1747 = vpop.f32.mrb[0].mxu0
  %1748 = vdwg.mxu0
  %v1750 = vsel %vm302, %v1698, 0
  %v1753 = vsel %vm302, %v1700, 0
  %1755 = vmatprep.subr.bf16.mxu0 0
  %1756 = vmatpush1.bf16.xpose.msra.mxu0 %v1753
  %1757 = vmatprep.subr.bf16.mxu0 0
  %1758 = vmatpush1.bf16.xpose.msra.mxu0 0
  %1759 = vmatprep.subr.bf16.mxu0 0
  %1760 = vmatpush1.bf16.xpose.msra.mxu0 0
  %1761 = vmatprep.subr.bf16.mxu0 0
  %1762 = vmatpush1.bf16.xpose.msra.mxu0 0
  %1763 = vmatprep.subr.bf16.mxu0 0
  %1764 = vmatpush1.bf16.xpose.msra.mxu0 0
  %1765 = vmatprep.subr.bf16.mxu0 0
  %1766 = vmatpush1.bf16.xpose.msra.mxu0 0
  %1767 = vmatprep.subr.bf16.mxu0 0
  %1768 = vmatpush1.bf16.xpose.msra.mxu0 0
  %1769 = vmatprep.subr.bf16.mxu0 0
  %1770 = vmatpush1.bf16.xpose.msra.mxu0 0
  %1771 = vmatprep.subr.bf16.mxu0 0
  %1772 = vmatpush1.bf16.xpose.msra.mxu0 0
  %1773 = vmatprep.subr.bf16.mxu0 0
  %1774 = vmatpush1.bf16.xpose.msra.mxu0 0
  %1775 = vmatprep.subr.bf16.mxu0 0
  %1776 = vmatpush1.bf16.xpose.msra.mxu0 0
  %1777 = vmatprep.subr.bf16.mxu0 0
  %1778 = vmatpush1.bf16.xpose.msra.mxu0 0
  %1779 = vmatprep.subr.bf16.mxu0 0
  %1780 = vmatpush1.bf16.xpose.msra.mxu0 0
  %1781 = vmatprep.subr.bf16.mxu0 0
  %1782 = vmatpush1.bf16.xpose.msra.mxu0 0
  %1783 = vmatprep.subr.bf16.mxu0 0
  %1784 = vmatpush1.bf16.xpose.msra.mxu0 0
  %1785 = vmatprep.subr.bf16.mxu0 0
  %1786 = vmatpush1.bf16.xpose.msra.mxu0 0
  %1787 = vmatprep.mubr.bf16.mxu0 0
  %1788 = vmatmul.mubr.bf16.gmra.mrb[0].mxu0 %v1750
  %v1789 = vpop.f32.mrb[0].mxu0
  %v1790 = vadd.f32 0.0, %v1789
  %v1791 = vpop.f32.mrb[0].mxu0
  %v1792 = vpop.f32.mrb[0].mxu0
  %v1793 = vpop.f32.mrb[0].mxu0
  %1794 = vdwg.mxu0
  %v1795 = vmul.f32 %v1744, 0.35355338
  %v1796 = vmul.f32 %v1790, 0.35355338
  %v1797 = vadd.f32 %v1795, %v94
  %v1798 = vadd.f32 %v1796, %v95
  %v1799 = vsel %vm302, %v1797, -inf
  %1800 = vmax.xlane.f32.xlu0 %v1799
  %v1801 = vpop.xlane.xlu0 %1800
  %v1802 = vsel %vm302, %v1798, -inf
  %1803 = vmax.xlane.f32.xlu0 %v1802
  %v1804 = vpop.xlane.xlu0 %1803
  %v1805 = vsub.f32 %v1797, %v1801
  %v1806 = vsub.f32 %v1798, %v1804
  %v1807 = vmul.f32 %v1805, 1.442695
  %v1808 = vpow.pop %v1807
  %v1809 = vmul.f32 %v1806, 1.442695
  %v1810 = vpow.pop %v1809
  %v1811 = vsel %vm302, %v1808, 0.0
  %1812 = vadd.xlane.f32.xlu0 %v1811
  %v1813 = vpop.xlane.xlu0 %1812
  %v1814 = vsel %vm302, %v1810, 0.0
  %1815 = vadd.xlane.f32.xlu0 %v1814
  %v1816 = vpop.xlane.xlu0 %1815
  %v1817 = vrcp.pop %v1813
  %v1818 = vrcp.pop %v1816
  %v1819 = vmul.f32 %v1808, %v1817
  %v1820 = vmul.f32 %v1810, %v1818
  %v1821 = vpack.c.bf16 %v1819, %v1819
  %v1822 = vpack.c.bf16 %v1820, %v1820
  %v1824 = vsel %vm302, %v1821, 0
  %v1827 = vsel %vm426, %v1701, 0
  %1829 = vmatprep.subr.bf16.mxu0 0
  %1830 = vmatpush1.bf16.msra.mxu0 %v1827
  %1831 = vmatprep.subr.bf16.mxu0 0
  %1832 = vmatpush1.bf16.msra.mxu0 0
  %1833 = vmatprep.subr.bf16.mxu0 0
  %1834 = vmatpush1.bf16.msra.mxu0 0
  %1835 = vmatprep.subr.bf16.mxu0 0
  %1836 = vmatpush1.bf16.msra.mxu0 0
  %1837 = vmatprep.subr.bf16.mxu0 0
  %1838 = vmatpush1.bf16.msra.mxu0 0
  %1839 = vmatprep.subr.bf16.mxu0 0
  %1840 = vmatpush1.bf16.msra.mxu0 0
  %1841 = vmatprep.subr.bf16.mxu0 0
  %1842 = vmatpush1.bf16.msra.mxu0 0
  %1843 = vmatprep.subr.bf16.mxu0 0
  %1844 = vmatpush1.bf16.msra.mxu0 0
  %1845 = vmatprep.subr.bf16.mxu0 0
  %1846 = vmatpush1.bf16.msra.mxu0 0
  %1847 = vmatprep.subr.bf16.mxu0 0
  %1848 = vmatpush1.bf16.msra.mxu0 0
  %1849 = vmatprep.subr.bf16.mxu0 0
  %1850 = vmatpush1.bf16.msra.mxu0 0
  %1851 = vmatprep.subr.bf16.mxu0 0
  %1852 = vmatpush1.bf16.msra.mxu0 0
  %1853 = vmatprep.subr.bf16.mxu0 0
  %1854 = vmatpush1.bf16.msra.mxu0 0
  %1855 = vmatprep.subr.bf16.mxu0 0
  %1856 = vmatpush1.bf16.msra.mxu0 0
  %1857 = vmatprep.subr.bf16.mxu0 0
  %1858 = vmatpush1.bf16.msra.mxu0 0
  %1859 = vmatprep.subr.bf16.mxu0 0
  %1860 = vmatpush1.bf16.msra.mxu0 0
  %1861 = vmatprep.mubr.bf16.mxu0 0
  %1862 = vmatmul.mubr.bf16.gmra.mrb[0].mxu0 %v1824
  %v1863 = vpop.f32.mrb[0].mxu0
  %v1864 = vadd.f32 0.0, %v1863
  %v1865 = vpop.f32.mrb[0].mxu0
  %v1866 = vpop.f32.mrb[0].mxu0
  %v1867 = vpop.f32.mrb[0].mxu0
  %1868 = vdwg.mxu0
  %v1870 = vsel %vm302, %v1822, 0
  %v1873 = vsel %vm426, %v1702, 0
  %1875 = vmatprep.subr.bf16.mxu0 0
  %1876 = vmatpush1.bf16.msra.mxu0 %v1873
  %1877 = vmatprep.subr.bf16.mxu0 0
  %1878 = vmatpush1.bf16.msra.mxu0 0
  %1879 = vmatprep.subr.bf16.mxu0 0
  %1880 = vmatpush1.bf16.msra.mxu0 0
  %1881 = vmatprep.subr.bf16.mxu0 0
  %1882 = vmatpush1.bf16.msra.mxu0 0
  %1883 = vmatprep.subr.bf16.mxu0 0
  %1884 = vmatpush1.bf16.msra.mxu0 0
  %1885 = vmatprep.subr.bf16.mxu0 0
  %1886 = vmatpush1.bf16.msra.mxu0 0
  %1887 = vmatprep.subr.bf16.mxu0 0
  %1888 = vmatpush1.bf16.msra.mxu0 0
  %1889 = vmatprep.subr.bf16.mxu0 0
  %1890 = vmatpush1.bf16.msra.mxu0 0
  %1891 = vmatprep.subr.bf16.mxu0 0
  %1892 = vmatpush1.bf16.msra.mxu0 0
  %1893 = vmatprep.subr.bf16.mxu0 0
  %1894 = vmatpush1.bf16.msra.mxu0 0
  %1895 = vmatprep.subr.bf16.mxu0 0
  %1896 = vmatpush1.bf16.msra.mxu0 0
  %1897 = vmatprep.subr.bf16.mxu0 0
  %1898 = vmatpush1.bf16.msra.mxu0 0
  %1899 = vmatprep.subr.bf16.mxu0 0
  %1900 = vmatpush1.bf16.msra.mxu0 0
  %1901 = vmatprep.subr.bf16.mxu0 0
  %1902 = vmatpush1.bf16.msra.mxu0 0
  %1903 = vmatprep.subr.bf16.mxu0 0
  %1904 = vmatpush1.bf16.msra.mxu0 0
  %1905 = vmatprep.subr.bf16.mxu0 0
  %1906 = vmatpush1.bf16.msra.mxu0 0
  %1907 = vmatprep.mubr.bf16.mxu0 0
  %1908 = vmatmul.mubr.bf16.gmra.mrb[0].mxu0 %v1870
  %v1909 = vpop.f32.mrb[0].mxu0
  %v1910 = vadd.f32 0.0, %v1909
  %v1911 = vpop.f32.mrb[0].mxu0
  %v1912 = vpop.f32.mrb[0].mxu0
  %v1913 = vpop.f32.mrb[0].mxu0
  %1914 = vdwg.mxu0
  %v1915 = vpack.c.bf16 %v1910, %v1864
  %s1916 = scalar_lea.vmem %s5, 12
  %v1917 = vld [vmem:[%s1916] sm:$0xf]
  %v1919 = vsel %vm302, %v1915, 0
  %v1922 = vsel %vm426, %v1917, 0
  %1924 = vmatprep.subr.bf16.mxu0 0
  %1925 = vmatpush1.bf16.msra.mxu0 %v1922
  %1926 = vmatprep.subr.bf16.mxu0 0
  %1927 = vmatpush1.bf16.msra.mxu0 0
  %1928 = vmatprep.subr.bf16.mxu0 0
  %1929 = vmatpush1.bf16.msra.mxu0 0
  %1930 = vmatprep.subr.bf16.mxu0 0
  %1931 = vmatpush1.bf16.msra.mxu0 0
  %1932 = vmatprep.subr.bf16.mxu0 0
  %1933 = vmatpush1.bf16.msra.mxu0 0
  %1934 = vmatprep.subr.bf16.mxu0 0
  %1935 = vmatpush1.bf16.msra.mxu0 0
  %1936 = vmatprep.subr.bf16.mxu0 0
  %1937 = vmatpush1.bf16.msra.mxu0 0
  %1938 = vmatprep.subr.bf16.mxu0 0
  %1939 = vmatpush1.bf16.msra.mxu0 0
  %1940 = vmatprep.subr.bf16.mxu0 0
  %1941 = vmatpush1.bf16.msra.mxu0 0
  %1942 = vmatprep.subr.bf16.mxu0 0
  %1943 = vmatpush1.bf16.msra.mxu0 0
  %1944 = vmatprep.subr.bf16.mxu0 0
  %1945 = vmatpush1.bf16.msra.mxu0 0
  %1946 = vmatprep.subr.bf16.mxu0 0
  %1947 = vmatpush1.bf16.msra.mxu0 0
  %1948 = vmatprep.subr.bf16.mxu0 0
  %1949 = vmatpush1.bf16.msra.mxu0 0
  %1950 = vmatprep.subr.bf16.mxu0 0
  %1951 = vmatpush1.bf16.msra.mxu0 0
  %1952 = vmatprep.subr.bf16.mxu0 0
  %1953 = vmatpush1.bf16.msra.mxu0 0
  %1954 = vmatprep.subr.bf16.mxu0 0
  %1955 = vmatpush1.bf16.msra.mxu0 0
  %1956 = vmatprep.mubr.bf16.mxu0 0
  %1957 = vmatmul.mubr.bf16.gmra.mrb[0].mxu0 %v1919
  %v1958 = vpop.f32.mrb[0].mxu0
  %v1959 = vadd.f32 0.0, %v1958
  %v1960 = vpop.f32.mrb[0].mxu0
  %v1961 = vpop.f32.mrb[0].mxu0
  %v1962 = vadd.f32 0.0, %v1961
  %v1963 = vpop.f32.mrb[0].mxu0
  %1964 = vdwg.mxu0
  %v1965 = vadd.f32 %v1497, %v1959
  %v1966 = vadd.f32 %v1498, %v1962
  %v1967 = vadd.f32 %v92, %v1965
  %v1968 = vadd.f32 %v93, %v1966
  %v1969 = vld [vmem:[%s6] sm:$0x1]
  %v1971 = vlaneseq
  %v1972 = vshrl.u32 %v1971, 7
  %v1973 = vsub.s32 0, %v1972
  %v1974 = vrot.slane %v1969, %v1973
  %v1976 = vadd.f32 %v1967, %v1974
  %v1977 = vadd.f32 %v1968, %v1974
  %v1978 = vld [vmem:[%s7] sm:$0x1]
  %s1979 = scalar_lea.vmem %s7, 1
  %v1980 = vld [vmem:[%s1979] sm:$0x1]
  %v1981 = vsel %vm50, %v1976, 0.0
  %1982 = vadd.xlane.f32.xlu0 %v1981
  %v1983 = vpop.xlane.xlu0 %1982
  %v1984 = vsel %vm50, %v1977, 0.0
  %1985 = vadd.xlane.f32.xlu0 %v1984
  %v1986 = vpop.xlane.xlu0 %1985
  %v1987 = vmul.f32 %v1983, %v57
  %v1988 = vmul.f32 %v1986, %v57
  %v1989 = vsub.f32 %v1976, %v1987
  %v1990 = vsub.f32 %v1977, %v1988
  %v1991 = vmul.f32 %v1989, %v1989
  %v1992 = vmul.f32 %v1990, %v1990
  %v1993 = vsel %vm50, %v1991, 0.0
  %1994 = vadd.xlane.f32.xlu0 %v1993
  %v1995 = vpop.xlane.xlu0 %1994
  %v1996 = vsel %vm50, %v1992, 0.0
  %1997 = vadd.xlane.f32.xlu0 %v1996
  %v1998 = vpop.xlane.xlu0 %1997
  %v1999 = vmul.f32 %v1995, %v57
  %v2000 = vmul.f32 %v1998, %v57
  %v2001 = vadd.f32 %v1999, 1e-12
  %v2002 = vadd.f32 %v2000, 1e-12
  %v2003 = vrsqrt.pop %v2001
  %v2004 = vrsqrt.pop %v2002
  %v2005 = vmul.f32 %v1989, %v2003
  %v2006 = vmul.f32 %v1990, %v2004
  %v2008 = vlaneseq
  %v2009 = vshrl.u32 %v2008, 7
  %v2010 = vsub.s32 0, %v2009
  %v2011 = vrot.slane %v1978, %v2010
  %v2013 = vmul.f32 %v2005, %v2011
  %v2014 = vmul.f32 %v2006, %v2011
  %v2016 = vlaneseq
  %v2017 = vshrl.u32 %v2016, 7
  %v2018 = vsub.s32 0, %v2017
  %v2019 = vrot.slane %v1980, %v2018
  %v2021 = vadd.f32 %v2013, %v2019
  %v2022 = vadd.f32 %v2014, %v2019
  %v2023 = vpack.c.bf16 %v2022, %v2021
  %v2024 = vld [vmem:[%s8] sm:$0xf]
  %v2025 = vld [vmem:[%s8 + $0x4] sm:$0xf]
  %v2026 = vld [vmem:[%s8 + $0x8] sm:$0xf]
  %v2027 = vld [vmem:[%s8 + $0xc] sm:$0xf]
  %v2028 = vld [vmem:[%s9] sm:$0x1]
  %v2030 = vlaneseq
  %v2031 = vshrl.u32 %v2030, 7
  %v2032 = vsub.s32 0, %v2031
  %v2033 = vrot.slane %v2028, %v2032
  %v2039 = vunpack.c.l.b16 %v2024
  %v2040 = vunpack.c.l.b16 %v2025
  %v2041 = vunpack.c.l.b16 %v2026
  %v2042 = vunpack.c.l.b16 %v2027
  %v2043 = vpack.c.b16 %v2040, %v2039
  %v2044 = vpack.c.b16 %v2042, %v2041
  %v2048 = vsel %vm50, %v2023, 0
  %2050 = vmatprep.subr.bf16.mxu0 0
  %2051 = vmatpush1.bf16.msra.mxu0 %v2043
  %2052 = vmatprep.subr.bf16.mxu0 0
  %2053 = vmatpush1.bf16.msra.mxu0 %v2044
  %2054 = vmatprep.subr.bf16.mxu0 0
  %2055 = vmatpush1.bf16.msra.mxu0 0
  %2056 = vmatprep.subr.bf16.mxu0 0
  %2057 = vmatpush1.bf16.msra.mxu0 0
  %2058 = vmatprep.subr.bf16.mxu0 0
  %2059 = vmatpush1.bf16.msra.mxu0 0
  %2060 = vmatprep.subr.bf16.mxu0 0
  %2061 = vmatpush1.bf16.msra.mxu0 0
  %2062 = vmatprep.subr.bf16.mxu0 0
  %2063 = vmatpush1.bf16.msra.mxu0 0
  %2064 = vmatprep.subr.bf16.mxu0 0
  %2065 = vmatpush1.bf16.msra.mxu0 0
  %2066 = vmatprep.subr.bf16.mxu0 0
  %2067 = vmatpush1.bf16.msra.mxu0 0
  %2068 = vmatprep.subr.bf16.mxu0 0
  %2069 = vmatpush1.bf16.msra.mxu0 0
  %2070 = vmatprep.subr.bf16.mxu0 0
  %2071 = vmatpush1.bf16.msra.mxu0 0
  %2072 = vmatprep.subr.bf16.mxu0 0
  %2073 = vmatpush1.bf16.msra.mxu0 0
  %2074 = vmatprep.subr.bf16.mxu0 0
  %2075 = vmatpush1.bf16.msra.mxu0 0
  %2076 = vmatprep.subr.bf16.mxu0 0
  %2077 = vmatpush1.bf16.msra.mxu0 0
  %2078 = vmatprep.subr.bf16.mxu0 0
  %2079 = vmatpush1.bf16.msra.mxu0 0
  %2080 = vmatprep.subr.bf16.mxu0 0
  %2081 = vmatpush1.bf16.msra.mxu0 0
  %2082 = vmatprep.mubr.bf16.mxu0 0
  %2083 = vmatmul.mubr.bf16.gmra.mrb[0].mxu0 %v2048
  %v2084 = vpop.f32.mrb[0].mxu0
  %v2085 = vadd.f32 %v2033, %v2084
  %v2086 = vpop.f32.mrb[0].mxu0
  %v2087 = vpop.f32.mrb[0].mxu0
  %v2088 = vadd.f32 %v2033, %v2087
  %v2089 = vpop.f32.mrb[0].mxu0
  %2090 = vdwg.mxu0
  %v2091 = vmul.f32 %v2085, 0.5
  %v2092 = vmul.f32 %v2088, 0.5
  %v2093 = vmul.f32 %v2085, 0.044715
  %v2094 = vmul.f32 %v2088, 0.044715
  %v2095 = vmul.f32 %v2093, %v2085
  %v2096 = vmul.f32 %v2094, %v2088
  %v2097 = vmul.f32 %v2095, %v2085
  %v2098 = vmul.f32 %v2096, %v2088
  %v2099 = vadd.f32 %v2085, %v2097
  %v2100 = vadd.f32 %v2088, %v2098
  %v2101 = vmul.f32 %v2099, 0.7978846
  %v2102 = vmul.f32 %v2100, 0.7978846
  %v2103 = vtanh.pop %v2101
  %v2104 = vtanh.pop %v2102
  %v2105 = vadd.f32 %v2103, 1.0
  %v2106 = vadd.f32 %v2104, 1.0
  %v2107 = vmul.f32 %v2091, %v2105
  %v2108 = vmul.f32 %v2092, %v2106
  %v2109 = vpack.c.bf16 %v2108, %v2107
  %v2110 = vld [vmem:[%s10] sm:$0xf]
  %v2111 = vld [vmem:[%s10 + $0x4] sm:$0xf]
  %v2112 = vld [vmem:[%s10 + $0x8] sm:$0xf]
  %v2113 = vld [vmem:[%s10 + $0xc] sm:$0xf]
  %v2114 = vld [vmem:[%s10 + $0x10] sm:$0xf]
  %v2115 = vld [vmem:[%s10 + $0x14] sm:$0xf]
  %v2116 = vld [vmem:[%s10 + $0x18] sm:$0xf]
  %v2117 = vld [vmem:[%s10 + $0x1c] sm:$0xf]
  %v2118 = vld [vmem:[%s11] sm:$0x1]
  %v2120 = vlaneseq
  %v2121 = vshrl.u32 %v2120, 7
  %v2122 = vsub.s32 0, %v2121
  %v2123 = vrot.slane %v2118, %v2122
  %v2133 = vunpack.c.l.b16 %v2110
  %v2134 = vunpack.c.l.b16 %v2111
  %v2135 = vunpack.c.l.b16 %v2112
  %v2136 = vunpack.c.l.b16 %v2113
  %v2137 = vunpack.c.l.b16 %v2114
  %v2138 = vunpack.c.l.b16 %v2115
  %v2139 = vunpack.c.l.b16 %v2116
  %v2140 = vunpack.c.l.b16 %v2117
  %v2141 = vpack.c.b16 %v2134, %v2133
  %v2142 = vpack.c.b16 %v2136, %v2135
  %v2143 = vpack.c.b16 %v2138, %v2137
  %v2144 = vpack.c.b16 %v2140, %v2139
  %vm2149 = vcmask 523264
  %v2151 = vsel %vm2149, %v2109, 0
  %2153 = vmatprep.subr.bf16.mxu0 0
  %2154 = vmatpush1.bf16.msra.mxu0 %v2141
  %2155 = vmatprep.subr.bf16.mxu0 0
  %2156 = vmatpush1.bf16.msra.mxu0 %v2142
  %2157 = vmatprep.subr.bf16.mxu0 0
  %2158 = vmatpush1.bf16.msra.mxu0 %v2143
  %2159 = vmatprep.subr.bf16.mxu0 0
  %2160 = vmatpush1.bf16.msra.mxu0 %v2144
  %2161 = vmatprep.subr.bf16.mxu0 0
  %2162 = vmatpush1.bf16.msra.mxu0 0
  %2163 = vmatprep.subr.bf16.mxu0 0
  %2164 = vmatpush1.bf16.msra.mxu0 0
  %2165 = vmatprep.subr.bf16.mxu0 0
  %2166 = vmatpush1.bf16.msra.mxu0 0
  %2167 = vmatprep.subr.bf16.mxu0 0
  %2168 = vmatpush1.bf16.msra.mxu0 0
  %2169 = vmatprep.subr.bf16.mxu0 0
  %2170 = vmatpush1.bf16.msra.mxu0 0
  %2171 = vmatprep.subr.bf16.mxu0 0
  %2172 = vmatpush1.bf16.msra.mxu0 0
  %2173 = vmatprep.subr.bf16.mxu0 0
  %2174 = vmatpush1.bf16.msra.mxu0 0
  %2175 = vmatprep.subr.bf16.mxu0 0
  %2176 = vmatpush1.bf16.msra.mxu0 0
  %2177 = vmatprep.subr.bf16.mxu0 0
  %2178 = vmatpush1.bf16.msra.mxu0 0
  %2179 = vmatprep.subr.bf16.mxu0 0
  %2180 = vmatpush1.bf16.msra.mxu0 0
  %2181 = vmatprep.subr.bf16.mxu0 0
  %2182 = vmatpush1.bf16.msra.mxu0 0
  %2183 = vmatprep.subr.bf16.mxu0 0
  %2184 = vmatpush1.bf16.msra.mxu0 0
  %2185 = vmatprep.mubr.bf16.mxu0 0
  %2186 = vmatmul.mubr.bf16.gmra.mrb[0].mxu0 %v2151
  %v2187 = vpop.f32.mrb[0].mxu0
  %v2188 = vadd.f32 %v2123, %v2187
  %v2189 = vpop.f32.mrb[0].mxu0
  %v2190 = vpop.f32.mrb[0].mxu0
  %v2191 = vadd.f32 %v2123, %v2190
  %v2192 = vpop.f32.mrb[0].mxu0
  %2193 = vdwg.mxu0
  %v2194 = vadd.f32 %v2021, %v2188
  %v2195 = vadd.f32 %v2022, %v2191
  %v2196 = vld [vmem:[%s12] sm:$0x1]
  %s2197 = scalar_lea.vmem %s12, 1
  %v2198 = vld [vmem:[%s2197] sm:$0x1]
  %v2199 = vsel %vm50, %v2194, 0.0
  %2200 = vadd.xlane.f32.xlu0 %v2199
  %v2201 = vpop.xlane.xlu0 %2200
  %v2202 = vsel %vm50, %v2195, 0.0
  %2203 = vadd.xlane.f32.xlu0 %v2202
  %v2204 = vpop.xlane.xlu0 %2203
  %v2205 = vmul.f32 %v2201, %v57
  %v2206 = vmul.f32 %v2204, %v57
  %v2207 = vsub.f32 %v2194, %v2205
  %v2208 = vsub.f32 %v2195, %v2206
  %v2209 = vmul.f32 %v2207, %v2207
  %v2210 = vmul.f32 %v2208, %v2208
  %v2211 = vsel %vm50, %v2209, 0.0
  %2212 = vadd.xlane.f32.xlu0 %v2211
  %v2213 = vpop.xlane.xlu0 %2212
  %v2214 = vsel %vm50, %v2210, 0.0
  %2215 = vadd.xlane.f32.xlu0 %v2214
  %v2216 = vpop.xlane.xlu0 %2215
  %v2217 = vmul.f32 %v2213, %v57
  %v2218 = vmul.f32 %v2216, %v57
  %v2219 = vadd.f32 %v2217, 1e-12
  %v2220 = vadd.f32 %v2218, 1e-12
  %v2221 = vrsqrt.pop %v2219
  %v2222 = vrsqrt.pop %v2220
  %v2223 = vmul.f32 %v2207, %v2221
  %v2224 = vmul.f32 %v2208, %v2222
  %v2226 = vlaneseq
  %v2227 = vshrl.u32 %v2226, 7
  %v2228 = vsub.s32 0, %v2227
  %v2229 = vrot.slane %v2196, %v2228
  %v2231 = vmul.f32 %v2223, %v2229
  %v2232 = vmul.f32 %v2224, %v2229
  %v2234 = vlaneseq
  %v2235 = vshrl.u32 %v2234, 7
  %v2236 = vsub.s32 0, %v2235
  %v2237 = vrot.slane %v2198, %v2236
  %v2239 = vadd.f32 %v2231, %v2237
  %v2240 = vadd.f32 %v2232, %v2237
  %v2241 = vpack.c.bf16 %v2240, %v2239
  %s2242 = scalar_lea.vmem %s3, 192
  %v2243 = vld [vmem:[%s2242] sm:$0xf]
  %v2244 = vld [vmem:[%s2242 + $0x4] sm:$0xf]
  %v2245 = vld [vmem:[%s2242 + $0x8] sm:$0xf]
  %v2246 = vld [vmem:[%s2242 + $0xc] sm:$0xf]
  %s2247 = scalar_lea.vmem %s4, 12
  %v2248 = vld [vmem:[%s2247] sm:$0x1]
  %v2250 = vlaneseq
  %v2251 = vshrl.u32 %v2250, 7
  %v2252 = vsub.s32 0, %v2251
  %v2253 = vrot.slane %v2248, %v2252
  %v2259 = vunpack.c.l.b16 %v2243
  %v2260 = vunpack.c.l.b16 %v2244
  %v2261 = vunpack.c.l.b16 %v2245
  %v2262 = vunpack.c.l.b16 %v2246
  %v2263 = vpack.c.b16 %v2260, %v2259
  %v2264 = vpack.c.b16 %v2262, %v2261
  %v2268 = vsel %vm50, %v2241, 0
  %2270 = vmatprep.subr.bf16.mxu0 0
  %2271 = vmatpush1.bf16.msra.mxu0 %v2263
  %2272 = vmatprep.subr.bf16.mxu0 0
  %2273 = vmatpush1.bf16.msra.mxu0 %v2264
  %2274 = vmatprep.subr.bf16.mxu0 0
  %2275 = vmatpush1.bf16.msra.mxu0 0
  %2276 = vmatprep.subr.bf16.mxu0 0
  %2277 = vmatpush1.bf16.msra.mxu0 0
  %2278 = vmatprep.subr.bf16.mxu0 0
  %2279 = vmatpush1.bf16.msra.mxu0 0
  %2280 = vmatprep.subr.bf16.mxu0 0
  %2281 = vmatpush1.bf16.msra.mxu0 0
  %2282 = vmatprep.subr.bf16.mxu0 0
  %2283 = vmatpush1.bf16.msra.mxu0 0
  %2284 = vmatprep.subr.bf16.mxu0 0
  %2285 = vmatpush1.bf16.msra.mxu0 0
  %2286 = vmatprep.subr.bf16.mxu0 0
  %2287 = vmatpush1.bf16.msra.mxu0 0
  %2288 = vmatprep.subr.bf16.mxu0 0
  %2289 = vmatpush1.bf16.msra.mxu0 0
  %2290 = vmatprep.subr.bf16.mxu0 0
  %2291 = vmatpush1.bf16.msra.mxu0 0
  %2292 = vmatprep.subr.bf16.mxu0 0
  %2293 = vmatpush1.bf16.msra.mxu0 0
  %2294 = vmatprep.subr.bf16.mxu0 0
  %2295 = vmatpush1.bf16.msra.mxu0 0
  %2296 = vmatprep.subr.bf16.mxu0 0
  %2297 = vmatpush1.bf16.msra.mxu0 0
  %2298 = vmatprep.subr.bf16.mxu0 0
  %2299 = vmatpush1.bf16.msra.mxu0 0
  %2300 = vmatprep.subr.bf16.mxu0 0
  %2301 = vmatpush1.bf16.msra.mxu0 0
  %2302 = vmatprep.mubr.bf16.mxu0 0
  %2303 = vmatmul.mubr.bf16.gmra.mrb[0].mxu0 %v2268
  %v2304 = vpop.f32.mrb[0].mxu0
  %v2305 = vadd.f32 %v2253, %v2304
  %v2306 = vpop.f32.mrb[0].mxu0
  %v2307 = vpop.f32.mrb[0].mxu0
  %v2308 = vadd.f32 %v2253, %v2307
  %v2309 = vpop.f32.mrb[0].mxu0
  %2310 = vdwg.mxu0
  %s2311 = scalar_lea.vmem %s3, 256
  %v2312 = vld [vmem:[%s2311] sm:$0xf]
  %v2313 = vld [vmem:[%s2311 + $0x4] sm:$0xf]
  %v2314 = vld [vmem:[%s2311 + $0x8] sm:$0xf]
  %v2315 = vld [vmem:[%s2311 + $0xc] sm:$0xf]
  %s2316 = scalar_lea.vmem %s4, 16
  %v2317 = vld [vmem:[%s2316] sm:$0x1]
  %v2319 = vlaneseq
  %v2320 = vshrl.u32 %v2319, 7
  %v2321 = vsub.s32 0, %v2320
  %v2322 = vrot.slane %v2317, %v2321
  %v2328 = vunpack.c.l.b16 %v2312
  %v2329 = vunpack.c.l.b16 %v2313
  %v2330 = vunpack.c.l.b16 %v2314
  %v2331 = vunpack.c.l.b16 %v2315
  %v2332 = vpack.c.b16 %v2329, %v2328
  %v2333 = vpack.c.b16 %v2331, %v2330
  %2336 = vmatprep.subr.bf16.mxu0 0
  %2337 = vmatpush1.bf16.msra.mxu0 %v2332
  %2338 = vmatprep.subr.bf16.mxu0 0
  %2339 = vmatpush1.bf16.msra.mxu0 %v2333
  %2340 = vmatprep.subr.bf16.mxu0 0
  %2341 = vmatpush1.bf16.msra.mxu0 0
  %2342 = vmatprep.subr.bf16.mxu0 0
  %2343 = vmatpush1.bf16.msra.mxu0 0
  %2344 = vmatprep.subr.bf16.mxu0 0
  %2345 = vmatpush1.bf16.msra.mxu0 0
  %2346 = vmatprep.subr.bf16.mxu0 0
  %2347 = vmatpush1.bf16.msra.mxu0 0
  %2348 = vmatprep.subr.bf16.mxu0 0
  %2349 = vmatpush1.bf16.msra.mxu0 0
  %2350 = vmatprep.subr.bf16.mxu0 0
  %2351 = vmatpush1.bf16.msra.mxu0 0
  %2352 = vmatprep.subr.bf16.mxu0 0
  %2353 = vmatpush1.bf16.msra.mxu0 0
  %2354 = vmatprep.subr.bf16.mxu0 0
  %2355 = vmatpush1.bf16.msra.mxu0 0
  %2356 = vmatprep.subr.bf16.mxu0 0
  %2357 = vmatpush1.bf16.msra.mxu0 0
  %2358 = vmatprep.subr.bf16.mxu0 0
  %2359 = vmatpush1.bf16.msra.mxu0 0
  %2360 = vmatprep.subr.bf16.mxu0 0
  %2361 = vmatpush1.bf16.msra.mxu0 0
  %2362 = vmatprep.subr.bf16.mxu0 0
  %2363 = vmatpush1.bf16.msra.mxu0 0
  %2364 = vmatprep.subr.bf16.mxu0 0
  %2365 = vmatpush1.bf16.msra.mxu0 0
  %2366 = vmatprep.subr.bf16.mxu0 0
  %2367 = vmatpush1.bf16.msra.mxu0 0
  %2368 = vmatprep.mubr.bf16.mxu0 0
  %2369 = vmatmul.mubr.bf16.gmra.mrb[0].mxu0 %v2268
  %v2370 = vpop.f32.mrb[0].mxu0
  %v2371 = vadd.f32 %v2322, %v2370
  %v2372 = vpop.f32.mrb[0].mxu0
  %v2373 = vpop.f32.mrb[0].mxu0
  %v2374 = vadd.f32 %v2322, %v2373
  %v2375 = vpop.f32.mrb[0].mxu0
  %2376 = vdwg.mxu0
  %s2377 = scalar_lea.vmem %s3, 320
  %v2378 = vld [vmem:[%s2377] sm:$0xf]
  %v2379 = vld [vmem:[%s2377 + $0x4] sm:$0xf]
  %v2380 = vld [vmem:[%s2377 + $0x8] sm:$0xf]
  %v2381 = vld [vmem:[%s2377 + $0xc] sm:$0xf]
  %s2382 = scalar_lea.vmem %s4, 20
  %v2383 = vld [vmem:[%s2382] sm:$0x1]
  %v2385 = vlaneseq
  %v2386 = vshrl.u32 %v2385, 7
  %v2387 = vsub.s32 0, %v2386
  %v2388 = vrot.slane %v2383, %v2387
  %v2394 = vunpack.c.l.b16 %v2378
  %v2395 = vunpack.c.l.b16 %v2379
  %v2396 = vunpack.c.l.b16 %v2380
  %v2397 = vunpack.c.l.b16 %v2381
  %v2398 = vpack.c.b16 %v2395, %v2394
  %v2399 = vpack.c.b16 %v2397, %v2396
  %2402 = vmatprep.subr.bf16.mxu0 0
  %2403 = vmatpush1.bf16.msra.mxu0 %v2398
  %2404 = vmatprep.subr.bf16.mxu0 0
  %2405 = vmatpush1.bf16.msra.mxu0 %v2399
  %2406 = vmatprep.subr.bf16.mxu0 0
  %2407 = vmatpush1.bf16.msra.mxu0 0
  %2408 = vmatprep.subr.bf16.mxu0 0
  %2409 = vmatpush1.bf16.msra.mxu0 0
  %2410 = vmatprep.subr.bf16.mxu0 0
  %2411 = vmatpush1.bf16.msra.mxu0 0
  %2412 = vmatprep.subr.bf16.mxu0 0
  %2413 = vmatpush1.bf16.msra.mxu0 0
  %2414 = vmatprep.subr.bf16.mxu0 0
  %2415 = vmatpush1.bf16.msra.mxu0 0
  %2416 = vmatprep.subr.bf16.mxu0 0
  %2417 = vmatpush1.bf16.msra.mxu0 0
  %2418 = vmatprep.subr.bf16.mxu0 0
  %2419 = vmatpush1.bf16.msra.mxu0 0
  %2420 = vmatprep.subr.bf16.mxu0 0
  %2421 = vmatpush1.bf16.msra.mxu0 0
  %2422 = vmatprep.subr.bf16.mxu0 0
  %2423 = vmatpush1.bf16.msra.mxu0 0
  %2424 = vmatprep.subr.bf16.mxu0 0
  %2425 = vmatpush1.bf16.msra.mxu0 0
  %2426 = vmatprep.subr.bf16.mxu0 0
  %2427 = vmatpush1.bf16.msra.mxu0 0
  %2428 = vmatprep.subr.bf16.mxu0 0
  %2429 = vmatpush1.bf16.msra.mxu0 0
  %2430 = vmatprep.subr.bf16.mxu0 0
  %2431 = vmatpush1.bf16.msra.mxu0 0
  %2432 = vmatprep.subr.bf16.mxu0 0
  %2433 = vmatpush1.bf16.msra.mxu0 0
  %2434 = vmatprep.mubr.bf16.mxu0 0
  %2435 = vmatmul.mubr.bf16.gmra.mrb[0].mxu0 %v2268
  %v2436 = vpop.f32.mrb[0].mxu0
  %v2437 = vadd.f32 %v2388, %v2436
  %v2438 = vpop.f32.mrb[0].mxu0
  %v2439 = vpop.f32.mrb[0].mxu0
  %v2440 = vadd.f32 %v2388, %v2439
  %v2441 = vpop.f32.mrb[0].mxu0
  %2442 = vdwg.mxu0
  %v2443 = vpack.c.bf16 %v2305, %v2305
  %v2444 = vpack.c.bf16 %v2308, %v2308
  %v2445 = vpack.c.bf16 %v2371, %v2371
  %v2446 = vpack.c.bf16 %v2374, %v2374
  %v2447 = vpack.c.bf16 %v2437, %v2437
  %v2448 = vpack.c.bf16 %v2440, %v2440
  %v2450 = vsel %vm302, %v2443, 0
  %v2453 = vsel %vm302, %v2445, 0
  %2455 = vmatprep.subr.bf16.mxu0 0
  %2456 = vmatpush1.bf16.xpose.msra.mxu0 %v2453
  %2457 = vmatprep.subr.bf16.mxu0 0
  %2458 = vmatpush1.bf16.xpose.msra.mxu0 0
  %2459 = vmatprep.subr.bf16.mxu0 0
  %2460 = vmatpush1.bf16.xpose.msra.mxu0 0
  %2461 = vmatprep.subr.bf16.mxu0 0
  %2462 = vmatpush1.bf16.xpose.msra.mxu0 0
  %2463 = vmatprep.subr.bf16.mxu0 0
  %2464 = vmatpush1.bf16.xpose.msra.mxu0 0
  %2465 = vmatprep.subr.bf16.mxu0 0
  %2466 = vmatpush1.bf16.xpose.msra.mxu0 0
  %2467 = vmatprep.subr.bf16.mxu0 0
  %2468 = vmatpush1.bf16.xpose.msra.mxu0 0
  %2469 = vmatprep.subr.bf16.mxu0 0
  %2470 = vmatpush1.bf16.xpose.msra.mxu0 0
  %2471 = vmatprep.subr.bf16.mxu0 0
  %2472 = vmatpush1.bf16.xpose.msra.mxu0 0
  %2473 = vmatprep.subr.bf16.mxu0 0
  %2474 = vmatpush1.bf16.xpose.msra.mxu0 0
  %2475 = vmatprep.subr.bf16.mxu0 0
  %2476 = vmatpush1.bf16.xpose.msra.mxu0 0
  %2477 = vmatprep.subr.bf16.mxu0 0
  %2478 = vmatpush1.bf16.xpose.msra.mxu0 0
  %2479 = vmatprep.subr.bf16.mxu0 0
  %2480 = vmatpush1.bf16.xpose.msra.mxu0 0
  %2481 = vmatprep.subr.bf16.mxu0 0
  %2482 = vmatpush1.bf16.xpose.msra.mxu0 0
  %2483 = vmatprep.subr.bf16.mxu0 0
  %2484 = vmatpush1.bf16.xpose.msra.mxu0 0
  %2485 = vmatprep.subr.bf16.mxu0 0
  %2486 = vmatpush1.bf16.xpose.msra.mxu0 0
  %2487 = vmatprep.mubr.bf16.mxu0 0
  %2488 = vmatmul.mubr.bf16.gmra.mrb[0].mxu0 %v2450
  %v2489 = vpop.f32.mrb[0].mxu0
  %v2490 = vadd.f32 0.0, %v2489
  %v2491 = vpop.f32.mrb[0].mxu0
  %v2492 = vpop.f32.mrb[0].mxu0
  %v2493 = vpop.f32.mrb[0].mxu0
  %2494 = vdwg.mxu0
  %v2496 = vsel %vm302, %v2444, 0
  %v2499 = vsel %vm302, %v2446, 0
  %2501 = vmatprep.subr.bf16.mxu0 0
  %2502 = vmatpush1.bf16.xpose.msra.mxu0 %v2499
  %2503 = vmatprep.subr.bf16.mxu0 0
  %2504 = vmatpush1.bf16.xpose.msra.mxu0 0
  %2505 = vmatprep.subr.bf16.mxu0 0
  %2506 = vmatpush1.bf16.xpose.msra.mxu0 0
  %2507 = vmatprep.subr.bf16.mxu0 0
  %2508 = vmatpush1.bf16.xpose.msra.mxu0 0
  %2509 = vmatprep.subr.bf16.mxu0 0
  %2510 = vmatpush1.bf16.xpose.msra.mxu0 0
  %2511 = vmatprep.subr.bf16.mxu0 0
  %2512 = vmatpush1.bf16.xpose.msra.mxu0 0
  %2513 = vmatprep.subr.bf16.mxu0 0
  %2514 = vmatpush1.bf16.xpose.msra.mxu0 0
  %2515 = vmatprep.subr.bf16.mxu0 0
  %2516 = vmatpush1.bf16.xpose.msra.mxu0 0
  %2517 = vmatprep.subr.bf16.mxu0 0
  %2518 = vmatpush1.bf16.xpose.msra.mxu0 0
  %2519 = vmatprep.subr.bf16.mxu0 0
  %2520 = vmatpush1.bf16.xpose.msra.mxu0 0
  %2521 = vmatprep.subr.bf16.mxu0 0
  %2522 = vmatpush1.bf16.xpose.msra.mxu0 0
  %2523 = vmatprep.subr.bf16.mxu0 0
  %2524 = vmatpush1.bf16.xpose.msra.mxu0 0
  %2525 = vmatprep.subr.bf16.mxu0 0
  %2526 = vmatpush1.bf16.xpose.msra.mxu0 0
  %2527 = vmatprep.subr.bf16.mxu0 0
  %2528 = vmatpush1.bf16.xpose.msra.mxu0 0
  %2529 = vmatprep.subr.bf16.mxu0 0
  %2530 = vmatpush1.bf16.xpose.msra.mxu0 0
  %2531 = vmatprep.subr.bf16.mxu0 0
  %2532 = vmatpush1.bf16.xpose.msra.mxu0 0
  %2533 = vmatprep.mubr.bf16.mxu0 0
  %2534 = vmatmul.mubr.bf16.gmra.mrb[0].mxu0 %v2496
  %v2535 = vpop.f32.mrb[0].mxu0
  %v2536 = vadd.f32 0.0, %v2535
  %v2537 = vpop.f32.mrb[0].mxu0
  %v2538 = vpop.f32.mrb[0].mxu0
  %v2539 = vpop.f32.mrb[0].mxu0
  %2540 = vdwg.mxu0
  %v2541 = vmul.f32 %v2490, 0.35355338
  %v2542 = vmul.f32 %v2536, 0.35355338
  %v2543 = vadd.f32 %v2541, %v94
  %v2544 = vadd.f32 %v2542, %v95
  %v2545 = vsel %vm302, %v2543, -inf
  %2546 = vmax.xlane.f32.xlu0 %v2545
  %v2547 = vpop.xlane.xlu0 %2546
  %v2548 = vsel %vm302, %v2544, -inf
  %2549 = vmax.xlane.f32.xlu0 %v2548
  %v2550 = vpop.xlane.xlu0 %2549
  %v2551 = vsub.f32 %v2543, %v2547
  %v2552 = vsub.f32 %v2544, %v2550
  %v2553 = vmul.f32 %v2551, 1.442695
  %v2554 = vpow.pop %v2553
  %v2555 = vmul.f32 %v2552, 1.442695
  %v2556 = vpow.pop %v2555
  %v2557 = vsel %vm302, %v2554, 0.0
  %2558 = vadd.xlane.f32.xlu0 %v2557
  %v2559 = vpop.xlane.xlu0 %2558
  %v2560 = vsel %vm302, %v2556, 0.0
  %2561 = vadd.xlane.f32.xlu0 %v2560
  %v2562 = vpop.xlane.xlu0 %2561
  %v2563 = vrcp.pop %v2559
  %v2564 = vrcp.pop %v2562
  %v2565 = vmul.f32 %v2554, %v2563
  %v2566 = vmul.f32 %v2556, %v2564
  %v2567 = vpack.c.bf16 %v2565, %v2565
  %v2568 = vpack.c.bf16 %v2566, %v2566
  %v2570 = vsel %vm302, %v2567, 0
  %v2573 = vsel %vm426, %v2447, 0
  %2575 = vmatprep.subr.bf16.mxu0 0
  %2576 = vmatpush1.bf16.msra.mxu0 %v2573
  %2577 = vmatprep.subr.bf16.mxu0 0
  %2578 = vmatpush1.bf16.msra.mxu0 0
  %2579 = vmatprep.subr.bf16.mxu0 0
  %2580 = vmatpush1.bf16.msra.mxu0 0
  %2581 = vmatprep.subr.bf16.mxu0 0
  %2582 = vmatpush1.bf16.msra.mxu0 0
  %2583 = vmatprep.subr.bf16.mxu0 0
  %2584 = vmatpush1.bf16.msra.mxu0 0
  %2585 = vmatprep.subr.bf16.mxu0 0
  %2586 = vmatpush1.bf16.msra.mxu0 0
  %2587 = vmatprep.subr.bf16.mxu0 0
  %2588 = vmatpush1.bf16.msra.mxu0 0
  %2589 = vmatprep.subr.bf16.mxu0 0
  %2590 = vmatpush1.bf16.msra.mxu0 0
  %2591 = vmatprep.subr.bf16.mxu0 0
  %2592 = vmatpush1.bf16.msra.mxu0 0
  %2593 = vmatprep.subr.bf16.mxu0 0
  %2594 = vmatpush1.bf16.msra.mxu0 0
  %2595 = vmatprep.subr.bf16.mxu0 0
  %2596 = vmatpush1.bf16.msra.mxu0 0
  %2597 = vmatprep.subr.bf16.mxu0 0
  %2598 = vmatpush1.bf16.msra.mxu0 0
  %2599 = vmatprep.subr.bf16.mxu0 0
  %2600 = vmatpush1.bf16.msra.mxu0 0
  %2601 = vmatprep.subr.bf16.mxu0 0
  %2602 = vmatpush1.bf16.msra.mxu0 0
  %2603 = vmatprep.subr.bf16.mxu0 0
  %2604 = vmatpush1.bf16.msra.mxu0 0
  %2605 = vmatprep.subr.bf16.mxu0 0
  %2606 = vmatpush1.bf16.msra.mxu0 0
  %2607 = vmatprep.mubr.bf16.mxu0 0
  %2608 = vmatmul.mubr.bf16.gmra.mrb[0].mxu0 %v2570
  %v2609 = vpop.f32.mrb[0].mxu0
  %v2610 = vadd.f32 0.0, %v2609
  %v2611 = vpop.f32.mrb[0].mxu0
  %v2612 = vpop.f32.mrb[0].mxu0
  %v2613 = vpop.f32.mrb[0].mxu0
  %2614 = vdwg.mxu0
  %v2616 = vsel %vm302, %v2568, 0
  %v2619 = vsel %vm426, %v2448, 0
  %2621 = vmatprep.subr.bf16.mxu0 0
  %2622 = vmatpush1.bf16.msra.mxu0 %v2619
  %2623 = vmatprep.subr.bf16.mxu0 0
  %2624 = vmatpush1.bf16.msra.mxu0 0
  %2625 = vmatprep.subr.bf16.mxu0 0
  %2626 = vmatpush1.bf16.msra.mxu0 0
  %2627 = vmatprep.subr.bf16.mxu0 0
  %2628 = vmatpush1.bf16.msra.mxu0 0
  %2629 = vmatprep.subr.bf16.mxu0 0
  %2630 = vmatpush1.bf16.msra.mxu0 0
  %2631 = vmatprep.subr.bf16.mxu0 0
  %2632 = vmatpush1.bf16.msra.mxu0 0
  %2633 = vmatprep.subr.bf16.mxu0 0
  %2634 = vmatpush1.bf16.msra.mxu0 0
  %2635 = vmatprep.subr.bf16.mxu0 0
  %2636 = vmatpush1.bf16.msra.mxu0 0
  %2637 = vmatprep.subr.bf16.mxu0 0
  %2638 = vmatpush1.bf16.msra.mxu0 0
  %2639 = vmatprep.subr.bf16.mxu0 0
  %2640 = vmatpush1.bf16.msra.mxu0 0
  %2641 = vmatprep.subr.bf16.mxu0 0
  %2642 = vmatpush1.bf16.msra.mxu0 0
  %2643 = vmatprep.subr.bf16.mxu0 0
  %2644 = vmatpush1.bf16.msra.mxu0 0
  %2645 = vmatprep.subr.bf16.mxu0 0
  %2646 = vmatpush1.bf16.msra.mxu0 0
  %2647 = vmatprep.subr.bf16.mxu0 0
  %2648 = vmatpush1.bf16.msra.mxu0 0
  %2649 = vmatprep.subr.bf16.mxu0 0
  %2650 = vmatpush1.bf16.msra.mxu0 0
  %2651 = vmatprep.subr.bf16.mxu0 0
  %2652 = vmatpush1.bf16.msra.mxu0 0
  %2653 = vmatprep.mubr.bf16.mxu0 0
  %2654 = vmatmul.mubr.bf16.gmra.mrb[0].mxu0 %v2616
  %v2655 = vpop.f32.mrb[0].mxu0
  %v2656 = vadd.f32 0.0, %v2655
  %v2657 = vpop.f32.mrb[0].mxu0
  %v2658 = vpop.f32.mrb[0].mxu0
  %v2659 = vpop.f32.mrb[0].mxu0
  %2660 = vdwg.mxu0
  %v2661 = vpack.c.bf16 %v2656, %v2610
  %s2662 = scalar_lea.vmem %s5, 16
  %v2663 = vld [vmem:[%s2662] sm:$0xf]
  %s2664 = scalar_lea.vmem %s3, 208
  %v2665 = vld [vmem:[%s2664] sm:$0xf]
  %v2666 = vld [vmem:[%s2664 + $0x4] sm:$0xf]
  %v2667 = vld [vmem:[%s2664 + $0x8] sm:$0xf]
  %v2668 = vld [vmem:[%s2664 + $0xc] sm:$0xf]
  %s2669 = scalar_lea.vmem %s4, 13
  %v2670 = vld [vmem:[%s2669] sm:$0x1]
  %v2672 = vlaneseq
  %v2673 = vshrl.u32 %v2672, 7
  %v2674 = vsub.s32 0, %v2673
  %v2675 = vrot.slane %v2670, %v2674
  %v2681 = vunpack.c.l.b16 %v2665
  %v2682 = vunpack.c.l.b16 %v2666
  %v2683 = vunpack.c.l.b16 %v2667
  %v2684 = vunpack.c.l.b16 %v2668
  %v2685 = vpack.c.b16 %v2682, %v2681
  %v2686 = vpack.c.b16 %v2684, %v2683
  %2689 = vmatprep.subr.bf16.mxu0 0
  %2690 = vmatpush1.bf16.msra.mxu0 %v2685
  %2691 = vmatprep.subr.bf16.mxu0 0
  %2692 = vmatpush1.bf16.msra.mxu0 %v2686
  %2693 = vmatprep.subr.bf16.mxu0 0
  %2694 = vmatpush1.bf16.msra.mxu0 0
  %2695 = vmatprep.subr.bf16.mxu0 0
  %2696 = vmatpush1.bf16.msra.mxu0 0
  %2697 = vmatprep.subr.bf16.mxu0 0
  %2698 = vmatpush1.bf16.msra.mxu0 0
  %2699 = vmatprep.subr.bf16.mxu0 0
  %2700 = vmatpush1.bf16.msra.mxu0 0
  %2701 = vmatprep.subr.bf16.mxu0 0
  %2702 = vmatpush1.bf16.msra.mxu0 0
  %2703 = vmatprep.subr.bf16.mxu0 0
  %2704 = vmatpush1.bf16.msra.mxu0 0
  %2705 = vmatprep.subr.bf16.mxu0 0
  %2706 = vmatpush1.bf16.msra.mxu0 0
  %2707 = vmatprep.subr.bf16.mxu0 0
  %2708 = vmatpush1.bf16.msra.mxu0 0
  %2709 = vmatprep.subr.bf16.mxu0 0
  %2710 = vmatpush1.bf16.msra.mxu0 0
  %2711 = vmatprep.subr.bf16.mxu0 0
  %2712 = vmatpush1.bf16.msra.mxu0 0
  %2713 = vmatprep.subr.bf16.mxu0 0
  %2714 = vmatpush1.bf16.msra.mxu0 0
  %2715 = vmatprep.subr.bf16.mxu0 0
  %2716 = vmatpush1.bf16.msra.mxu0 0
  %2717 = vmatprep.subr.bf16.mxu0 0
  %2718 = vmatpush1.bf16.msra.mxu0 0
  %2719 = vmatprep.subr.bf16.mxu0 0
  %2720 = vmatpush1.bf16.msra.mxu0 0
  %2721 = vmatprep.mubr.bf16.mxu0 0
  %2722 = vmatmul.mubr.bf16.gmra.mrb[0].mxu0 %v2268
  %v2723 = vpop.f32.mrb[0].mxu0
  %v2724 = vadd.f32 %v2675, %v2723
  %v2725 = vpop.f32.mrb[0].mxu0
  %v2726 = vpop.f32.mrb[0].mxu0
  %v2727 = vadd.f32 %v2675, %v2726
  %v2728 = vpop.f32.mrb[0].mxu0
  %2729 = vdwg.mxu0
  %s2730 = scalar_lea.vmem %s3, 272
  %v2731 = vld [vmem:[%s2730] sm:$0xf]
  %v2732 = vld [vmem:[%s2730 + $0x4] sm:$0xf]
  %v2733 = vld [vmem:[%s2730 + $0x8] sm:$0xf]
  %v2734 = vld [vmem:[%s2730 + $0xc] sm:$0xf]
  %s2735 = scalar_lea.vmem %s4, 17
  %v2736 = vld [vmem:[%s2735] sm:$0x1]
  %v2738 = vlaneseq
  %v2739 = vshrl.u32 %v2738, 7
  %v2740 = vsub.s32 0, %v2739
  %v2741 = vrot.slane %v2736, %v2740
  %v2747 = vunpack.c.l.b16 %v2731
  %v2748 = vunpack.c.l.b16 %v2732
  %v2749 = vunpack.c.l.b16 %v2733
  %v2750 = vunpack.c.l.b16 %v2734
  %v2751 = vpack.c.b16 %v2748, %v2747
  %v2752 = vpack.c.b16 %v2750, %v2749
  %2755 = vmatprep.subr.bf16.mxu0 0
  %2756 = vmatpush1.bf16.msra.mxu0 %v2751
  %2757 = vmatprep.subr.bf16.mxu0 0
  %2758 = vmatpush1.bf16.msra.mxu0 %v2752
  %2759 = vmatprep.subr.bf16.mxu0 0
  %2760 = vmatpush1.bf16.msra.mxu0 0
  %2761 = vmatprep.subr.bf16.mxu0 0
  %2762 = vmatpush1.bf16.msra.mxu0 0
  %2763 = vmatprep.subr.bf16.mxu0 0
  %2764 = vmatpush1.bf16.msra.mxu0 0
  %2765 = vmatprep.subr.bf16.mxu0 0
  %2766 = vmatpush1.bf16.msra.mxu0 0
  %2767 = vmatprep.subr.bf16.mxu0 0
  %2768 = vmatpush1.bf16.msra.mxu0 0
  %2769 = vmatprep.subr.bf16.mxu0 0
  %2770 = vmatpush1.bf16.msra.mxu0 0
  %2771 = vmatprep.subr.bf16.mxu0 0
  %2772 = vmatpush1.bf16.msra.mxu0 0
  %2773 = vmatprep.subr.bf16.mxu0 0
  %2774 = vmatpush1.bf16.msra.mxu0 0
  %2775 = vmatprep.subr.bf16.mxu0 0
  %2776 = vmatpush1.bf16.msra.mxu0 0
  %2777 = vmatprep.subr.bf16.mxu0 0
  %2778 = vmatpush1.bf16.msra.mxu0 0
  %2779 = vmatprep.subr.bf16.mxu0 0
  %2780 = vmatpush1.bf16.msra.mxu0 0
  %2781 = vmatprep.subr.bf16.mxu0 0
  %2782 = vmatpush1.bf16.msra.mxu0 0
  %2783 = vmatprep.subr.bf16.mxu0 0
  %2784 = vmatpush1.bf16.msra.mxu0 0
  %2785 = vmatprep.subr.bf16.mxu0 0
  %2786 = vmatpush1.bf16.msra.mxu0 0
  %2787 = vmatprep.mubr.bf16.mxu0 0
  %2788 = vmatmul.mubr.bf16.gmra.mrb[0].mxu0 %v2268
  %v2789 = vpop.f32.mrb[0].mxu0
  %v2790 = vadd.f32 %v2741, %v2789
  %v2791 = vpop.f32.mrb[0].mxu0
  %v2792 = vpop.f32.mrb[0].mxu0
  %v2793 = vadd.f32 %v2741, %v2792
  %v2794 = vpop.f32.mrb[0].mxu0
  %2795 = vdwg.mxu0
  %s2796 = scalar_lea.vmem %s3, 336
  %v2797 = vld [vmem:[%s2796] sm:$0xf]
  %v2798 = vld [vmem:[%s2796 + $0x4] sm:$0xf]
  %v2799 = vld [vmem:[%s2796 + $0x8] sm:$0xf]
  %v2800 = vld [vmem:[%s2796 + $0xc] sm:$0xf]
  %s2801 = scalar_lea.vmem %s4, 21
  %v2802 = vld [vmem:[%s2801] sm:$0x1]
  %v2804 = vlaneseq
  %v2805 = vshrl.u32 %v2804, 7
  %v2806 = vsub.s32 0, %v2805
  %v2807 = vrot.slane %v2802, %v2806
  %v2813 = vunpack.c.l.b16 %v2797
  %v2814 = vunpack.c.l.b16 %v2798
  %v2815 = vunpack.c.l.b16 %v2799
  %v2816 = vunpack.c.l.b16 %v2800
  %v2817 = vpack.c.b16 %v2814, %v2813
  %v2818 = vpack.c.b16 %v2816, %v2815
  %2821 = vmatprep.subr.bf16.mxu0 0
  %2822 = vmatpush1.bf16.msra.mxu0 %v2817
  %2823 = vmatprep.subr.bf16.mxu0 0
  %2824 = vmatpush1.bf16.msra.mxu0 %v2818
  %2825 = vmatprep.subr.bf16.mxu0 0
  %2826 = vmatpush1.bf16.msra.mxu0 0
  %2827 = vmatprep.subr.bf16.mxu0 0
  %2828 = vmatpush1.bf16.msra.mxu0 0
  %2829 = vmatprep.subr.bf16.mxu0 0
  %2830 = vmatpush1.bf16.msra.mxu0 0
  %2831 = vmatprep.subr.bf16.mxu0 0
  %2832 = vmatpush1.bf16.msra.mxu0 0
  %2833 = vmatprep.subr.bf16.mxu0 0
  %2834 = vmatpush1.bf16.msra.mxu0 0
  %2835 = vmatprep.subr.bf16.mxu0 0
  %2836 = vmatpush1.bf16.msra.mxu0 0
  %2837 = vmatprep.subr.bf16.mxu0 0
  %2838 = vmatpush1.bf16.msra.mxu0 0
  %2839 = vmatprep.subr.bf16.mxu0 0
  %2840 = vmatpush1.bf16.msra.mxu0 0
  %2841 = vmatprep.subr.bf16.mxu0 0
  %2842 = vmatpush1.bf16.msra.mxu0 0
  %2843 = vmatprep.subr.bf16.mxu0 0
  %2844 = vmatpush1.bf16.msra.mxu0 0
  %2845 = vmatprep.subr.bf16.mxu0 0
  %2846 = vmatpush1.bf16.msra.mxu0 0
  %2847 = vmatprep.subr.bf16.mxu0 0
  %2848 = vmatpush1.bf16.msra.mxu0 0
  %2849 = vmatprep.subr.bf16.mxu0 0
  %2850 = vmatpush1.bf16.msra.mxu0 0
  %2851 = vmatprep.subr.bf16.mxu0 0
  %2852 = vmatpush1.bf16.msra.mxu0 0
  %2853 = vmatprep.mubr.bf16.mxu0 0
  %2854 = vmatmul.mubr.bf16.gmra.mrb[0].mxu0 %v2268
  %v2855 = vpop.f32.mrb[0].mxu0
  %v2856 = vadd.f32 %v2807, %v2855
  %v2857 = vpop.f32.mrb[0].mxu0
  %v2858 = vpop.f32.mrb[0].mxu0
  %v2859 = vadd.f32 %v2807, %v2858
  %v2860 = vpop.f32.mrb[0].mxu0
  %2861 = vdwg.mxu0
  %v2862 = vpack.c.bf16 %v2724, %v2724
  %v2863 = vpack.c.bf16 %v2727, %v2727
  %v2864 = vpack.c.bf16 %v2790, %v2790
  %v2865 = vpack.c.bf16 %v2793, %v2793
  %v2866 = vpack.c.bf16 %v2856, %v2856
  %v2867 = vpack.c.bf16 %v2859, %v2859
  %v2869 = vsel %vm302, %v2862, 0
  %v2872 = vsel %vm302, %v2864, 0
  %2874 = vmatprep.subr.bf16.mxu0 0
  %2875 = vmatpush1.bf16.xpose.msra.mxu0 %v2872
  %2876 = vmatprep.subr.bf16.mxu0 0
  %2877 = vmatpush1.bf16.xpose.msra.mxu0 0
  %2878 = vmatprep.subr.bf16.mxu0 0
  %2879 = vmatpush1.bf16.xpose.msra.mxu0 0
  %2880 = vmatprep.subr.bf16.mxu0 0
  %2881 = vmatpush1.bf16.xpose.msra.mxu0 0
  %2882 = vmatprep.subr.bf16.mxu0 0
  %2883 = vmatpush1.bf16.xpose.msra.mxu0 0
  %2884 = vmatprep.subr.bf16.mxu0 0
  %2885 = vmatpush1.bf16.xpose.msra.mxu0 0
  %2886 = vmatprep.subr.bf16.mxu0 0
  %2887 = vmatpush1.bf16.xpose.msra.mxu0 0
  %2888 = vmatprep.subr.bf16.mxu0 0
  %2889 = vmatpush1.bf16.xpose.msra.mxu0 0
  %2890 = vmatprep.subr.bf16.mxu0 0
  %2891 = vmatpush1.bf16.xpose.msra.mxu0 0
  %2892 = vmatprep.subr.bf16.mxu0 0
  %2893 = vmatpush1.bf16.xpose.msra.mxu0 0
  %2894 = vmatprep.subr.bf16.mxu0 0
  %2895 = vmatpush1.bf16.xpose.msra.mxu0 0
  %2896 = vmatprep.subr.bf16.mxu0 0
  %2897 = vmatpush1.bf16.xpose.msra.mxu0 0
  %2898 = vmatprep.subr.bf16.mxu0 0
  %2899 = vmatpush1.bf16.xpose.msra.mxu0 0
  %2900 = vmatprep.subr.bf16.mxu0 0
  %2901 = vmatpush1.bf16.xpose.msra.mxu0 0
  %2902 = vmatprep.subr.bf16.mxu0 0
  %2903 = vmatpush1.bf16.xpose.msra.mxu0 0
  %2904 = vmatprep.subr.bf16.mxu0 0
  %2905 = vmatpush1.bf16.xpose.msra.mxu0 0
  %2906 = vmatprep.mubr.bf16.mxu0 0
  %2907 = vmatmul.mubr.bf16.gmra.mrb[0].mxu0 %v2869
  %v2908 = vpop.f32.mrb[0].mxu0
  %v2909 = vadd.f32 0.0, %v2908
  %v2910 = vpop.f32.mrb[0].mxu0
  %v2911 = vpop.f32.mrb[0].mxu0
  %v2912 = vpop.f32.mrb[0].mxu0
  %2913 = vdwg.mxu0
  %v2915 = vsel %vm302, %v2863, 0
  %v2918 = vsel %vm302, %v2865, 0
  %2920 = vmatprep.subr.bf16.mxu0 0
  %2921 = vmatpush1.bf16.xpose.msra.mxu0 %v2918
  %2922 = vmatprep.subr.bf16.mxu0 0
  %2923 = vmatpush1.bf16.xpose.msra.mxu0 0
  %2924 = vmatprep.subr.bf16.mxu0 0
  %2925 = vmatpush1.bf16.xpose.msra.mxu0 0
  %2926 = vmatprep.subr.bf16.mxu0 0
  %2927 = vmatpush1.bf16.xpose.msra.mxu0 0
  %2928 = vmatprep.subr.bf16.mxu0 0
  %2929 = vmatpush1.bf16.xpose.msra.mxu0 0
  %2930 = vmatprep.subr.bf16.mxu0 0
  %2931 = vmatpush1.bf16.xpose.msra.mxu0 0
  %2932 = vmatprep.subr.bf16.mxu0 0
  %2933 = vmatpush1.bf16.xpose.msra.mxu0 0
  %2934 = vmatprep.subr.bf16.mxu0 0
  %2935 = vmatpush1.bf16.xpose.msra.mxu0 0
  %2936 = vmatprep.subr.bf16.mxu0 0
  %2937 = vmatpush1.bf16.xpose.msra.mxu0 0
  %2938 = vmatprep.subr.bf16.mxu0 0
  %2939 = vmatpush1.bf16.xpose.msra.mxu0 0
  %2940 = vmatprep.subr.bf16.mxu0 0
  %2941 = vmatpush1.bf16.xpose.msra.mxu0 0
  %2942 = vmatprep.subr.bf16.mxu0 0
  %2943 = vmatpush1.bf16.xpose.msra.mxu0 0
  %2944 = vmatprep.subr.bf16.mxu0 0
  %2945 = vmatpush1.bf16.xpose.msra.mxu0 0
  %2946 = vmatprep.subr.bf16.mxu0 0
  %2947 = vmatpush1.bf16.xpose.msra.mxu0 0
  %2948 = vmatprep.subr.bf16.mxu0 0
  %2949 = vmatpush1.bf16.xpose.msra.mxu0 0
  %2950 = vmatprep.subr.bf16.mxu0 0
  %2951 = vmatpush1.bf16.xpose.msra.mxu0 0
  %2952 = vmatprep.mubr.bf16.mxu0 0
  %2953 = vmatmul.mubr.bf16.gmra.mrb[0].mxu0 %v2915
  %v2954 = vpop.f32.mrb[0].mxu0
  %v2955 = vadd.f32 0.0, %v2954
  %v2956 = vpop.f32.mrb[0].mxu0
  %v2957 = vpop.f32.mrb[0].mxu0
  %v2958 = vpop.f32.mrb[0].mxu0
  %2959 = vdwg.mxu0
  %v2960 = vmul.f32 %v2909, 0.35355338
  %v2961 = vmul.f32 %v2955, 0.35355338
  %v2962 = vadd.f32 %v2960, %v94
  %v2963 = vadd.f32 %v2961, %v95
  %v2964 = vsel %vm302, %v2962, -inf
  %2965 = vmax.xlane.f32.xlu0 %v2964
  %v2966 = vpop.xlane.xlu0 %2965
  %v2967 = vsel %vm302, %v2963, -inf
  %2968 = vmax.xlane.f32.xlu0 %v2967
  %v2969 = vpop.xlane.xlu0 %2968
  %v2970 = vsub.f32 %v2962, %v2966
  %v2971 = vsub.f32 %v2963, %v2969
  %v2972 = vmul.f32 %v2970, 1.442695
  %v2973 = vpow.pop %v2972
  %v2974 = vmul.f32 %v2971, 1.442695
  %v2975 = vpow.pop %v2974
  %v2976 = vsel %vm302, %v2973, 0.0
  %2977 = vadd.xlane.f32.xlu0 %v2976
  %v2978 = vpop.xlane.xlu0 %2977
  %v2979 = vsel %vm302, %v2975, 0.0
  %2980 = vadd.xlane.f32.xlu0 %v2979
  %v2981 = vpop.xlane.xlu0 %2980
  %v2982 = vrcp.pop %v2978
  %v2983 = vrcp.pop %v2981
  %v2984 = vmul.f32 %v2973, %v2982
  %v2985 = vmul.f32 %v2975, %v2983
  %v2986 = vpack.c.bf16 %v2984, %v2984
  %v2987 = vpack.c.bf16 %v2985, %v2985
  %v2989 = vsel %vm302, %v2986, 0
  %v2992 = vsel %vm426, %v2866, 0
  %2994 = vmatprep.subr.bf16.mxu0 0
  %2995 = vmatpush1.bf16.msra.mxu0 %v2992
  %2996 = vmatprep.subr.bf16.mxu0 0
  %2997 = vmatpush1.bf16.msra.mxu0 0
  %2998 = vmatprep.subr.bf16.mxu0 0
  %2999 = vmatpush1.bf16.msra.mxu0 0
  %3000 = vmatprep.subr.bf16.mxu0 0
  %3001 = vmatpush1.bf16.msra.mxu0 0
  %3002 = vmatprep.subr.bf16.mxu0 0
  %3003 = vmatpush1.bf16.msra.mxu0 0
  %3004 = vmatprep.subr.bf16.mxu0 0
  %3005 = vmatpush1.bf16.msra.mxu0 0
  %3006 = vmatprep.subr.bf16.mxu0 0
  %3007 = vmatpush1.bf16.msra.mxu0 0
  %3008 = vmatprep.subr.bf16.mxu0 0
  %3009 = vmatpush1.bf16.msra.mxu0 0
  %3010 = vmatprep.subr.bf16.mxu0 0
  %3011 = vmatpush1.bf16.msra.mxu0 0
  %3012 = vmatprep.subr.bf16.mxu0 0
  %3013 = vmatpush1.bf16.msra.mxu0 0
  %3014 = vmatprep.subr.bf16.mxu0 0
  %3015 = vmatpush1.bf16.msra.mxu0 0
  %3016 = vmatprep.subr.bf16.mxu0 0
  %3017 = vmatpush1.bf16.msra.mxu0 0
  %3018 = vmatprep.subr.bf16.mxu0 0
  %3019 = vmatpush1.bf16.msra.mxu0 0
  %3020 = vmatprep.subr.bf16.mxu0 0
  %3021 = vmatpush1.bf16.msra.mxu0 0
  %3022 = vmatprep.subr.bf16.mxu0 0
  %3023 = vmatpush1.bf16.msra.mxu0 0
  %3024 = vmatprep.subr.bf16.mxu0 0
  %3025 = vmatpush1.bf16.msra.mxu0 0
  %3026 = vmatprep.mubr.bf16.mxu0 0
  %3027 = vmatmul.mubr.bf16.gmra.mrb[0].mxu0 %v2989
  %v3028 = vpop.f32.mrb[0].mxu0
  %v3029 = vadd.f32 0.0, %v3028
  %v3030 = vpop.f32.mrb[0].mxu0
  %v3031 = vpop.f32.mrb[0].mxu0
  %v3032 = vpop.f32.mrb[0].mxu0
  %3033 = vdwg.mxu0
  %v3035 = vsel %vm302, %v2987, 0
  %v3038 = vsel %vm426, %v2867, 0
  %3040 = vmatprep.subr.bf16.mxu0 0
  %3041 = vmatpush1.bf16.msra.mxu0 %v3038
  %3042 = vmatprep.subr.bf16.mxu0 0
  %3043 = vmatpush1.bf16.msra.mxu0 0
  %3044 = vmatprep.subr.bf16.mxu0 0
  %3045 = vmatpush1.bf16.msra.mxu0 0
  %3046 = vmatprep.subr.bf16.mxu0 0
  %3047 = vmatpush1.bf16.msra.mxu0 0
  %3048 = vmatprep.subr.bf16.mxu0 0
  %3049 = vmatpush1.bf16.msra.mxu0 0
  %3050 = vmatprep.subr.bf16.mxu0 0
  %3051 = vmatpush1.bf16.msra.mxu0 0
  %3052 = vmatprep.subr.bf16.mxu0 0
  %3053 = vmatpush1.bf16.msra.mxu0 0
  %3054 = vmatprep.subr.bf16.mxu0 0
  %3055 = vmatpush1.bf16.msra.mxu0 0
  %3056 = vmatprep.subr.bf16.mxu0 0
  %3057 = vmatpush1.bf16.msra.mxu0 0
  %3058 = vmatprep.subr.bf16.mxu0 0
  %3059 = vmatpush1.bf16.msra.mxu0 0
  %3060 = vmatprep.subr.bf16.mxu0 0
  %3061 = vmatpush1.bf16.msra.mxu0 0
  %3062 = vmatprep.subr.bf16.mxu0 0
  %3063 = vmatpush1.bf16.msra.mxu0 0
  %3064 = vmatprep.subr.bf16.mxu0 0
  %3065 = vmatpush1.bf16.msra.mxu0 0
  %3066 = vmatprep.subr.bf16.mxu0 0
  %3067 = vmatpush1.bf16.msra.mxu0 0
  %3068 = vmatprep.subr.bf16.mxu0 0
  %3069 = vmatpush1.bf16.msra.mxu0 0
  %3070 = vmatprep.subr.bf16.mxu0 0
  %3071 = vmatpush1.bf16.msra.mxu0 0
  %3072 = vmatprep.mubr.bf16.mxu0 0
  %3073 = vmatmul.mubr.bf16.gmra.mrb[0].mxu0 %v3035
  %v3074 = vpop.f32.mrb[0].mxu0
  %v3075 = vadd.f32 0.0, %v3074
  %v3076 = vpop.f32.mrb[0].mxu0
  %v3077 = vpop.f32.mrb[0].mxu0
  %v3078 = vpop.f32.mrb[0].mxu0
  %3079 = vdwg.mxu0
  %v3080 = vpack.c.bf16 %v3075, %v3029
  %s3081 = scalar_lea.vmem %s5, 20
  %v3082 = vld [vmem:[%s3081] sm:$0xf]
  %v3084 = vsel %vm302, %v3080, 0
  %v3087 = vsel %vm426, %v3082, 0
  %3089 = vmatprep.subr.bf16.mxu0 0
  %3090 = vmatpush1.bf16.msra.mxu0 %v3087
  %3091 = vmatprep.subr.bf16.mxu0 0
  %3092 = vmatpush1.bf16.msra.mxu0 0
  %3093 = vmatprep.subr.bf16.mxu0 0
  %3094 = vmatpush1.bf16.msra.mxu0 0
  %3095 = vmatprep.subr.bf16.mxu0 0
  %3096 = vmatpush1.bf16.msra.mxu0 0
  %3097 = vmatprep.subr.bf16.mxu0 0
  %3098 = vmatpush1.bf16.msra.mxu0 0
  %3099 = vmatprep.subr.bf16.mxu0 0
  %3100 = vmatpush1.bf16.msra.mxu0 0
  %3101 = vmatprep.subr.bf16.mxu0 0
  %3102 = vmatpush1.bf16.msra.mxu0 0
  %3103 = vmatprep.subr.bf16.mxu0 0
  %3104 = vmatpush1.bf16.msra.mxu0 0
  %3105 = vmatprep.subr.bf16.mxu0 0
  %3106 = vmatpush1.bf16.msra.mxu0 0
  %3107 = vmatprep.subr.bf16.mxu0 0
  %3108 = vmatpush1.bf16.msra.mxu0 0
  %3109 = vmatprep.subr.bf16.mxu0 0
  %3110 = vmatpush1.bf16.msra.mxu0 0
  %3111 = vmatprep.subr.bf16.mxu0 0
  %3112 = vmatpush1.bf16.msra.mxu0 0
  %3113 = vmatprep.subr.bf16.mxu0 0
  %3114 = vmatpush1.bf16.msra.mxu0 0
  %3115 = vmatprep.subr.bf16.mxu0 0
  %3116 = vmatpush1.bf16.msra.mxu0 0
  %3117 = vmatprep.subr.bf16.mxu0 0
  %3118 = vmatpush1.bf16.msra.mxu0 0
  %3119 = vmatprep.subr.bf16.mxu0 0
  %3120 = vmatpush1.bf16.msra.mxu0 0
  %3121 = vmatprep.mubr.bf16.mxu0 0
  %3122 = vmatmul.mubr.bf16.gmra.mrb[0].mxu0 %v3084
  %v3123 = vpop.f32.mrb[0].mxu0
  %v3124 = vadd.f32 0.0, %v3123
  %v3125 = vpop.f32.mrb[0].mxu0
  %v3126 = vpop.f32.mrb[0].mxu0
  %v3127 = vadd.f32 0.0, %v3126
  %v3128 = vpop.f32.mrb[0].mxu0
  %3129 = vdwg.mxu0
  %v3131 = vsel %vm302, %v2661, 0
  %v3134 = vsel %vm426, %v2663, 0
  %3136 = vmatprep.subr.bf16.mxu0 0
  %3137 = vmatpush1.bf16.msra.mxu0 %v3134
  %3138 = vmatprep.subr.bf16.mxu0 0
  %3139 = vmatpush1.bf16.msra.mxu0 0
  %3140 = vmatprep.subr.bf16.mxu0 0
  %3141 = vmatpush1.bf16.msra.mxu0 0
  %3142 = vmatprep.subr.bf16.mxu0 0
  %3143 = vmatpush1.bf16.msra.mxu0 0
  %3144 = vmatprep.subr.bf16.mxu0 0
  %3145 = vmatpush1.bf16.msra.mxu0 0
  %3146 = vmatprep.subr.bf16.mxu0 0
  %3147 = vmatpush1.bf16.msra.mxu0 0
  %3148 = vmatprep.subr.bf16.mxu0 0
  %3149 = vmatpush1.bf16.msra.mxu0 0
  %3150 = vmatprep.subr.bf16.mxu0 0
  %3151 = vmatpush1.bf16.msra.mxu0 0
  %3152 = vmatprep.subr.bf16.mxu0 0
  %3153 = vmatpush1.bf16.msra.mxu0 0
  %3154 = vmatprep.subr.bf16.mxu0 0
  %3155 = vmatpush1.bf16.msra.mxu0 0
  %3156 = vmatprep.subr.bf16.mxu0 0
  %3157 = vmatpush1.bf16.msra.mxu0 0
  %3158 = vmatprep.subr.bf16.mxu0 0
  %3159 = vmatpush1.bf16.msra.mxu0 0
  %3160 = vmatprep.subr.bf16.mxu0 0
  %3161 = vmatpush1.bf16.msra.mxu0 0
  %3162 = vmatprep.subr.bf16.mxu0 0
  %3163 = vmatpush1.bf16.msra.mxu0 0
  %3164 = vmatprep.subr.bf16.mxu0 0
  %3165 = vmatpush1.bf16.msra.mxu0 0
  %3166 = vmatprep.subr.bf16.mxu0 0
  %3167 = vmatpush1.bf16.msra.mxu0 0
  %3168 = vmatprep.mubr.bf16.mxu0 0
  %3169 = vmatmul.mubr.bf16.gmra.mrb[0].mxu0 %v3131
  %v3170 = vpop.f32.mrb[0].mxu0
  %v3171 = vadd.f32 %v3124, %v3170
  %v3172 = vpop.f32.mrb[0].mxu0
  %v3173 = vpop.f32.mrb[0].mxu0
  %v3174 = vadd.f32 %v3127, %v3173
  %v3175 = vpop.f32.mrb[0].mxu0
  %3176 = vdwg.mxu0
  %s3177 = scalar_lea.vmem %s3, 224
  %v3178 = vld [vmem:[%s3177] sm:$0xf]
  %v3179 = vld [vmem:[%s3177 + $0x4] sm:$0xf]
  %v3180 = vld [vmem:[%s3177 + $0x8] sm:$0xf]
  %v3181 = vld [vmem:[%s3177 + $0xc] sm:$0xf]
  %s3182 = scalar_lea.vmem %s4, 14
  %v3183 = vld [vmem:[%s3182] sm:$0x1]
  %v3185 = vlaneseq
  %v3186 = vshrl.u32 %v3185, 7
  %v3187 = vsub.s32 0, %v3186
  %v3188 = vrot.slane %v3183, %v3187
  %v3194 = vunpack.c.l.b16 %v3178
  %v3195 = vunpack.c.l.b16 %v3179
  %v3196 = vunpack.c.l.b16 %v3180
  %v3197 = vunpack.c.l.b16 %v3181
  %v3198 = vpack.c.b16 %v3195, %v3194
  %v3199 = vpack.c.b16 %v3197, %v3196
  %3202 = vmatprep.subr.bf16.mxu0 0
  %3203 = vmatpush1.bf16.msra.mxu0 %v3198
  %3204 = vmatprep.subr.bf16.mxu0 0
  %3205 = vmatpush1.bf16.msra.mxu0 %v3199
  %3206 = vmatprep.subr.bf16.mxu0 0
  %3207 = vmatpush1.bf16.msra.mxu0 0
  %3208 = vmatprep.subr.bf16.mxu0 0
  %3209 = vmatpush1.bf16.msra.mxu0 0
  %3210 = vmatprep.subr.bf16.mxu0 0
  %3211 = vmatpush1.bf16.msra.mxu0 0
  %3212 = vmatprep.subr.bf16.mxu0 0
  %3213 = vmatpush1.bf16.msra.mxu0 0
  %3214 = vmatprep.subr.bf16.mxu0 0
  %3215 = vmatpush1.bf16.msra.mxu0 0
  %3216 = vmatprep.subr.bf16.mxu0 0
  %3217 = vmatpush1.bf16.msra.mxu0 0
  %3218 = vmatprep.subr.bf16.mxu0 0
  %3219 = vmatpush1.bf16.msra.mxu0 0
  %3220 = vmatprep.subr.bf16.mxu0 0
  %3221 = vmatpush1.bf16.msra.mxu0 0
  %3222 = vmatprep.subr.bf16.mxu0 0
  %3223 = vmatpush1.bf16.msra.mxu0 0
  %3224 = vmatprep.subr.bf16.mxu0 0
  %3225 = vmatpush1.bf16.msra.mxu0 0
  %3226 = vmatprep.subr.bf16.mxu0 0
  %3227 = vmatpush1.bf16.msra.mxu0 0
  %3228 = vmatprep.subr.bf16.mxu0 0
  %3229 = vmatpush1.bf16.msra.mxu0 0
  %3230 = vmatprep.subr.bf16.mxu0 0
  %3231 = vmatpush1.bf16.msra.mxu0 0
  %3232 = vmatprep.subr.bf16.mxu0 0
  %3233 = vmatpush1.bf16.msra.mxu0 0
  %3234 = vmatprep.mubr.bf16.mxu0 0
  %3235 = vmatmul.mubr.bf16.gmra.mrb[0].mxu0 %v2268
  %v3236 = vpop.f32.mrb[0].mxu0
  %v3237 = vadd.f32 %v3188, %v3236
  %v3238 = vpop.f32.mrb[0].mxu0
  %v3239 = vpop.f32.mrb[0].mxu0
  %v3240 = vadd.f32 %v3188, %v3239
  %v3241 = vpop.f32.mrb[0].mxu0
  %3242 = vdwg.mxu0
  %s3243 = scalar_lea.vmem %s3, 288
  %v3244 = vld [vmem:[%s3243] sm:$0xf]
  %v3245 = vld [vmem:[%s3243 + $0x4] sm:$0xf]
  %v3246 = vld [vmem:[%s3243 + $0x8] sm:$0xf]
  %v3247 = vld [vmem:[%s3243 + $0xc] sm:$0xf]
  %s3248 = scalar_lea.vmem %s4, 18
  %v3249 = vld [vmem:[%s3248] sm:$0x1]
  %v3251 = vlaneseq
  %v3252 = vshrl.u32 %v3251, 7
  %v3253 = vsub.s32 0, %v3252
  %v3254 = vrot.slane %v3249, %v3253
  %v3260 = vunpack.c.l.b16 %v3244
  %v3261 = vunpack.c.l.b16 %v3245
  %v3262 = vunpack.c.l.b16 %v3246
  %v3263 = vunpack.c.l.b16 %v3247
  %v3264 = vpack.c.b16 %v3261, %v3260
  %v3265 = vpack.c.b16 %v3263, %v3262
  %3268 = vmatprep.subr.bf16.mxu0 0
  %3269 = vmatpush1.bf16.msra.mxu0 %v3264
  %3270 = vmatprep.subr.bf16.mxu0 0
  %3271 = vmatpush1.bf16.msra.mxu0 %v3265
  %3272 = vmatprep.subr.bf16.mxu0 0
  %3273 = vmatpush1.bf16.msra.mxu0 0
  %3274 = vmatprep.subr.bf16.mxu0 0
  %3275 = vmatpush1.bf16.msra.mxu0 0
  %3276 = vmatprep.subr.bf16.mxu0 0
  %3277 = vmatpush1.bf16.msra.mxu0 0
  %3278 = vmatprep.subr.bf16.mxu0 0
  %3279 = vmatpush1.bf16.msra.mxu0 0
  %3280 = vmatprep.subr.bf16.mxu0 0
  %3281 = vmatpush1.bf16.msra.mxu0 0
  %3282 = vmatprep.subr.bf16.mxu0 0
  %3283 = vmatpush1.bf16.msra.mxu0 0
  %3284 = vmatprep.subr.bf16.mxu0 0
  %3285 = vmatpush1.bf16.msra.mxu0 0
  %3286 = vmatprep.subr.bf16.mxu0 0
  %3287 = vmatpush1.bf16.msra.mxu0 0
  %3288 = vmatprep.subr.bf16.mxu0 0
  %3289 = vmatpush1.bf16.msra.mxu0 0
  %3290 = vmatprep.subr.bf16.mxu0 0
  %3291 = vmatpush1.bf16.msra.mxu0 0
  %3292 = vmatprep.subr.bf16.mxu0 0
  %3293 = vmatpush1.bf16.msra.mxu0 0
  %3294 = vmatprep.subr.bf16.mxu0 0
  %3295 = vmatpush1.bf16.msra.mxu0 0
  %3296 = vmatprep.subr.bf16.mxu0 0
  %3297 = vmatpush1.bf16.msra.mxu0 0
  %3298 = vmatprep.subr.bf16.mxu0 0
  %3299 = vmatpush1.bf16.msra.mxu0 0
  %3300 = vmatprep.mubr.bf16.mxu0 0
  %3301 = vmatmul.mubr.bf16.gmra.mrb[0].mxu0 %v2268
  %v3302 = vpop.f32.mrb[0].mxu0
  %v3303 = vadd.f32 %v3254, %v3302
  %v3304 = vpop.f32.mrb[0].mxu0
  %v3305 = vpop.f32.mrb[0].mxu0
  %v3306 = vadd.f32 %v3254, %v3305
  %v3307 = vpop.f32.mrb[0].mxu0
  %3308 = vdwg.mxu0
  %s3309 = scalar_lea.vmem %s3, 352
  %v3310 = vld [vmem:[%s3309] sm:$0xf]
  %v3311 = vld [vmem:[%s3309 + $0x4] sm:$0xf]
  %v3312 = vld [vmem:[%s3309 + $0x8] sm:$0xf]
  %v3313 = vld [vmem:[%s3309 + $0xc] sm:$0xf]
  %s3314 = scalar_lea.vmem %s4, 22
  %v3315 = vld [vmem:[%s3314] sm:$0x1]
  %v3317 = vlaneseq
  %v3318 = vshrl.u32 %v3317, 7
  %v3319 = vsub.s32 0, %v3318
  %v3320 = vrot.slane %v3315, %v3319
  %v3326 = vunpack.c.l.b16 %v3310
  %v3327 = vunpack.c.l.b16 %v3311
  %v3328 = vunpack.c.l.b16 %v3312
  %v3329 = vunpack.c.l.b16 %v3313
  %v3330 = vpack.c.b16 %v3327, %v3326
  %v3331 = vpack.c.b16 %v3329, %v3328
  %3334 = vmatprep.subr.bf16.mxu0 0
  %3335 = vmatpush1.bf16.msra.mxu0 %v3330
  %3336 = vmatprep.subr.bf16.mxu0 0
  %3337 = vmatpush1.bf16.msra.mxu0 %v3331
  %3338 = vmatprep.subr.bf16.mxu0 0
  %3339 = vmatpush1.bf16.msra.mxu0 0
  %3340 = vmatprep.subr.bf16.mxu0 0
  %3341 = vmatpush1.bf16.msra.mxu0 0
  %3342 = vmatprep.subr.bf16.mxu0 0
  %3343 = vmatpush1.bf16.msra.mxu0 0
  %3344 = vmatprep.subr.bf16.mxu0 0
  %3345 = vmatpush1.bf16.msra.mxu0 0
  %3346 = vmatprep.subr.bf16.mxu0 0
  %3347 = vmatpush1.bf16.msra.mxu0 0
  %3348 = vmatprep.subr.bf16.mxu0 0
  %3349 = vmatpush1.bf16.msra.mxu0 0
  %3350 = vmatprep.subr.bf16.mxu0 0
  %3351 = vmatpush1.bf16.msra.mxu0 0
  %3352 = vmatprep.subr.bf16.mxu0 0
  %3353 = vmatpush1.bf16.msra.mxu0 0
  %3354 = vmatprep.subr.bf16.mxu0 0
  %3355 = vmatpush1.bf16.msra.mxu0 0
  %3356 = vmatprep.subr.bf16.mxu0 0
  %3357 = vmatpush1.bf16.msra.mxu0 0
  %3358 = vmatprep.subr.bf16.mxu0 0
  %3359 = vmatpush1.bf16.msra.mxu0 0
  %3360 = vmatprep.subr.bf16.mxu0 0
  %3361 = vmatpush1.bf16.msra.mxu0 0
  %3362 = vmatprep.subr.bf16.mxu0 0
  %3363 = vmatpush1.bf16.msra.mxu0 0
  %3364 = vmatprep.subr.bf16.mxu0 0
  %3365 = vmatpush1.bf16.msra.mxu0 0
  %3366 = vmatprep.mubr.bf16.mxu0 0
  %3367 = vmatmul.mubr.bf16.gmra.mrb[0].mxu0 %v2268
  %v3368 = vpop.f32.mrb[0].mxu0
  %v3369 = vadd.f32 %v3320, %v3368
  %v3370 = vpop.f32.mrb[0].mxu0
  %v3371 = vpop.f32.mrb[0].mxu0
  %v3372 = vadd.f32 %v3320, %v3371
  %v3373 = vpop.f32.mrb[0].mxu0
  %3374 = vdwg.mxu0
  %v3375 = vpack.c.bf16 %v3237, %v3237
  %v3376 = vpack.c.bf16 %v3240, %v3240
  %v3377 = vpack.c.bf16 %v3303, %v3303
  %v3378 = vpack.c.bf16 %v3306, %v3306
  %v3379 = vpack.c.bf16 %v3369, %v3369
  %v3380 = vpack.c.bf16 %v3372, %v3372
  %v3382 = vsel %vm302, %v3375, 0
  %v3385 = vsel %vm302, %v3377, 0
  %3387 = vmatprep.subr.bf16.mxu0 0
  %3388 = vmatpush1.bf16.xpose.msra.mxu0 %v3385
  %3389 = vmatprep.subr.bf16.mxu0 0
  %3390 = vmatpush1.bf16.xpose.msra.mxu0 0
  %3391 = vmatprep.subr.bf16.mxu0 0
  %3392 = vmatpush1.bf16.xpose.msra.mxu0 0
  %3393 = vmatprep.subr.bf16.mxu0 0
  %3394 = vmatpush1.bf16.xpose.msra.mxu0 0
  %3395 = vmatprep.subr.bf16.mxu0 0
  %3396 = vmatpush1.bf16.xpose.msra.mxu0 0
  %3397 = vmatprep.subr.bf16.mxu0 0
  %3398 = vmatpush1.bf16.xpose.msra.mxu0 0
  %3399 = vmatprep.subr.bf16.mxu0 0
  %3400 = vmatpush1.bf16.xpose.msra.mxu0 0
  %3401 = vmatprep.subr.bf16.mxu0 0
  %3402 = vmatpush1.bf16.xpose.msra.mxu0 0
  %3403 = vmatprep.subr.bf16.mxu0 0
  %3404 = vmatpush1.bf16.xpose.msra.mxu0 0
  %3405 = vmatprep.subr.bf16.mxu0 0
  %3406 = vmatpush1.bf16.xpose.msra.mxu0 0
  %3407 = vmatprep.subr.bf16.mxu0 0
  %3408 = vmatpush1.bf16.xpose.msra.mxu0 0
  %3409 = vmatprep.subr.bf16.mxu0 0
  %3410 = vmatpush1.bf16.xpose.msra.mxu0 0
  %3411 = vmatprep.subr.bf16.mxu0 0
  %3412 = vmatpush1.bf16.xpose.msra.mxu0 0
  %3413 = vmatprep.subr.bf16.mxu0 0
  %3414 = vmatpush1.bf16.xpose.msra.mxu0 0
  %3415 = vmatprep.subr.bf16.mxu0 0
  %3416 = vmatpush1.bf16.xpose.msra.mxu0 0
  %3417 = vmatprep.subr.bf16.mxu0 0
  %3418 = vmatpush1.bf16.xpose.msra.mxu0 0
  %3419 = vmatprep.mubr.bf16.mxu0 0
  %3420 = vmatmul.mubr.bf16.gmra.mrb[0].mxu0 %v3382
  %v3421 = vpop.f32.mrb[0].mxu0
  %v3422 = vadd.f32 0.0, %v3421
  %v3423 = vpop.f32.mrb[0].mxu0
  %v3424 = vpop.f32.mrb[0].mxu0
  %v3425 = vpop.f32.mrb[0].mxu0
  %3426 = vdwg.mxu0
  %v3428 = vsel %vm302, %v3376, 0
  %v3431 = vsel %vm302, %v3378, 0
  %3433 = vmatprep.subr.bf16.mxu0 0
  %3434 = vmatpush1.bf16.xpose.msra.mxu0 %v3431
  %3435 = vmatprep.subr.bf16.mxu0 0
  %3436 = vmatpush1.bf16.xpose.msra.mxu0 0
  %3437 = vmatprep.subr.bf16.mxu0 0
  %3438 = vmatpush1.bf16.xpose.msra.mxu0 0
  %3439 = vmatprep.subr.bf16.mxu0 0
  %3440 = vmatpush1.bf16.xpose.msra.mxu0 0
  %3441 = vmatprep.subr.bf16.mxu0 0
  %3442 = vmatpush1.bf16.xpose.msra.mxu0 0
  %3443 = vmatprep.subr.bf16.mxu0 0
  %3444 = vmatpush1.bf16.xpose.msra.mxu0 0
  %3445 = vmatprep.subr.bf16.mxu0 0
  %3446 = vmatpush1.bf16.xpose.msra.mxu0 0
  %3447 = vmatprep.subr.bf16.mxu0 0
  %3448 = vmatpush1.bf16.xpose.msra.mxu0 0
  %3449 = vmatprep.subr.bf16.mxu0 0
  %3450 = vmatpush1.bf16.xpose.msra.mxu0 0
  %3451 = vmatprep.subr.bf16.mxu0 0
  %3452 = vmatpush1.bf16.xpose.msra.mxu0 0
  %3453 = vmatprep.subr.bf16.mxu0 0
  %3454 = vmatpush1.bf16.xpose.msra.mxu0 0
  %3455 = vmatprep.subr.bf16.mxu0 0
  %3456 = vmatpush1.bf16.xpose.msra.mxu0 0
  %3457 = vmatprep.subr.bf16.mxu0 0
  %3458 = vmatpush1.bf16.xpose.msra.mxu0 0
  %3459 = vmatprep.subr.bf16.mxu0 0
  %3460 = vmatpush1.bf16.xpose.msra.mxu0 0
  %3461 = vmatprep.subr.bf16.mxu0 0
  %3462 = vmatpush1.bf16.xpose.msra.mxu0 0
  %3463 = vmatprep.subr.bf16.mxu0 0
  %3464 = vmatpush1.bf16.xpose.msra.mxu0 0
  %3465 = vmatprep.mubr.bf16.mxu0 0
  %3466 = vmatmul.mubr.bf16.gmra.mrb[0].mxu0 %v3428
  %v3467 = vpop.f32.mrb[0].mxu0
  %v3468 = vadd.f32 0.0, %v3467
  %v3469 = vpop.f32.mrb[0].mxu0
  %v3470 = vpop.f32.mrb[0].mxu0
  %v3471 = vpop.f32.mrb[0].mxu0
  %3472 = vdwg.mxu0
  %v3473 = vmul.f32 %v3422, 0.35355338
  %v3474 = vmul.f32 %v3468, 0.35355338
  %v3475 = vadd.f32 %v3473, %v94
  %v3476 = vadd.f32 %v3474, %v95
  %v3477 = vsel %vm302, %v3475, -inf
  %3478 = vmax.xlane.f32.xlu0 %v3477
  %v3479 = vpop.xlane.xlu0 %3478
  %v3480 = vsel %vm302, %v3476, -inf
  %3481 = vmax.xlane.f32.xlu0 %v3480
  %v3482 = vpop.xlane.xlu0 %3481
  %v3483 = vsub.f32 %v3475, %v3479
  %v3484 = vsub.f32 %v3476, %v3482
  %v3485 = vmul.f32 %v3483, 1.442695
  %v3486 = vpow.pop %v3485
  %v3487 = vmul.f32 %v3484, 1.442695
  %v3488 = vpow.pop %v3487
  %v3489 = vsel %vm302, %v3486, 0.0
  %3490 = vadd.xlane.f32.xlu0 %v3489
  %v3491 = vpop.xlane.xlu0 %3490
  %v3492 = vsel %vm302, %v3488, 0.0
  %3493 = vadd.xlane.f32.xlu0 %v3492
  %v3494 = vpop.xlane.xlu0 %3493
  %v3495 = vrcp.pop %v3491
  %v3496 = vrcp.pop %v3494
  %v3497 = vmul.f32 %v3486, %v3495
  %v3498 = vmul.f32 %v3488, %v3496
  %v3499 = vpack.c.bf16 %v3497, %v3497
  %v3500 = vpack.c.bf16 %v3498, %v3498
  %v3502 = vsel %vm302, %v3499, 0
  %v3505 = vsel %vm426, %v3379, 0
  %3507 = vmatprep.subr.bf16.mxu0 0
  %3508 = vmatpush1.bf16.msra.mxu0 %v3505
  %3509 = vmatprep.subr.bf16.mxu0 0
  %3510 = vmatpush1.bf16.msra.mxu0 0
  %3511 = vmatprep.subr.bf16.mxu0 0
  %3512 = vmatpush1.bf16.msra.mxu0 0
  %3513 = vmatprep.subr.bf16.mxu0 0
  %3514 = vmatpush1.bf16.msra.mxu0 0
  %3515 = vmatprep.subr.bf16.mxu0 0
  %3516 = vmatpush1.bf16.msra.mxu0 0
  %3517 = vmatprep.subr.bf16.mxu0 0
  %3518 = vmatpush1.bf16.msra.mxu0 0
  %3519 = vmatprep.subr.bf16.mxu0 0
  %3520 = vmatpush1.bf16.msra.mxu0 0
  %3521 = vmatprep.subr.bf16.mxu0 0
  %3522 = vmatpush1.bf16.msra.mxu0 0
  %3523 = vmatprep.subr.bf16.mxu0 0
  %3524 = vmatpush1.bf16.msra.mxu0 0
  %3525 = vmatprep.subr.bf16.mxu0 0
  %3526 = vmatpush1.bf16.msra.mxu0 0
  %3527 = vmatprep.subr.bf16.mxu0 0
  %3528 = vmatpush1.bf16.msra.mxu0 0
  %3529 = vmatprep.subr.bf16.mxu0 0
  %3530 = vmatpush1.bf16.msra.mxu0 0
  %3531 = vmatprep.subr.bf16.mxu0 0
  %3532 = vmatpush1.bf16.msra.mxu0 0
  %3533 = vmatprep.subr.bf16.mxu0 0
  %3534 = vmatpush1.bf16.msra.mxu0 0
  %3535 = vmatprep.subr.bf16.mxu0 0
  %3536 = vmatpush1.bf16.msra.mxu0 0
  %3537 = vmatprep.subr.bf16.mxu0 0
  %3538 = vmatpush1.bf16.msra.mxu0 0
  %3539 = vmatprep.mubr.bf16.mxu0 0
  %3540 = vmatmul.mubr.bf16.gmra.mrb[0].mxu0 %v3502
  %v3541 = vpop.f32.mrb[0].mxu0
  %v3542 = vadd.f32 0.0, %v3541
  %v3543 = vpop.f32.mrb[0].mxu0
  %v3544 = vpop.f32.mrb[0].mxu0
  %v3545 = vpop.f32.mrb[0].mxu0
  %3546 = vdwg.mxu0
  %v3548 = vsel %vm302, %v3500, 0
  %v3551 = vsel %vm426, %v3380, 0
  %3553 = vmatprep.subr.bf16.mxu0 0
  %3554 = vmatpush1.bf16.msra.mxu0 %v3551
  %3555 = vmatprep.subr.bf16.mxu0 0
  %3556 = vmatpush1.bf16.msra.mxu0 0
  %3557 = vmatprep.subr.bf16.mxu0 0
  %3558 = vmatpush1.bf16.msra.mxu0 0
  %3559 = vmatprep.subr.bf16.mxu0 0
  %3560 = vmatpush1.bf16.msra.mxu0 0
  %3561 = vmatprep.subr.bf16.mxu0 0
  %3562 = vmatpush1.bf16.msra.mxu0 0
  %3563 = vmatprep.subr.bf16.mxu0 0
  %3564 = vmatpush1.bf16.msra.mxu0 0
  %3565 = vmatprep.subr.bf16.mxu0 0
  %3566 = vmatpush1.bf16.msra.mxu0 0
  %3567 = vmatprep.subr.bf16.mxu0 0
  %3568 = vmatpush1.bf16.msra.mxu0 0
  %3569 = vmatprep.subr.bf16.mxu0 0
  %3570 = vmatpush1.bf16.msra.mxu0 0
  %3571 = vmatprep.subr.bf16.mxu0 0
  %3572 = vmatpush1.bf16.msra.mxu0 0
  %3573 = vmatprep.subr.bf16.mxu0 0
  %3574 = vmatpush1.bf16.msra.mxu0 0
  %3575 = vmatprep.subr.bf16.mxu0 0
  %3576 = vmatpush1.bf16.msra.mxu0 0
  %3577 = vmatprep.subr.bf16.mxu0 0
  %3578 = vmatpush1.bf16.msra.mxu0 0
  %3579 = vmatprep.subr.bf16.mxu0 0
  %3580 = vmatpush1.bf16.msra.mxu0 0
  %3581 = vmatprep.subr.bf16.mxu0 0
  %3582 = vmatpush1.bf16.msra.mxu0 0
  %3583 = vmatprep.subr.bf16.mxu0 0
  %3584 = vmatpush1.bf16.msra.mxu0 0
  %3585 = vmatprep.mubr.bf16.mxu0 0
  %3586 = vmatmul.mubr.bf16.gmra.mrb[0].mxu0 %v3548
  %v3587 = vpop.f32.mrb[0].mxu0
  %v3588 = vadd.f32 0.0, %v3587
  %v3589 = vpop.f32.mrb[0].mxu0
  %v3590 = vpop.f32.mrb[0].mxu0
  %v3591 = vpop.f32.mrb[0].mxu0
  %3592 = vdwg.mxu0
  %v3593 = vpack.c.bf16 %v3588, %v3542
  %s3594 = scalar_lea.vmem %s5, 24
  %v3595 = vld [vmem:[%s3594] sm:$0xf]
  %v3597 = vsel %vm302, %v3593, 0
  %v3600 = vsel %vm426, %v3595, 0
  %3602 = vmatprep.subr.bf16.mxu0 0
  %3603 = vmatpush1.bf16.msra.mxu0 %v3600
  %3604 = vmatprep.subr.bf16.mxu0 0
  %3605 = vmatpush1.bf16.msra.mxu0 0
  %3606 = vmatprep.subr.bf16.mxu0 0
  %3607 = vmatpush1.bf16.msra.mxu0 0
  %3608 = vmatprep.subr.bf16.mxu0 0
  %3609 = vmatpush1.bf16.msra.mxu0 0
  %3610 = vmatprep.subr.bf16.mxu0 0
  %3611 = vmatpush1.bf16.msra.mxu0 0
  %3612 = vmatprep.subr.bf16.mxu0 0
  %3613 = vmatpush1.bf16.msra.mxu0 0
  %3614 = vmatprep.subr.bf16.mxu0 0
  %3615 = vmatpush1.bf16.msra.mxu0 0
  %3616 = vmatprep.subr.bf16.mxu0 0
  %3617 = vmatpush1.bf16.msra.mxu0 0
  %3618 = vmatprep.subr.bf16.mxu0 0
  %3619 = vmatpush1.bf16.msra.mxu0 0
  %3620 = vmatprep.subr.bf16.mxu0 0
  %3621 = vmatpush1.bf16.msra.mxu0 0
  %3622 = vmatprep.subr.bf16.mxu0 0
  %3623 = vmatpush1.bf16.msra.mxu0 0
  %3624 = vmatprep.subr.bf16.mxu0 0
  %3625 = vmatpush1.bf16.msra.mxu0 0
  %3626 = vmatprep.subr.bf16.mxu0 0
  %3627 = vmatpush1.bf16.msra.mxu0 0
  %3628 = vmatprep.subr.bf16.mxu0 0
  %3629 = vmatpush1.bf16.msra.mxu0 0
  %3630 = vmatprep.subr.bf16.mxu0 0
  %3631 = vmatpush1.bf16.msra.mxu0 0
  %3632 = vmatprep.subr.bf16.mxu0 0
  %3633 = vmatpush1.bf16.msra.mxu0 0
  %3634 = vmatprep.mubr.bf16.mxu0 0
  %3635 = vmatmul.mubr.bf16.gmra.mrb[0].mxu0 %v3597
  %v3636 = vpop.f32.mrb[0].mxu0
  %v3637 = vadd.f32 0.0, %v3636
  %v3638 = vpop.f32.mrb[0].mxu0
  %v3639 = vpop.f32.mrb[0].mxu0
  %v3640 = vadd.f32 0.0, %v3639
  %v3641 = vpop.f32.mrb[0].mxu0
  %3642 = vdwg.mxu0
  %v3643 = vadd.f32 %v3171, %v3637
  %v3644 = vadd.f32 %v3174, %v3640
  %s3645 = scalar_lea.vmem %s3, 240
  %v3646 = vld [vmem:[%s3645] sm:$0xf]
  %v3647 = vld [vmem:[%s3645 + $0x4] sm:$0xf]
  %v3648 = vld [vmem:[%s3645 + $0x8] sm:$0xf]
  %v3649 = vld [vmem:[%s3645 + $0xc] sm:$0xf]
  %s3650 = scalar_lea.vmem %s4, 15
  %v3651 = vld [vmem:[%s3650] sm:$0x1]
  %v3653 = vlaneseq
  %v3654 = vshrl.u32 %v3653, 7
  %v3655 = vsub.s32 0, %v3654
  %v3656 = vrot.slane %v3651, %v3655
  %v3662 = vunpack.c.l.b16 %v3646
  %v3663 = vunpack.c.l.b16 %v3647
  %v3664 = vunpack.c.l.b16 %v3648
  %v3665 = vunpack.c.l.b16 %v3649
  %v3666 = vpack.c.b16 %v3663, %v3662
  %v3667 = vpack.c.b16 %v3665, %v3664
  %3670 = vmatprep.subr.bf16.mxu0 0
  %3671 = vmatpush1.bf16.msra.mxu0 %v3666
  %3672 = vmatprep.subr.bf16.mxu0 0
  %3673 = vmatpush1.bf16.msra.mxu0 %v3667
  %3674 = vmatprep.subr.bf16.mxu0 0
  %3675 = vmatpush1.bf16.msra.mxu0 0
  %3676 = vmatprep.subr.bf16.mxu0 0
  %3677 = vmatpush1.bf16.msra.mxu0 0
  %3678 = vmatprep.subr.bf16.mxu0 0
  %3679 = vmatpush1.bf16.msra.mxu0 0
  %3680 = vmatprep.subr.bf16.mxu0 0
  %3681 = vmatpush1.bf16.msra.mxu0 0
  %3682 = vmatprep.subr.bf16.mxu0 0
  %3683 = vmatpush1.bf16.msra.mxu0 0
  %3684 = vmatprep.subr.bf16.mxu0 0
  %3685 = vmatpush1.bf16.msra.mxu0 0
  %3686 = vmatprep.subr.bf16.mxu0 0
  %3687 = vmatpush1.bf16.msra.mxu0 0
  %3688 = vmatprep.subr.bf16.mxu0 0
  %3689 = vmatpush1.bf16.msra.mxu0 0
  %3690 = vmatprep.subr.bf16.mxu0 0
  %3691 = vmatpush1.bf16.msra.mxu0 0
  %3692 = vmatprep.subr.bf16.mxu0 0
  %3693 = vmatpush1.bf16.msra.mxu0 0
  %3694 = vmatprep.subr.bf16.mxu0 0
  %3695 = vmatpush1.bf16.msra.mxu0 0
  %3696 = vmatprep.subr.bf16.mxu0 0
  %3697 = vmatpush1.bf16.msra.mxu0 0
  %3698 = vmatprep.subr.bf16.mxu0 0
  %3699 = vmatpush1.bf16.msra.mxu0 0
  %3700 = vmatprep.subr.bf16.mxu0 0
  %3701 = vmatpush1.bf16.msra.mxu0 0
  %3702 = vmatprep.mubr.bf16.mxu0 0
  %3703 = vmatmul.mubr.bf16.gmra.mrb[0].mxu0 %v2268
  %v3704 = vpop.f32.mrb[0].mxu0
  %v3705 = vadd.f32 %v3656, %v3704
  %v3706 = vpop.f32.mrb[0].mxu0
  %v3707 = vpop.f32.mrb[0].mxu0
  %v3708 = vadd.f32 %v3656, %v3707
  %v3709 = vpop.f32.mrb[0].mxu0
  %3710 = vdwg.mxu0
  %s3711 = scalar_lea.vmem %s3, 304
  %v3712 = vld [vmem:[%s3711] sm:$0xf]
  %v3713 = vld [vmem:[%s3711 + $0x4] sm:$0xf]
  %v3714 = vld [vmem:[%s3711 + $0x8] sm:$0xf]
  %v3715 = vld [vmem:[%s3711 + $0xc] sm:$0xf]
  %s3716 = scalar_lea.vmem %s4, 19
  %v3717 = vld [vmem:[%s3716] sm:$0x1]
  %v3719 = vlaneseq
  %v3720 = vshrl.u32 %v3719, 7
  %v3721 = vsub.s32 0, %v3720
  %v3722 = vrot.slane %v3717, %v3721
  %v3728 = vunpack.c.l.b16 %v3712
  %v3729 = vunpack.c.l.b16 %v3713
  %v3730 = vunpack.c.l.b16 %v3714
  %v3731 = vunpack.c.l.b16 %v3715
  %v3732 = vpack.c.b16 %v3729, %v3728
  %v3733 = vpack.c.b16 %v3731, %v3730
  %3736 = vmatprep.subr.bf16.mxu0 0
  %3737 = vmatpush1.bf16.msra.mxu0 %v3732
  %3738 = vmatprep.subr.bf16.mxu0 0
  %3739 = vmatpush1.bf16.msra.mxu0 %v3733
  %3740 = vmatprep.subr.bf16.mxu0 0
  %3741 = vmatpush1.bf16.msra.mxu0 0
  %3742 = vmatprep.subr.bf16.mxu0 0
  %3743 = vmatpush1.bf16.msra.mxu0 0
  %3744 = vmatprep.subr.bf16.mxu0 0
  %3745 = vmatpush1.bf16.msra.mxu0 0
  %3746 = vmatprep.subr.bf16.mxu0 0
  %3747 = vmatpush1.bf16.msra.mxu0 0
  %3748 = vmatprep.subr.bf16.mxu0 0
  %3749 = vmatpush1.bf16.msra.mxu0 0
  %3750 = vmatprep.subr.bf16.mxu0 0
  %3751 = vmatpush1.bf16.msra.mxu0 0
  %3752 = vmatprep.subr.bf16.mxu0 0
  %3753 = vmatpush1.bf16.msra.mxu0 0
  %3754 = vmatprep.subr.bf16.mxu0 0
  %3755 = vmatpush1.bf16.msra.mxu0 0
  %3756 = vmatprep.subr.bf16.mxu0 0
  %3757 = vmatpush1.bf16.msra.mxu0 0
  %3758 = vmatprep.subr.bf16.mxu0 0
  %3759 = vmatpush1.bf16.msra.mxu0 0
  %3760 = vmatprep.subr.bf16.mxu0 0
  %3761 = vmatpush1.bf16.msra.mxu0 0
  %3762 = vmatprep.subr.bf16.mxu0 0
  %3763 = vmatpush1.bf16.msra.mxu0 0
  %3764 = vmatprep.subr.bf16.mxu0 0
  %3765 = vmatpush1.bf16.msra.mxu0 0
  %3766 = vmatprep.subr.bf16.mxu0 0
  %3767 = vmatpush1.bf16.msra.mxu0 0
  %3768 = vmatprep.mubr.bf16.mxu0 0
  %3769 = vmatmul.mubr.bf16.gmra.mrb[0].mxu0 %v2268
  %v3770 = vpop.f32.mrb[0].mxu0
  %v3771 = vadd.f32 %v3722, %v3770
  %v3772 = vpop.f32.mrb[0].mxu0
  %v3773 = vpop.f32.mrb[0].mxu0
  %v3774 = vadd.f32 %v3722, %v3773
  %v3775 = vpop.f32.mrb[0].mxu0
  %3776 = vdwg.mxu0
  %s3777 = scalar_lea.vmem %s3, 368
  %v3778 = vld [vmem:[%s3777] sm:$0xf]
  %v3779 = vld [vmem:[%s3777 + $0x4] sm:$0xf]
  %v3780 = vld [vmem:[%s3777 + $0x8] sm:$0xf]
  %v3781 = vld [vmem:[%s3777 + $0xc] sm:$0xf]
  %s3782 = scalar_lea.vmem %s4, 23
  %v3783 = vld [vmem:[%s3782] sm:$0x1]
  %v3785 = vlaneseq
  %v3786 = vshrl.u32 %v3785, 7
  %v3787 = vsub.s32 0, %v3786
  %v3788 = vrot.slane %v3783, %v3787
  %v3794 = vunpack.c.l.b16 %v3778
  %v3795 = vunpack.c.l.b16 %v3779
  %v3796 = vunpack.c.l.b16 %v3780
  %v3797 = vunpack.c.l.b16 %v3781
  %v3798 = vpack.c.b16 %v3795, %v3794
  %v3799 = vpack.c.b16 %v3797, %v3796
  %3802 = vmatprep.subr.bf16.mxu0 0
  %3803 = vmatpush1.bf16.msra.mxu0 %v3798
  %3804 = vmatprep.subr.bf16.mxu0 0
  %3805 = vmatpush1.bf16.msra.mxu0 %v3799
  %3806 = vmatprep.subr.bf16.mxu0 0
  %3807 = vmatpush1.bf16.msra.mxu0 0
  %3808 = vmatprep.subr.bf16.mxu0 0
  %3809 = vmatpush1.bf16.msra.mxu0 0
  %3810 = vmatprep.subr.bf16.mxu0 0
  %3811 = vmatpush1.bf16.msra.mxu0 0
  %3812 = vmatprep.subr.bf16.mxu0 0
  %3813 = vmatpush1.bf16.msra.mxu0 0
  %3814 = vmatprep.subr.bf16.mxu0 0
  %3815 = vmatpush1.bf16.msra.mxu0 0
  %3816 = vmatprep.subr.bf16.mxu0 0
  %3817 = vmatpush1.bf16.msra.mxu0 0
  %3818 = vmatprep.subr.bf16.mxu0 0
  %3819 = vmatpush1.bf16.msra.mxu0 0
  %3820 = vmatprep.subr.bf16.mxu0 0
  %3821 = vmatpush1.bf16.msra.mxu0 0
  %3822 = vmatprep.subr.bf16.mxu0 0
  %3823 = vmatpush1.bf16.msra.mxu0 0
  %3824 = vmatprep.subr.bf16.mxu0 0
  %3825 = vmatpush1.bf16.msra.mxu0 0
  %3826 = vmatprep.subr.bf16.mxu0 0
  %3827 = vmatpush1.bf16.msra.mxu0 0
  %3828 = vmatprep.subr.bf16.mxu0 0
  %3829 = vmatpush1.bf16.msra.mxu0 0
  %3830 = vmatprep.subr.bf16.mxu0 0
  %3831 = vmatpush1.bf16.msra.mxu0 0
  %3832 = vmatprep.subr.bf16.mxu0 0
  %3833 = vmatpush1.bf16.msra.mxu0 0
  %3834 = vmatprep.mubr.bf16.mxu0 0
  %3835 = vmatmul.mubr.bf16.gmra.mrb[0].mxu0 %v2268
  %v3836 = vpop.f32.mrb[0].mxu0
  %v3837 = vadd.f32 %v3788, %v3836
  %v3838 = vpop.f32.mrb[0].mxu0
  %v3839 = vpop.f32.mrb[0].mxu0
  %v3840 = vadd.f32 %v3788, %v3839
  %v3841 = vpop.f32.mrb[0].mxu0
  %3842 = vdwg.mxu0
  %v3843 = vpack.c.bf16 %v3705, %v3705
  %v3844 = vpack.c.bf16 %v3708, %v3708
  %v3845 = vpack.c.bf16 %v3771, %v3771
  %v3846 = vpack.c.bf16 %v3774, %v3774
  %v3847 = vpack.c.bf16 %v3837, %v3837
  %v3848 = vpack.c.bf16 %v3840, %v3840
  %v3850 = vsel %vm302, %v3843, 0
  %v3853 = vsel %vm302, %v3845, 0
  %3855 = vmatprep.subr.bf16.mxu0 0
  %3856 = vmatpush1.bf16.xpose.msra.mxu0 %v3853
  %3857 = vmatprep.subr.bf16.mxu0 0
  %3858 = vmatpush1.bf16.xpose.msra.mxu0 0
  %3859 = vmatprep.subr.bf16.mxu0 0
  %3860 = vmatpush1.bf16.xpose.msra.mxu0 0
  %3861 = vmatprep.subr.bf16.mxu0 0
  %3862 = vmatpush1.bf16.xpose.msra.mxu0 0
  %3863 = vmatprep.subr.bf16.mxu0 0
  %3864 = vmatpush1.bf16.xpose.msra.mxu0 0
  %3865 = vmatprep.subr.bf16.mxu0 0
  %3866 = vmatpush1.bf16.xpose.msra.mxu0 0
  %3867 = vmatprep.subr.bf16.mxu0 0
  %3868 = vmatpush1.bf16.xpose.msra.mxu0 0
  %3869 = vmatprep.subr.bf16.mxu0 0
  %3870 = vmatpush1.bf16.xpose.msra.mxu0 0
  %3871 = vmatprep.subr.bf16.mxu0 0
  %3872 = vmatpush1.bf16.xpose.msra.mxu0 0
  %3873 = vmatprep.subr.bf16.mxu0 0
  %3874 = vmatpush1.bf16.xpose.msra.mxu0 0
  %3875 = vmatprep.subr.bf16.mxu0 0
  %3876 = vmatpush1.bf16.xpose.msra.mxu0 0
  %3877 = vmatprep.subr.bf16.mxu0 0
  %3878 = vmatpush1.bf16.xpose.msra.mxu0 0
  %3879 = vmatprep.subr.bf16.mxu0 0
  %3880 = vmatpush1.bf16.xpose.msra.mxu0 0
  %3881 = vmatprep.subr.bf16.mxu0 0
  %3882 = vmatpush1.bf16.xpose.msra.mxu0 0
  %3883 = vmatprep.subr.bf16.mxu0 0
  %3884 = vmatpush1.bf16.xpose.msra.mxu0 0
  %3885 = vmatprep.subr.bf16.mxu0 0
  %3886 = vmatpush1.bf16.xpose.msra.mxu0 0
  %3887 = vmatprep.mubr.bf16.mxu0 0
  %3888 = vmatmul.mubr.bf16.gmra.mrb[0].mxu0 %v3850
  %v3889 = vpop.f32.mrb[0].mxu0
  %v3890 = vadd.f32 0.0, %v3889
  %v3891 = vpop.f32.mrb[0].mxu0
  %v3892 = vpop.f32.mrb[0].mxu0
  %v3893 = vpop.f32.mrb[0].mxu0
  %3894 = vdwg.mxu0
  %v3896 = vsel %vm302, %v3844, 0
  %v3899 = vsel %vm302, %v3846, 0
  %3901 = vmatprep.subr.bf16.mxu0 0
  %3902 = vmatpush1.bf16.xpose.msra.mxu0 %v3899
  %3903 = vmatprep.subr.bf16.mxu0 0
  %3904 = vmatpush1.bf16.xpose.msra.mxu0 0
  %3905 = vmatprep.subr.bf16.mxu0 0
  %3906 = vmatpush1.bf16.xpose.msra.mxu0 0
  %3907 = vmatprep.subr.bf16.mxu0 0
  %3908 = vmatpush1.bf16.xpose.msra.mxu0 0
  %3909 = vmatprep.subr.bf16.mxu0 0
  %3910 = vmatpush1.bf16.xpose.msra.mxu0 0
  %3911 = vmatprep.subr.bf16.mxu0 0
  %3912 = vmatpush1.bf16.xpose.msra.mxu0 0
  %3913 = vmatprep.subr.bf16.mxu0 0
  %3914 = vmatpush1.bf16.xpose.msra.mxu0 0
  %3915 = vmatprep.subr.bf16.mxu0 0
  %3916 = vmatpush1.bf16.xpose.msra.mxu0 0
  %3917 = vmatprep.subr.bf16.mxu0 0
  %3918 = vmatpush1.bf16.xpose.msra.mxu0 0
  %3919 = vmatprep.subr.bf16.mxu0 0
  %3920 = vmatpush1.bf16.xpose.msra.mxu0 0
  %3921 = vmatprep.subr.bf16.mxu0 0
  %3922 = vmatpush1.bf16.xpose.msra.mxu0 0
  %3923 = vmatprep.subr.bf16.mxu0 0
  %3924 = vmatpush1.bf16.xpose.msra.mxu0 0
  %3925 = vmatprep.subr.bf16.mxu0 0
  %3926 = vmatpush1.bf16.xpose.msra.mxu0 0
  %3927 = vmatprep.subr.bf16.mxu0 0
  %3928 = vmatpush1.bf16.xpose.msra.mxu0 0
  %3929 = vmatprep.subr.bf16.mxu0 0
  %3930 = vmatpush1.bf16.xpose.msra.mxu0 0
  %3931 = vmatprep.subr.bf16.mxu0 0
  %3932 = vmatpush1.bf16.xpose.msra.mxu0 0
  %3933 = vmatprep.mubr.bf16.mxu0 0
  %3934 = vmatmul.mubr.bf16.gmra.mrb[0].mxu0 %v3896
  %v3935 = vpop.f32.mrb[0].mxu0
  %v3936 = vadd.f32 0.0, %v3935
  %v3937 = vpop.f32.mrb[0].mxu0
  %v3938 = vpop.f32.mrb[0].mxu0
  %v3939 = vpop.f32.mrb[0].mxu0
  %3940 = vdwg.mxu0
  %v3941 = vmul.f32 %v3890, 0.35355338
  %v3942 = vmul.f32 %v3936, 0.35355338
  %v3943 = vadd.f32 %v3941, %v94
  %v3944 = vadd.f32 %v3942, %v95
  %v3945 = vsel %vm302, %v3943, -inf
  %3946 = vmax.xlane.f32.xlu0 %v3945
  %v3947 = vpop.xlane.xlu0 %3946
  %v3948 = vsel %vm302, %v3944, -inf
  %3949 = vmax.xlane.f32.xlu0 %v3948
  %v3950 = vpop.xlane.xlu0 %3949
  %v3951 = vsub.f32 %v3943, %v3947
  %v3952 = vsub.f32 %v3944, %v3950
  %v3953 = vmul.f32 %v3951, 1.442695
  %v3954 = vpow.pop %v3953
  %v3955 = vmul.f32 %v3952, 1.442695
  %v3956 = vpow.pop %v3955
  %v3957 = vsel %vm302, %v3954, 0.0
  %3958 = vadd.xlane.f32.xlu0 %v3957
  %v3959 = vpop.xlane.xlu0 %3958
  %v3960 = vsel %vm302, %v3956, 0.0
  %3961 = vadd.xlane.f32.xlu0 %v3960
  %v3962 = vpop.xlane.xlu0 %3961
  %v3963 = vrcp.pop %v3959
  %v3964 = vrcp.pop %v3962
  %v3965 = vmul.f32 %v3954, %v3963
  %v3966 = vmul.f32 %v3956, %v3964
  %v3967 = vpack.c.bf16 %v3965, %v3965
  %v3968 = vpack.c.bf16 %v3966, %v3966
  %v3970 = vsel %vm302, %v3967, 0
  %v3973 = vsel %vm426, %v3847, 0
  %3975 = vmatprep.subr.bf16.mxu0 0
  %3976 = vmatpush1.bf16.msra.mxu0 %v3973
  %3977 = vmatprep.subr.bf16.mxu0 0
  %3978 = vmatpush1.bf16.msra.mxu0 0
  %3979 = vmatprep.subr.bf16.mxu0 0
  %3980 = vmatpush1.bf16.msra.mxu0 0
  %3981 = vmatprep.subr.bf16.mxu0 0
  %3982 = vmatpush1.bf16.msra.mxu0 0
  %3983 = vmatprep.subr.bf16.mxu0 0
  %3984 = vmatpush1.bf16.msra.mxu0 0
  %3985 = vmatprep.subr.bf16.mxu0 0
  %3986 = vmatpush1.bf16.msra.mxu0 0
  %3987 = vmatprep.subr.bf16.mxu0 0
  %3988 = vmatpush1.bf16.msra.mxu0 0
  %3989 = vmatprep.subr.bf16.mxu0 0
  %3990 = vmatpush1.bf16.msra.mxu0 0
  %3991 = vmatprep.subr.bf16.mxu0 0
  %3992 = vmatpush1.bf16.msra.mxu0 0
  %3993 = vmatprep.subr.bf16.mxu0 0
  %3994 = vmatpush1.bf16.msra.mxu0 0
  %3995 = vmatprep.subr.bf16.mxu0 0
  %3996 = vmatpush1.bf16.msra.mxu0 0
  %3997 = vmatprep.subr.bf16.mxu0 0
  %3998 = vmatpush1.bf16.msra.mxu0 0
  %3999 = vmatprep.subr.bf16.mxu0 0
  %4000 = vmatpush1.bf16.msra.mxu0 0
  %4001 = vmatprep.subr.bf16.mxu0 0
  %4002 = vmatpush1.bf16.msra.mxu0 0
  %4003 = vmatprep.subr.bf16.mxu0 0
  %4004 = vmatpush1.bf16.msra.mxu0 0
  %4005 = vmatprep.subr.bf16.mxu0 0
  %4006 = vmatpush1.bf16.msra.mxu0 0
  %4007 = vmatprep.mubr.bf16.mxu0 0
  %4008 = vmatmul.mubr.bf16.gmra.mrb[0].mxu0 %v3970
  %v4009 = vpop.f32.mrb[0].mxu0
  %v4010 = vadd.f32 0.0, %v4009
  %v4011 = vpop.f32.mrb[0].mxu0
  %v4012 = vpop.f32.mrb[0].mxu0
  %v4013 = vpop.f32.mrb[0].mxu0
  %4014 = vdwg.mxu0
  %v4016 = vsel %vm302, %v3968, 0
  %v4019 = vsel %vm426, %v3848, 0
  %4021 = vmatprep.subr.bf16.mxu0 0
  %4022 = vmatpush1.bf16.msra.mxu0 %v4019
  %4023 = vmatprep.subr.bf16.mxu0 0
  %4024 = vmatpush1.bf16.msra.mxu0 0
  %4025 = vmatprep.subr.bf16.mxu0 0
  %4026 = vmatpush1.bf16.msra.mxu0 0
  %4027 = vmatprep.subr.bf16.mxu0 0
  %4028 = vmatpush1.bf16.msra.mxu0 0
  %4029 = vmatprep.subr.bf16.mxu0 0
  %4030 = vmatpush1.bf16.msra.mxu0 0
  %4031 = vmatprep.subr.bf16.mxu0 0
  %4032 = vmatpush1.bf16.msra.mxu0 0
  %4033 = vmatprep.subr.bf16.mxu0 0
  %4034 = vmatpush1.bf16.msra.mxu0 0
  %4035 = vmatprep.subr.bf16.mxu0 0
  %4036 = vmatpush1.bf16.msra.mxu0 0
  %4037 = vmatprep.subr.bf16.mxu0 0
  %4038 = vmatpush1.bf16.msra.mxu0 0
  %4039 = vmatprep.subr.bf16.mxu0 0
  %4040 = vmatpush1.bf16.msra.mxu0 0
  %4041 = vmatprep.subr.bf16.mxu0 0
  %4042 = vmatpush1.bf16.msra.mxu0 0
  %4043 = vmatprep.subr.bf16.mxu0 0
  %4044 = vmatpush1.bf16.msra.mxu0 0
  %4045 = vmatprep.subr.bf16.mxu0 0
  %4046 = vmatpush1.bf16.msra.mxu0 0
  %4047 = vmatprep.subr.bf16.mxu0 0
  %4048 = vmatpush1.bf16.msra.mxu0 0
  %4049 = vmatprep.subr.bf16.mxu0 0
  %4050 = vmatpush1.bf16.msra.mxu0 0
  %4051 = vmatprep.subr.bf16.mxu0 0
  %4052 = vmatpush1.bf16.msra.mxu0 0
  %4053 = vmatprep.mubr.bf16.mxu0 0
  %4054 = vmatmul.mubr.bf16.gmra.mrb[0].mxu0 %v4016
  %v4055 = vpop.f32.mrb[0].mxu0
  %v4056 = vadd.f32 0.0, %v4055
  %v4057 = vpop.f32.mrb[0].mxu0
  %v4058 = vpop.f32.mrb[0].mxu0
  %v4059 = vpop.f32.mrb[0].mxu0
  %4060 = vdwg.mxu0
  %v4061 = vpack.c.bf16 %v4056, %v4010
  %s4062 = scalar_lea.vmem %s5, 28
  %v4063 = vld [vmem:[%s4062] sm:$0xf]
  %v4065 = vsel %vm302, %v4061, 0
  %v4068 = vsel %vm426, %v4063, 0
  %4070 = vmatprep.subr.bf16.mxu0 0
  %4071 = vmatpush1.bf16.msra.mxu0 %v4068
  %4072 = vmatprep.subr.bf16.mxu0 0
  %4073 = vmatpush1.bf16.msra.mxu0 0
  %4074 = vmatprep.subr.bf16.mxu0 0
  %4075 = vmatpush1.bf16.msra.mxu0 0
  %4076 = vmatprep.subr.bf16.mxu0 0
  %4077 = vmatpush1.bf16.msra.mxu0 0
  %4078 = vmatprep.subr.bf16.mxu0 0
  %4079 = vmatpush1.bf16.msra.mxu0 0
  %4080 = vmatprep.subr.bf16.mxu0 0
  %4081 = vmatpush1.bf16.msra.mxu0 0
  %4082 = vmatprep.subr.bf16.mxu0 0
  %4083 = vmatpush1.bf16.msra.mxu0 0
  %4084 = vmatprep.subr.bf16.mxu0 0
  %4085 = vmatpush1.bf16.msra.mxu0 0
  %4086 = vmatprep.subr.bf16.mxu0 0
  %4087 = vmatpush1.bf16.msra.mxu0 0
  %4088 = vmatprep.subr.bf16.mxu0 0
  %4089 = vmatpush1.bf16.msra.mxu0 0
  %4090 = vmatprep.subr.bf16.mxu0 0
  %4091 = vmatpush1.bf16.msra.mxu0 0
  %4092 = vmatprep.subr.bf16.mxu0 0
  %4093 = vmatpush1.bf16.msra.mxu0 0
  %4094 = vmatprep.subr.bf16.mxu0 0
  %4095 = vmatpush1.bf16.msra.mxu0 0
  %4096 = vmatprep.subr.bf16.mxu0 0
  %4097 = vmatpush1.bf16.msra.mxu0 0
  %4098 = vmatprep.subr.bf16.mxu0 0
  %4099 = vmatpush1.bf16.msra.mxu0 0
  %4100 = vmatprep.subr.bf16.mxu0 0
  %4101 = vmatpush1.bf16.msra.mxu0 0
  %4102 = vmatprep.mubr.bf16.mxu0 0
  %4103 = vmatmul.mubr.bf16.gmra.mrb[0].mxu0 %v4065
  %v4104 = vpop.f32.mrb[0].mxu0
  %v4105 = vadd.f32 0.0, %v4104
  %v4106 = vpop.f32.mrb[0].mxu0
  %v4107 = vpop.f32.mrb[0].mxu0
  %v4108 = vadd.f32 0.0, %v4107
  %v4109 = vpop.f32.mrb[0].mxu0
  %4110 = vdwg.mxu0
  %v4111 = vadd.f32 %v3643, %v4105
  %v4112 = vadd.f32 %v3644, %v4108
  %v4113 = vadd.f32 %v2239, %v4111
  %v4114 = vadd.f32 %v2240, %v4112
  %s4115 = scalar_lea.vmem %s6, 1
  %v4116 = vld [vmem:[%s4115] sm:$0x1]
  %v4118 = vlaneseq
  %v4119 = vshrl.u32 %v4118, 7
  %v4120 = vsub.s32 0, %v4119
  %v4121 = vrot.slane %v4116, %v4120
  %v4123 = vadd.f32 %v4113, %v4121
  %v4124 = vadd.f32 %v4114, %v4121
  %s4125 = scalar_lea.vmem %s7, 2
  %v4126 = vld [vmem:[%s4125] sm:$0x1]
  %s4127 = scalar_lea.vmem %s7, 3
  %v4128 = vld [vmem:[%s4127] sm:$0x1]
  %v4129 = vsel %vm50, %v4123, 0.0
  %4130 = vadd.xlane.f32.xlu0 %v4129
  %v4131 = vpop.xlane.xlu0 %4130
  %v4132 = vsel %vm50, %v4124, 0.0
  %4133 = vadd.xlane.f32.xlu0 %v4132
  %v4134 = vpop.xlane.xlu0 %4133
  %v4135 = vmul.f32 %v4131, %v57
  %v4136 = vmul.f32 %v4134, %v57
  %v4137 = vsub.f32 %v4123, %v4135
  %v4138 = vsub.f32 %v4124, %v4136
  %v4139 = vmul.f32 %v4137, %v4137
  %v4140 = vmul.f32 %v4138, %v4138
  %v4141 = vsel %vm50, %v4139, 0.0
  %4142 = vadd.xlane.f32.xlu0 %v4141
  %v4143 = vpop.xlane.xlu0 %4142
  %v4144 = vsel %vm50, %v4140, 0.0
  %4145 = vadd.xlane.f32.xlu0 %v4144
  %v4146 = vpop.xlane.xlu0 %4145
  %v4147 = vmul.f32 %v4143, %v57
  %v4148 = vmul.f32 %v4146, %v57
  %v4149 = vadd.f32 %v4147, 1e-12
  %v4150 = vadd.f32 %v4148, 1e-12
  %v4151 = vrsqrt.pop %v4149
  %v4152 = vrsqrt.pop %v4150
  %v4153 = vmul.f32 %v4137, %v4151
  %v4154 = vmul.f32 %v4138, %v4152
  %v4156 = vlaneseq
  %v4157 = vshrl.u32 %v4156, 7
  %v4158 = vsub.s32 0, %v4157
  %v4159 = vrot.slane %v4126, %v4158
  %v4161 = vmul.f32 %v4153, %v4159
  %v4162 = vmul.f32 %v4154, %v4159
  %v4164 = vlaneseq
  %v4165 = vshrl.u32 %v4164, 7
  %v4166 = vsub.s32 0, %v4165
  %v4167 = vrot.slane %v4128, %v4166
  %v4169 = vadd.f32 %v4161, %v4167
  %v4170 = vadd.f32 %v4162, %v4167
  %v4171 = vpack.c.bf16 %v4170, %v4169
  %s4172 = scalar_lea.vmem %s8, 16
  %v4173 = vld [vmem:[%s4172] sm:$0xf]
  %v4174 = vld [vmem:[%s4172 + $0x4] sm:$0xf]
  %v4175 = vld [vmem:[%s4172 + $0x8] sm:$0xf]
  %v4176 = vld [vmem:[%s4172 + $0xc] sm:$0xf]
  %s4177 = scalar_lea.vmem %s9, 1
  %v4178 = vld [vmem:[%s4177] sm:$0x1]
  %v4180 = vlaneseq
  %v4181 = vshrl.u32 %v4180, 7
  %v4182 = vsub.s32 0, %v4181
  %v4183 = vrot.slane %v4178, %v4182
  %v4189 = vunpack.c.l.b16 %v4173
  %v4190 = vunpack.c.l.b16 %v4174
  %v4191 = vunpack.c.l.b16 %v4175
  %v4192 = vunpack.c.l.b16 %v4176
  %v4193 = vpack.c.b16 %v4190, %v4189
  %v4194 = vpack.c.b16 %v4192, %v4191
  %v4198 = vsel %vm50, %v4171, 0
  %4200 = vmatprep.subr.bf16.mxu0 0
  %4201 = vmatpush1.bf16.msra.mxu0 %v4193
  %4202 = vmatprep.subr.bf16.mxu0 0
  %4203 = vmatpush1.bf16.msra.mxu0 %v4194
  %4204 = vmatprep.subr.bf16.mxu0 0
  %4205 = vmatpush1.bf16.msra.mxu0 0
  %4206 = vmatprep.subr.bf16.mxu0 0
  %4207 = vmatpush1.bf16.msra.mxu0 0
  %4208 = vmatprep.subr.bf16.mxu0 0
  %4209 = vmatpush1.bf16.msra.mxu0 0
  %4210 = vmatprep.subr.bf16.mxu0 0
  %4211 = vmatpush1.bf16.msra.mxu0 0
  %4212 = vmatprep.subr.bf16.mxu0 0
  %4213 = vmatpush1.bf16.msra.mxu0 0
  %4214 = vmatprep.subr.bf16.mxu0 0
  %4215 = vmatpush1.bf16.msra.mxu0 0
  %4216 = vmatprep.subr.bf16.mxu0 0
  %4217 = vmatpush1.bf16.msra.mxu0 0
  %4218 = vmatprep.subr.bf16.mxu0 0
  %4219 = vmatpush1.bf16.msra.mxu0 0
  %4220 = vmatprep.subr.bf16.mxu0 0
  %4221 = vmatpush1.bf16.msra.mxu0 0
  %4222 = vmatprep.subr.bf16.mxu0 0
  %4223 = vmatpush1.bf16.msra.mxu0 0
  %4224 = vmatprep.subr.bf16.mxu0 0
  %4225 = vmatpush1.bf16.msra.mxu0 0
  %4226 = vmatprep.subr.bf16.mxu0 0
  %4227 = vmatpush1.bf16.msra.mxu0 0
  %4228 = vmatprep.subr.bf16.mxu0 0
  %4229 = vmatpush1.bf16.msra.mxu0 0
  %4230 = vmatprep.subr.bf16.mxu0 0
  %4231 = vmatpush1.bf16.msra.mxu0 0
  %4232 = vmatprep.mubr.bf16.mxu0 0
  %4233 = vmatmul.mubr.bf16.gmra.mrb[0].mxu0 %v4198
  %v4234 = vpop.f32.mrb[0].mxu0
  %v4235 = vadd.f32 %v4183, %v4234
  %v4236 = vpop.f32.mrb[0].mxu0
  %v4237 = vpop.f32.mrb[0].mxu0
  %v4238 = vadd.f32 %v4183, %v4237
  %v4239 = vpop.f32.mrb[0].mxu0
  %4240 = vdwg.mxu0
  %v4241 = vmul.f32 %v4235, 0.5
  %v4242 = vmul.f32 %v4238, 0.5
  %v4243 = vmul.f32 %v4235, 0.044715
  %v4244 = vmul.f32 %v4238, 0.044715
  %v4245 = vmul.f32 %v4243, %v4235
  %v4246 = vmul.f32 %v4244, %v4238
  %v4247 = vmul.f32 %v4245, %v4235
  %v4248 = vmul.f32 %v4246, %v4238
  %v4249 = vadd.f32 %v4235, %v4247
  %v4250 = vadd.f32 %v4238, %v4248
  %v4251 = vmul.f32 %v4249, 0.7978846
  %v4252 = vmul.f32 %v4250, 0.7978846
  %v4253 = vtanh.pop %v4251
  %v4254 = vtanh.pop %v4252
  %v4255 = vadd.f32 %v4253, 1.0
  %v4256 = vadd.f32 %v4254, 1.0
  %v4257 = vmul.f32 %v4241, %v4255
  %v4258 = vmul.f32 %v4242, %v4256
  %v4259 = vpack.c.bf16 %v4258, %v4257
  %s4260 = scalar_lea.vmem %s10, 32
  %v4261 = vld [vmem:[%s4260] sm:$0xf]
  %v4262 = vld [vmem:[%s4260 + $0x4] sm:$0xf]
  %v4263 = vld [vmem:[%s4260 + $0x8] sm:$0xf]
  %v4264 = vld [vmem:[%s4260 + $0xc] sm:$0xf]
  %v4265 = vld [vmem:[%s4260 + $0x10] sm:$0xf]
  %v4266 = vld [vmem:[%s4260 + $0x14] sm:$0xf]
  %v4267 = vld [vmem:[%s4260 + $0x18] sm:$0xf]
  %v4268 = vld [vmem:[%s4260 + $0x1c] sm:$0xf]
  %s4269 = scalar_lea.vmem %s11, 1
  %v4270 = vld [vmem:[%s4269] sm:$0x1]
  %v4272 = vlaneseq
  %v4273 = vshrl.u32 %v4272, 7
  %v4274 = vsub.s32 0, %v4273
  %v4275 = vrot.slane %v4270, %v4274
  %v4285 = vunpack.c.l.b16 %v4261
  %v4286 = vunpack.c.l.b16 %v4262
  %v4287 = vunpack.c.l.b16 %v4263
  %v4288 = vunpack.c.l.b16 %v4264
  %v4289 = vunpack.c.l.b16 %v4265
  %v4290 = vunpack.c.l.b16 %v4266
  %v4291 = vunpack.c.l.b16 %v4267
  %v4292 = vunpack.c.l.b16 %v4268
  %v4293 = vpack.c.b16 %v4286, %v4285
  %v4294 = vpack.c.b16 %v4288, %v4287
  %v4295 = vpack.c.b16 %v4290, %v4289
  %v4296 = vpack.c.b16 %v4292, %v4291
  %v4302 = vsel %vm2149, %v4259, 0
  %4304 = vmatprep.subr.bf16.mxu0 0
  %4305 = vmatpush1.bf16.msra.mxu0 %v4293
  %4306 = vmatprep.subr.bf16.mxu0 0
  %4307 = vmatpush1.bf16.msra.mxu0 %v4294
  %4308 = vmatprep.subr.bf16.mxu0 0
  %4309 = vmatpush1.bf16.msra.mxu0 %v4295
  %4310 = vmatprep.subr.bf16.mxu0 0
  %4311 = vmatpush1.bf16.msra.mxu0 %v4296
  %4312 = vmatprep.subr.bf16.mxu0 0
  %4313 = vmatpush1.bf16.msra.mxu0 0
  %4314 = vmatprep.subr.bf16.mxu0 0
  %4315 = vmatpush1.bf16.msra.mxu0 0
  %4316 = vmatprep.subr.bf16.mxu0 0
  %4317 = vmatpush1.bf16.msra.mxu0 0
  %4318 = vmatprep.subr.bf16.mxu0 0
  %4319 = vmatpush1.bf16.msra.mxu0 0
  %4320 = vmatprep.subr.bf16.mxu0 0
  %4321 = vmatpush1.bf16.msra.mxu0 0
  %4322 = vmatprep.subr.bf16.mxu0 0
  %4323 = vmatpush1.bf16.msra.mxu0 0
  %4324 = vmatprep.subr.bf16.mxu0 0
  %4325 = vmatpush1.bf16.msra.mxu0 0
  %4326 = vmatprep.subr.bf16.mxu0 0
  %4327 = vmatpush1.bf16.msra.mxu0 0
  %4328 = vmatprep.subr.bf16.mxu0 0
  %4329 = vmatpush1.bf16.msra.mxu0 0
  %4330 = vmatprep.subr.bf16.mxu0 0
  %4331 = vmatpush1.bf16.msra.mxu0 0
  %4332 = vmatprep.subr.bf16.mxu0 0
  %4333 = vmatpush1.bf16.msra.mxu0 0
  %4334 = vmatprep.subr.bf16.mxu0 0
  %4335 = vmatpush1.bf16.msra.mxu0 0
  %4336 = vmatprep.mubr.bf16.mxu0 0
  %4337 = vmatmul.mubr.bf16.gmra.mrb[0].mxu0 %v4302
  %v4338 = vpop.f32.mrb[0].mxu0
  %v4339 = vadd.f32 %v4275, %v4338
  %v4340 = vpop.f32.mrb[0].mxu0
  %v4341 = vpop.f32.mrb[0].mxu0
  %v4342 = vadd.f32 %v4275, %v4341
  %v4343 = vpop.f32.mrb[0].mxu0
  %4344 = vdwg.mxu0
  %v4345 = vadd.f32 %v4169, %v4339
  %v4346 = vadd.f32 %v4170, %v4342
  %s4347 = scalar_lea.vmem %s12, 2
  %v4348 = vld [vmem:[%s4347] sm:$0x1]
  %s4349 = scalar_lea.vmem %s12, 3
  %v4350 = vld [vmem:[%s4349] sm:$0x1]
  %v4351 = vsel %vm50, %v4345, 0.0
  %4352 = vadd.xlane.f32.xlu0 %v4351
  %v4353 = vpop.xlane.xlu0 %4352
  %v4354 = vsel %vm50, %v4346, 0.0
  %4355 = vadd.xlane.f32.xlu0 %v4354
  %v4356 = vpop.xlane.xlu0 %4355
  %v4357 = vmul.f32 %v4353, %v57
  %v4358 = vmul.f32 %v4356, %v57
  %v4359 = vsub.f32 %v4345, %v4357
  %v4360 = vsub.f32 %v4346, %v4358
  %v4361 = vmul.f32 %v4359, %v4359
  %v4362 = vmul.f32 %v4360, %v4360
  %v4363 = vsel %vm50, %v4361, 0.0
  %4364 = vadd.xlane.f32.xlu0 %v4363
  %v4365 = vpop.xlane.xlu0 %4364
  %v4366 = vsel %vm50, %v4362, 0.0
  %4367 = vadd.xlane.f32.xlu0 %v4366
  %v4368 = vpop.xlane.xlu0 %4367
  %v4369 = vmul.f32 %v4365, %v57
  %v4370 = vmul.f32 %v4368, %v57
  %v4371 = vadd.f32 %v4369, 1e-12
  %v4372 = vadd.f32 %v4370, 1e-12
  %v4373 = vrsqrt.pop %v4371
  %v4374 = vrsqrt.pop %v4372
  %v4375 = vmul.f32 %v4359, %v4373
  %v4376 = vmul.f32 %v4360, %v4374
  %v4378 = vlaneseq
  %v4379 = vshrl.u32 %v4378, 7
  %v4380 = vsub.s32 0, %v4379
  %v4381 = vrot.slane %v4348, %v4380
  %v4383 = vmul.f32 %v4375, %v4381
  %v4384 = vmul.f32 %v4376, %v4381
  %v4386 = vlaneseq
  %v4387 = vshrl.u32 %v4386, 7
  %v4388 = vsub.s32 0, %v4387
  %v4389 = vrot.slane %v4350, %v4388
  %v4391 = vadd.f32 %v4383, %v4389
  %v4392 = vadd.f32 %v4384, %v4389
  %4393 = vst.msk [vmem:[%s13] sm:$0xff] %vm50, %v4391
  %4394 = vst.msk [vmem:[%s13 + $0x8] sm:$0xff] %vm50, %v4392
  // Predicated region
  $region54: #{bert_text_encoder.1} parent=0 // pred_check
    _
  $region55: #{bert_text_encoder.1} parent=0 // pred_check_branch
    %4396 = sbr.rel (0) target = $region57
  $region56: #{bert_text_encoder.1} parent=0 // pred_region
    _
  $region57: #{bert_text_encoder.1} parent=0 // pred_fallthru
    _
  // Predicated region
  $region58: #{bert_text_encoder.1} parent=0 // pred_check
    _
  $region59: #{bert_text_encoder.1} parent=0 // pred_check_branch
    %4398 = sbr.rel (0) target = $region61
  $region60: #{bert_text_encoder.1} parent=0 // pred_region
    _
  $region61: #{bert_text_encoder.1} parent=0 // pred_fallthru
    _

</llo_original>
